<compile_context>
chip_gen: v6e
topology: v6e:2x2x1
jax: 0.10.0
libtpu: 0.0.40
codegen_flags: <defaults>
</compile_context>

<pallas_src>
import functools
import math

import numpy as np

import jax
import jax.numpy as jnp
from jax import lax
from jax.experimental import pallas as pl
from jax.experimental.pallas import tpu as pltpu

EPS = 1e-5
_VMEM_LIMIT = 48 * 1024 * 1024  # leave headroom under v7x's 64 MiB / TC


# ---------------------------------------------------------------------------
# Kernel 1: per-channel batch statistics -> folded BN affine (scale, shift)
# ---------------------------------------------------------------------------
def _bn_stats_kernel(x_ref, gamma_ref, beta_ref, scale_ref, shift_ref,
                     sum_acc, sq_acc, *, total_count):
    i = pl.program_id(0)

    @pl.when(i == 0)
    def _():
        sum_acc[...] = jnp.zeros_like(sum_acc)
        sq_acc[...] = jnp.zeros_like(sq_acc)

    for t in range(4):                          # 2x2 window taps, unrolled
        xt = x_ref[t].astype(jnp.float32)       # (TM, C)
        sum_acc[...] += jnp.sum(xt, axis=0, keepdims=True)
        sq_acc[...] += jnp.sum(xt * xt, axis=0, keepdims=True)

    @pl.when(i == pl.num_programs(0) - 1)
    def _():
        inv_n = 1.0 / total_count
        mean = sum_acc[...] * inv_n
        var = sq_acc[...] * inv_n - mean * mean   # biased (training-mode) var
        rstd = lax.rsqrt(var + EPS)
        scale = gamma_ref[...] * rstd
        scale_ref[...] = scale
        shift_ref[...] = beta_ref[...] - mean * scale


# ---------------------------------------------------------------------------
# Kernel 2: fused BN-affine + ReLU + 2x2 avg-pool + 1x1 conv (bf16 MXU)
# ---------------------------------------------------------------------------
def _fused_transition_kernel(x_ref, scale_ref, shift_ref, w_ref, o_ref):
    scale = scale_ref[...]                      # (1, Cin)
    shift = shift_ref[...]                      # (1, Cin)
    acc = None
    for t in range(4):                          # 2x2 window taps, unrolled
        xt = x_ref[t].astype(jnp.float32)       # (TM, Cin)
        yt = jnp.maximum(xt * scale + shift, 0.0)   # BN affine + ReLU
        acc = yt if acc is None else acc + yt
    pooled = (acc * 0.25).astype(jnp.bfloat16)  # 2x2 average pool
    o_ref[...] = jnp.dot(pooled, w_ref[...],
                         preferred_element_type=jnp.float32
                         ).astype(o_ref.dtype)  # 1x1 conv (no bias)


# ---------------------------------------------------------------------------
# Wrapper
# ---------------------------------------------------------------------------
def _pick_row_tile(m, target=256):
    """Largest multiple of 8 that divides m and is <= target (else m)."""
    if m <= target:
        return m
    tm = (target // 8) * 8
    while tm > 8 and (m % tm) != 0:
        tm -= 8
    return tm if (tm > 0 and m % tm == 0) else m


def transition_block_forward(x_nchw, params, *, tile_rows=256):
    """TransitionBlock forward: BN(batch stats) -> ReLU -> conv1x1 -> avgpool2."""
    gamma, beta, w = params['bn_g'], params['bn_b'], params['conv_w']
    n, c_in, h, wd = x_nchw.shape
    c_out = w.shape[1]
    ho, wo = h // 2, wd // 2
    m = n * ho * wo

    # Layout plumbing (pure XLA): the 4 elements of each 2x2 pooling window go
    # on the leading axis, channels on the lane axis -> [4, N*Ho*Wo, Cin].
    x_win = x_nchw.reshape(n, c_in, ho, 2, wo, 2)
    x_win = jnp.transpose(x_win, (3, 5, 0, 2, 4, 1)).reshape(4, m, c_in)

    tm = _pick_row_tile(m, tile_rows)
    grid = (m // tm,)

    gamma2 = gamma.reshape(1, c_in).astype(jnp.float32)
    beta2 = beta.reshape(1, c_in).astype(jnp.float32)

    # ---- Pass 1: batch statistics (tiled reduction, carried accumulators) ----
    scale, shift = pl.pallas_call(
        functools.partial(_bn_stats_kernel, total_count=float(4 * m)),
        out_shape=(jax.ShapeDtypeStruct((1, c_in), jnp.float32),
                   jax.ShapeDtypeStruct((1, c_in), jnp.float32)),
        grid_spec=pltpu.PrefetchScalarGridSpec(
            num_scalar_prefetch=0,
            grid=grid,
            in_specs=[
                pl.BlockSpec((4, tm, c_in), lambda i: (0, i, 0)),
                pl.BlockSpec((1, c_in), lambda i: (0, 0)),
                pl.BlockSpec((1, c_in), lambda i: (0, 0)),
            ],
            out_specs=[pl.BlockSpec((1, c_in), lambda i: (0, 0)),
                       pl.BlockSpec((1, c_in), lambda i: (0, 0))],
            scratch_shapes=[pltpu.VMEM((1, c_in), jnp.float32),
                            pltpu.VMEM((1, c_in), jnp.float32)]),
        compiler_params=pltpu.CompilerParams(
            dimension_semantics=("arbitrary",),
            vmem_limit_bytes=_VMEM_LIMIT),
    )(x_win, gamma2, beta2)

    # ---- Pass 2: fused normalize + ReLU + pool + 1x1 conv (parallel rows) ----
    w_bf16 = w.astype(jnp.bfloat16)
    out2d = pl.pallas_call(
        _fused_transition_kernel,
        out_shape=jax.ShapeDtypeStruct((m, c_out), jnp.float32),
        grid_spec=pltpu.PrefetchScalarGridSpec(
            num_scalar_prefetch=0,
            grid=grid,
            in_specs=[
                pl.BlockSpec((4, tm, c_in), lambda i: (0, i, 0)),
                pl.BlockSpec((1, c_in), lambda i: (0, 0)),
                pl.BlockSpec((1, c_in), lambda i: (0, 0)),
                pl.BlockSpec((c_in, c_out), lambda i: (0, 0)),
            ],
            out_specs=pl.BlockSpec((tm, c_out), lambda i: (i, 0))),
        compiler_params=pltpu.CompilerParams(
            dimension_semantics=("parallel",),
            vmem_limit_bytes=_VMEM_LIMIT),
    )(x_win, scale, shift, w_bf16)

    # rows are ordered (n, ho, wo) -> back to NCHW like the PyTorch module.
    return jnp.transpose(out2d.reshape(n, ho, wo, c_out), (0, 3, 1, 2))


# ---------------------------------------------------------------------------
# Parameters + pure-JAX reference (PyTorch op order, all f32)
# ---------------------------------------------------------------------------
def build_params(key, in_planes, out_planes):
    kg, kb, kw = jax.random.split(key, 3)
    std = math.sqrt(2.0 / out_planes)       # kaiming, fan_out = out*1*1
    return {
        'bn_g': 1.0 + 0.1 * jax.random.normal(kg, (in_planes,), jnp.float32),
        'bn_b': 0.1 * jax.random.normal(kb, (in_planes,), jnp.float32),
        'conv_w': std * jax.random.normal(kw, (in_planes, out_planes),
                                          jnp.float32),
    }


def reference_forward(x, params):
    gamma, beta, w = params['bn_g'], params['bn_b'], params['conv_w']
    n, c, h, wd = x.shape
    mean = jnp.mean(x, axis=(0, 2, 3))
    var = jnp.mean((x - mean[None, :, None, None]) ** 2, axis=(0, 2, 3))
    xn = (x - mean[None, :, None, None]) * lax.rsqrt(var + EPS)[None, :, None, None]
    xn = xn * gamma[None, :, None, None] + beta[None, :, None, None]
    xr = jnp.maximum(xn, 0.0)
    y = jnp.einsum('nchw,co->nohw', xr, w)          # 1x1 conv, no bias
    c_out = w.shape[1]
    return jnp.mean(y.reshape(n, c_out, h // 2, 2, wd // 2, 2), axis=(3, 5))


if __name__ == "__main__":
    key = jax.random.PRNGKey(0)
    kp, kx = jax.random.split(key)

    N, C_IN, H, W = 2, 128, 32, 32
    C_OUT = 64                                  # reduction = 0.5
    params = build_params(kp, C_IN, C_OUT)
    x = jax.random.normal(kx, (N, C_IN, H, W), jnp.float32)

    fwd = jax.jit(transition_block_forward)
    out = fwd(x, params)
    jax.block_until_ready(out)
    assert out.shape == (N, C_OUT, H // 2, W // 2), out.shape

    ref = reference_forward(x, params)
    np.testing.assert_allclose(np.asarray(out), np.asarray(ref),
                               rtol=5e-2, atol=5e-2)
    print("KERNEL_OK")
</pallas_src>

<mosaic_0001>
module attributes {stable_mosaic.version = 11 : i64} {
  func.func @_bn_stats_kernel(%arg0: i32, %arg1: memref<4x256x128xf32, #tpu.memory_space<vmem>>, %arg2: memref<1x128xf32, #tpu.memory_space<vmem>>, %arg3: memref<1x128xf32, #tpu.memory_space<vmem>>, %arg4: memref<1x128xf32, #tpu.memory_space<vmem>>, %arg5: memref<1x128xf32, #tpu.memory_space<vmem>>, %arg6: memref<1x128xf32, #tpu.memory_space<vmem>>, %arg7: memref<1x128xf32, #tpu.memory_space<vmem>>) attributes {dimension_semantics = [#tpu.dimension_semantics<arbitrary>], iteration_bounds = array<i64: 2>, scalar_prefetch = 0 : i64, scratch_operands = 2 : i64, tpu.core_type = #tpu.core_type<tc>, window_params = [{transform_indices = @transform_0, window_bounds = array<i64: 4, 256, 128>}, {pipeline_mode = #tpu.pipeline_mode<synchronous>, transform_indices = @transform_1, window_bounds = array<i64: 1, 128>}, {pipeline_mode = #tpu.pipeline_mode<synchronous>, transform_indices = @transform_2, window_bounds = array<i64: 1, 128>}, {pipeline_mode = #tpu.pipeline_mode<synchronous>, transform_indices = @transform_3, window_bounds = array<i64: 1, 128>}, {pipeline_mode = #tpu.pipeline_mode<synchronous>, transform_indices = @transform_4, window_bounds = array<i64: 1, 128>}]} {
    %c0_i32 = arith.constant 0 : i32
    %0 = arith.cmpi eq, %arg0, %c0_i32 : i32
    %1 = arith.extui %0 : i1 to i32
    %c0_i32_0 = arith.constant 0 : i32
    %2 = arith.cmpi ne, %1, %c0_i32_0 : i32
    scf.if %2 {
      %cst_49 = arith.constant 0.000000e+00 : f32
      %58 = vector.broadcast %cst_49 : f32 to vector<1x128xf32>
      %c0_50 = arith.constant 0 : index
      %c0_51 = arith.constant 0 : index
      %59 = vector.load %arg6[%c0_50, %c0_51] : memref<1x128xf32, #tpu.memory_space<vmem>>, vector<1x128xf32>
      tpu.vector_store %arg6[%c0_50, %c0_51], %58 {strides = array<i32>} : memref<1x128xf32, #tpu.memory_space<vmem>>, vector<1x128xf32>,
      %cst_52 = arith.constant 0.000000e+00 : f32
      %60 = vector.broadcast %cst_52 : f32 to vector<1x128xf32>
      %c0_53 = arith.constant 0 : index
      %c0_54 = arith.constant 0 : index
      %61 = vector.load %arg7[%c0_53, %c0_54] : memref<1x128xf32, #tpu.memory_space<vmem>>, vector<1x128xf32>
      tpu.vector_store %arg7[%c0_53, %c0_54], %60 {strides = array<i32>} : memref<1x128xf32, #tpu.memory_space<vmem>>, vector<1x128xf32>,
    } else {
    }
    %c0 = arith.constant 0 : index
    %c0_1 = arith.constant 0 : index
    %c0_2 = arith.constant 0 : index
    %3 = vector.load %arg1[%c0, %c0_1, %c0_2] : memref<4x256x128xf32, #tpu.memory_space<vmem>>, vector<1x256x128xf32>
    %4 = vector.shape_cast %3 : vector<1x256x128xf32> to vector<256x128xf32>
    %c0_3 = arith.constant 0 : index
    %c0_4 = arith.constant 0 : index
    %5 = vector.load %arg6[%c0_3, %c0_4] : memref<1x128xf32, #tpu.memory_space<vmem>>, vector<1x128xf32>
    %cst = arith.constant dense<0.000000e+00> : vector<128xf32>
    %6 = vector.multi_reduction <add>, %4, %cst [0] : vector<256x128xf32> to vector<128xf32>
    %7 = vector.shape_cast %6 : vector<128xf32> to vector<1x128xf32>
    %8 = arith.addf %5, %7 : vector<1x128xf32>
    %c0_5 = arith.constant 0 : index
    %c0_6 = arith.constant 0 : index
    %9 = vector.load %arg6[%c0_5, %c0_6] : memref<1x128xf32, #tpu.memory_space<vmem>>, vector<1x128xf32>
    tpu.vector_store %arg6[%c0_5, %c0_6], %8 {strides = array<i32>} : memref<1x128xf32, #tpu.memory_space<vmem>>, vector<1x128xf32>,
    %c0_7 = arith.constant 0 : index
    %c0_8 = arith.constant 0 : index
    %10 = vector.load %arg7[%c0_7, %c0_8] : memref<1x128xf32, #tpu.memory_space<vmem>>, vector<1x128xf32>
    %11 = arith.mulf %4, %4 : vector<256x128xf32>
    %cst_9 = arith.constant dense<0.000000e+00> : vector<128xf32>
    %12 = vector.multi_reduction <add>, %11, %cst_9 [0] : vector<256x128xf32> to vector<128xf32>
    %13 = vector.shape_cast %12 : vector<128xf32> to vector<1x128xf32>
    %14 = arith.addf %10, %13 : vector<1x128xf32>
    %c0_10 = arith.constant 0 : index
    %c0_11 = arith.constant 0 : index
    %15 = vector.load %arg7[%c0_10, %c0_11] : memref<1x128xf32, #tpu.memory_space<vmem>>, vector<1x128xf32>
    tpu.vector_store %arg7[%c0_10, %c0_11], %14 {strides = array<i32>} : memref<1x128xf32, #tpu.memory_space<vmem>>, vector<1x128xf32>,
    %c1 = arith.constant 1 : index
    %c0_12 = arith.constant 0 : index
    %c0_13 = arith.constant 0 : index
    %16 = vector.load %arg1[%c1, %c0_12, %c0_13] : memref<4x256x128xf32, #tpu.memory_space<vmem>>, vector<1x256x128xf32>
    %17 = vector.shape_cast %16 : vector<1x256x128xf32> to vector<256x128xf32>
    %c0_14 = arith.constant 0 : index
    %c0_15 = arith.constant 0 : index
    %18 = vector.load %arg6[%c0_14, %c0_15] : memref<1x128xf32, #tpu.memory_space<vmem>>, vector<1x128xf32>
    %cst_16 = arith.constant dense<0.000000e+00> : vector<128xf32>
    %19 = vector.multi_reduction <add>, %17, %cst_16 [0] : vector<256x128xf32> to vector<128xf32>
    %20 = vector.shape_cast %19 : vector<128xf32> to vector<1x128xf32>
    %21 = arith.addf %18, %20 : vector<1x128xf32>
    %c0_17 = arith.constant 0 : index
    %c0_18 = arith.constant 0 : index
    %22 = vector.load %arg6[%c0_17, %c0_18] : memref<1x128xf32, #tpu.memory_space<vmem>>, vector<1x128xf32>
    tpu.vector_store %arg6[%c0_17, %c0_18], %21 {strides = array<i32>} : memref<1x128xf32, #tpu.memory_space<vmem>>, vector<1x128xf32>,
    %c0_19 = arith.constant 0 : index
    %c0_20 = arith.constant 0 : index
    %23 = vector.load %arg7[%c0_19, %c0_20] : memref<1x128xf32, #tpu.memory_space<vmem>>, vector<1x128xf32>
    %24 = arith.mulf %17, %17 : vector<256x128xf32>
    %cst_21 = arith.constant dense<0.000000e+00> : vector<128xf32>
    %25 = vector.multi_reduction <add>, %24, %cst_21 [0] : vector<256x128xf32> to vector<128xf32>
    %26 = vector.shape_cast %25 : vector<128xf32> to vector<1x128xf32>
    %27 = arith.addf %23, %26 : vector<1x128xf32>
    %c0_22 = arith.constant 0 : index
    %c0_23 = arith.constant 0 : index
    %28 = vector.load %arg7[%c0_22, %c0_23] : memref<1x128xf32, #tpu.memory_space<vmem>>, vector<1x128xf32>
    tpu.vector_store %arg7[%c0_22, %c0_23], %27 {strides = array<i32>} : memref<1x128xf32, #tpu.memory_space<vmem>>, vector<1x128xf32>,
    %c2 = arith.constant 2 : index
    %c0_24 = arith.constant 0 : index
    %c0_25 = arith.constant 0 : index
    %29 = vector.load %arg1[%c2, %c0_24, %c0_25] : memref<4x256x128xf32, #tpu.memory_space<vmem>>, vector<1x256x128xf32>
    %30 = vector.shape_cast %29 : vector<1x256x128xf32> to vector<256x128xf32>
    %c0_26 = arith.constant 0 : index
    %c0_27 = arith.constant 0 : index
    %31 = vector.load %arg6[%c0_26, %c0_27] : memref<1x128xf32, #tpu.memory_space<vmem>>, vector<1x128xf32>
    %cst_28 = arith.constant dense<0.000000e+00> : vector<128xf32>
    %32 = vector.multi_reduction <add>, %30, %cst_28 [0] : vector<256x128xf32> to vector<128xf32>
    %33 = vector.shape_cast %32 : vector<128xf32> to vector<1x128xf32>
    %34 = arith.addf %31, %33 : vector<1x128xf32>
    %c0_29 = arith.constant 0 : index
    %c0_30 = arith.constant 0 : index
    %35 = vector.load %arg6[%c0_29, %c0_30] : memref<1x128xf32, #tpu.memory_space<vmem>>, vector<1x128xf32>
    tpu.vector_store %arg6[%c0_29, %c0_30], %34 {strides = array<i32>} : memref<1x128xf32, #tpu.memory_space<vmem>>, vector<1x128xf32>,
    %c0_31 = arith.constant 0 : index
    %c0_32 = arith.constant 0 : index
    %36 = vector.load %arg7[%c0_31, %c0_32] : memref<1x128xf32, #tpu.memory_space<vmem>>, vector<1x128xf32>
    %37 = arith.mulf %30, %30 : vector<256x128xf32>
    %cst_33 = arith.constant dense<0.000000e+00> : vector<128xf32>
    %38 = vector.multi_reduction <add>, %37, %cst_33 [0] : vector<256x128xf32> to vector<128xf32>
    %39 = vector.shape_cast %38 : vector<128xf32> to vector<1x128xf32>
    %40 = arith.addf %36, %39 : vector<1x128xf32>
    %c0_34 = arith.constant 0 : index
    %c0_35 = arith.constant 0 : index
    %41 = vector.load %arg7[%c0_34, %c0_35] : memref<1x128xf32, #tpu.memory_space<vmem>>, vector<1x128xf32>
    tpu.vector_store %arg7[%c0_34, %c0_35], %40 {strides = array<i32>} : memref<1x128xf32, #tpu.memory_space<vmem>>, vector<1x128xf32>,
    %c3 = arith.constant 3 : index
    %c0_36 = arith.constant 0 : index
    %c0_37 = arith.constant 0 : index
    %42 = vector.load %arg1[%c3, %c0_36, %c0_37] : memref<4x256x128xf32, #tpu.memory_space<vmem>>, vector<1x256x128xf32>
    %43 = vector.shape_cast %42 : vector<1x256x128xf32> to vector<256x128xf32>
    %c0_38 = arith.constant 0 : index
    %c0_39 = arith.constant 0 : index
    %44 = vector.load %arg6[%c0_38, %c0_39] : memref<1x128xf32, #tpu.memory_space<vmem>>, vector<1x128xf32>
    %cst_40 = arith.constant dense<0.000000e+00> : vector<128xf32>
    %45 = vector.multi_reduction <add>, %43, %cst_40 [0] : vector<256x128xf32> to vector<128xf32>
    %46 = vector.shape_cast %45 : vector<128xf32> to vector<1x128xf32>
    %47 = arith.addf %44, %46 : vector<1x128xf32>
    %c0_41 = arith.constant 0 : index
    %c0_42 = arith.constant 0 : index
    %48 = vector.load %arg6[%c0_41, %c0_42] : memref<1x128xf32, #tpu.memory_space<vmem>>, vector<1x128xf32>
    tpu.vector_store %arg6[%c0_41, %c0_42], %47 {strides = array<i32>} : memref<1x128xf32, #tpu.memory_space<vmem>>, vector<1x128xf32>,
    %c0_43 = arith.constant 0 : index
    %c0_44 = arith.constant 0 : index
    %49 = vector.load %arg7[%c0_43, %c0_44] : memref<1x128xf32, #tpu.memory_space<vmem>>, vector<1x128xf32>
    %50 = arith.mulf %43, %43 : vector<256x128xf32>
    %cst_45 = arith.constant dense<0.000000e+00> : vector<128xf32>
    %51 = vector.multi_reduction <add>, %50, %cst_45 [0] : vector<256x128xf32> to vector<128xf32>
    %52 = vector.shape_cast %51 : vector<128xf32> to vector<1x128xf32>
    %53 = arith.addf %49, %52 : vector<1x128xf32>
    %c0_46 = arith.constant 0 : index
    %c0_47 = arith.constant 0 : index
    %54 = vector.load %arg7[%c0_46, %c0_47] : memref<1x128xf32, #tpu.memory_space<vmem>>, vector<1x128xf32>
    tpu.vector_store %arg7[%c0_46, %c0_47], %53 {strides = array<i32>} : memref<1x128xf32, #tpu.memory_space<vmem>>, vector<1x128xf32>,
    %c1_i32 = arith.constant 1 : i32
    %55 = arith.cmpi eq, %arg0, %c1_i32 : i32
    %56 = arith.extui %55 : i1 to i32
    %c0_i32_48 = arith.constant 0 : i32
    %57 = arith.cmpi ne, %56, %c0_i32_48 : i32
    scf.if %57 {
      %c0_49 = arith.constant 0 : index
      %c0_50 = arith.constant 0 : index
      %58 = vector.load %arg6[%c0_49, %c0_50] : memref<1x128xf32, #tpu.memory_space<vmem>>, vector<1x128xf32>
      %cst_51 = arith.constant 4.8828125E-4 : f32
      %59 = vector.broadcast %cst_51 : f32 to vector<1x128xf32>
      %60 = arith.mulf %58, %59 : vector<1x128xf32>
      %c0_52 = arith.constant 0 : index
      %c0_53 = arith.constant 0 : index
      %61 = vector.load %arg7[%c0_52, %c0_53] : memref<1x128xf32, #tpu.memory_space<vmem>>, vector<1x128xf32>
      %cst_54 = arith.constant 4.8828125E-4 : f32
      %62 = vector.broadcast %cst_54 : f32 to vector<1x128xf32>
      %63 = arith.mulf %61, %62 : vector<1x128xf32>
      %64 = arith.mulf %60, %60 : vector<1x128xf32>
      %65 = arith.subf %63, %64 : vector<1x128xf32>
      %cst_55 = arith.constant 9.99999974E-6 : f32
      %66 = vector.broadcast %cst_55 : f32 to vector<1x128xf32>
      %67 = arith.addf %65, %66 : vector<1x128xf32>
      %68 = math.rsqrt %67 : vector<1x128xf32>
      %c0_56 = arith.constant 0 : index
      %c0_57 = arith.constant 0 : index
      %69 = vector.load %arg2[%c0_56, %c0_57] : memref<1x128xf32, #tpu.memory_space<vmem>>, vector<1x128xf32>
      %70 = arith.mulf %69, %68 : vector<1x128xf32>
      %c0_58 = arith.constant 0 : index
      %c0_59 = arith.constant 0 : index
      %71 = vector.load %arg4[%c0_58, %c0_59] : memref<1x128xf32, #tpu.memory_space<vmem>>, vector<1x128xf32>
      tpu.vector_store %arg4[%c0_58, %c0_59], %70 {strides = array<i32>} : memref<1x128xf32, #tpu.memory_space<vmem>>, vector<1x128xf32>,
      %c0_60 = arith.constant 0 : index
      %c0_61 = arith.constant 0 : index
      %72 = vector.load %arg3[%c0_60, %c0_61] : memref<1x128xf32, #tpu.memory_space<vmem>>, vector<1x128xf32>
      %73 = arith.mulf %60, %70 : vector<1x128xf32>
      %74 = arith.subf %72, %73 : vector<1x128xf32>
      %c0_62 = arith.constant 0 : index
      %c0_63 = arith.constant 0 : index
      %75 = vector.load %arg5[%c0_62, %c0_63] : memref<1x128xf32, #tpu.memory_space<vmem>>, vector<1x128xf32>
      tpu.vector_store %arg5[%c0_62, %c0_63], %74 {strides = array<i32>} : memref<1x128xf32, #tpu.memory_space<vmem>>, vector<1x128xf32>,
    } else {
    }
    return
  }
  func.func @transform_0(%arg0: i32) -> (i32, i32, i32) {
    %c0_i32 = arith.constant 0 : i32
    %c0_i32_0 = arith.constant 0 : i32
    %c0_i32_1 = arith.constant 0 : i32
    return %c0_i32, %arg0, %c0_i32_0 : i32, i32, i32
  }
  func.func @transform_1(%arg0: i32) -> (i32, i32) {
    %c0_i32 = arith.constant 0 : i32
    %c0_i32_0 = arith.constant 0 : i32
    %c0_i32_1 = arith.constant 0 : i32
    return %c0_i32, %c0_i32_0 : i32, i32
  }
  func.func @transform_2(%arg0: i32) -> (i32, i32) {
    %c0_i32 = arith.constant 0 : i32
    %c0_i32_0 = arith.constant 0 : i32
    %c0_i32_1 = arith.constant 0 : i32
    return %c0_i32, %c0_i32_0 : i32, i32
  }
  func.func @transform_3(%arg0: i32) -> (i32, i32) {
    %c0_i32 = arith.constant 0 : i32
    %c0_i32_0 = arith.constant 0 : i32
    %c0_i32_1 = arith.constant 0 : i32
    return %c0_i32, %c0_i32_0 : i32, i32
  }
  func.func @transform_4(%arg0: i32) -> (i32, i32) {
    %c0_i32 = arith.constant 0 : i32
    %c0_i32_0 = arith.constant 0 : i32
    %c0_i32_1 = arith.constant 0 : i32
    return %c0_i32, %c0_i32_0 : i32, i32
  }
}

module attributes {stable_mosaic.version = 11 : i64} {
  func.func @_fused_transition_kernel(%arg0: i32, %arg1: memref<4x256x128xf32, #tpu.memory_space<vmem>>, %arg2: memref<1x128xf32, #tpu.memory_space<vmem>>, %arg3: memref<1x128xf32, #tpu.memory_space<vmem>>, %arg4: memref<128x64xbf16, #tpu.memory_space<vmem>>, %arg5: memref<256x64xf32, #tpu.memory_space<vmem>>) attributes {dimension_semantics = [#tpu.dimension_semantics<parallel>], iteration_bounds = array<i64: 2>, scalar_prefetch = 0 : i64, scratch_operands = 0 : i64, tpu.core_type = #tpu.core_type<tc>, window_params = [{transform_indices = @transform_0, window_bounds = array<i64: 4, 256, 128>}, {pipeline_mode = #tpu.pipeline_mode<synchronous>, transform_indices = @transform_1, window_bounds = array<i64: 1, 128>}, {pipeline_mode = #tpu.pipeline_mode<synchronous>, transform_indices = @transform_2, window_bounds = array<i64: 1, 128>}, {pipeline_mode = #tpu.pipeline_mode<synchronous>, transform_indices = @transform_3, window_bounds = array<i64: 128, 64>}, {transform_indices = @transform_4, window_bounds = array<i64: 256, 64>}]} {
    %c0 = arith.constant 0 : index
    %c0_0 = arith.constant 0 : index
    %0 = vector.load %arg2[%c0, %c0_0] : memref<1x128xf32, #tpu.memory_space<vmem>>, vector<1x128xf32>
    %c0_1 = arith.constant 0 : index
    %c0_2 = arith.constant 0 : index
    %1 = vector.load %arg3[%c0_1, %c0_2] : memref<1x128xf32, #tpu.memory_space<vmem>>, vector<1x128xf32>
    %c0_3 = arith.constant 0 : index
    %c0_4 = arith.constant 0 : index
    %c0_5 = arith.constant 0 : index
    %2 = vector.load %arg1[%c0_3, %c0_4, %c0_5] : memref<4x256x128xf32, #tpu.memory_space<vmem>>, vector<1x256x128xf32>
    %3 = vector.shape_cast %2 : vector<1x256x128xf32> to vector<256x128xf32>
    %4 = vector.broadcast %0 : vector<1x128xf32> to vector<256x128xf32>
    %5 = arith.mulf %3, %4 : vector<256x128xf32>
    %6 = vector.broadcast %1 : vector<1x128xf32> to vector<256x128xf32>
    %7 = arith.addf %5, %6 : vector<256x128xf32>
    %cst = arith.constant 0.000000e+00 : f32
    %8 = vector.broadcast %cst : f32 to vector<256x128xf32>
    %9 = arith.maximumf %7, %8 : vector<256x128xf32>
    %c1 = arith.constant 1 : index
    %c0_6 = arith.constant 0 : index
    %c0_7 = arith.constant 0 : index
    %10 = vector.load %arg1[%c1, %c0_6, %c0_7] : memref<4x256x128xf32, #tpu.memory_space<vmem>>, vector<1x256x128xf32>
    %11 = vector.shape_cast %10 : vector<1x256x128xf32> to vector<256x128xf32>
    %12 = vector.broadcast %0 : vector<1x128xf32> to vector<256x128xf32>
    %13 = arith.mulf %11, %12 : vector<256x128xf32>
    %14 = vector.broadcast %1 : vector<1x128xf32> to vector<256x128xf32>
    %15 = arith.addf %13, %14 : vector<256x128xf32>
    %cst_8 = arith.constant 0.000000e+00 : f32
    %16 = vector.broadcast %cst_8 : f32 to vector<256x128xf32>
    %17 = arith.maximumf %15, %16 : vector<256x128xf32>
    %18 = arith.addf %9, %17 : vector<256x128xf32>
    %c2 = arith.constant 2 : index
    %c0_9 = arith.constant 0 : index
    %c0_10 = arith.constant 0 : index
    %19 = vector.load %arg1[%c2, %c0_9, %c0_10] : memref<4x256x128xf32, #tpu.memory_space<vmem>>, vector<1x256x128xf32>
    %20 = vector.shape_cast %19 : vector<1x256x128xf32> to vector<256x128xf32>
    %21 = vector.broadcast %0 : vector<1x128xf32> to vector<256x128xf32>
    %22 = arith.mulf %20, %21 : vector<256x128xf32>
    %23 = vector.broadcast %1 : vector<1x128xf32> to vector<256x128xf32>
    %24 = arith.addf %22, %23 : vector<256x128xf32>
    %cst_11 = arith.constant 0.000000e+00 : f32
    %25 = vector.broadcast %cst_11 : f32 to vector<256x128xf32>
    %26 = arith.maximumf %24, %25 : vector<256x128xf32>
    %27 = arith.addf %18, %26 : vector<256x128xf32>
    %c3 = arith.constant 3 : index
    %c0_12 = arith.constant 0 : index
    %c0_13 = arith.constant 0 : index
    %28 = vector.load %arg1[%c3, %c0_12, %c0_13] : memref<4x256x128xf32, #tpu.memory_space<vmem>>, vector<1x256x128xf32>
    %29 = vector.shape_cast %28 : vector<1x256x128xf32> to vector<256x128xf32>
    %30 = vector.broadcast %0 : vector<1x128xf32> to vector<256x128xf32>
    %31 = arith.mulf %29, %30 : vector<256x128xf32>
    %32 = vector.broadcast %1 : vector<1x128xf32> to vector<256x128xf32>
    %33 = arith.addf %31, %32 : vector<256x128xf32>
    %cst_14 = arith.constant 0.000000e+00 : f32
    %34 = vector.broadcast %cst_14 : f32 to vector<256x128xf32>
    %35 = arith.maximumf %33, %34 : vector<256x128xf32>
    %36 = arith.addf %27, %35 : vector<256x128xf32>
    %cst_15 = arith.constant 2.500000e-01 : f32
    %37 = vector.broadcast %cst_15 : f32 to vector<256x128xf32>
    %38 = arith.mulf %36, %37 : vector<256x128xf32>
    %39 = arith.truncf %38 : vector<256x128xf32> to vector<256x128xbf16>
    %c0_16 = arith.constant 0 : index
    %c0_17 = arith.constant 0 : index
    %40 = vector.load %arg4[%c0_16, %c0_17] : memref<128x64xbf16, #tpu.memory_space<vmem>>, vector<128x64xbf16>
    %cst_18 = arith.constant dense<0.000000e+00> : vector<256x64xf32>
    %41 = tpu.matmul %39, %40, %cst_18 {dimension_numbers = #tpu.dot_dimension_numbers<[1], [0], [0], [1], [0, 0, 1, 1], [], []>} : vector<256x128xbf16>, vector<128x64xbf16>, vector<256x64xf32> -> vector<256x64xf32>
    %c0_19 = arith.constant 0 : index
    %c0_20 = arith.constant 0 : index
    %42 = vector.load %arg5[%c0_19, %c0_20] : memref<256x64xf32, #tpu.memory_space<vmem>>, vector<256x64xf32>
    tpu.vector_store %arg5[%c0_19, %c0_20], %41 {strides = array<i32>} : memref<256x64xf32, #tpu.memory_space<vmem>>, vector<256x64xf32>,
    return
  }
  func.func @transform_0(%arg0: i32) -> (i32, i32, i32) {
    %c0_i32 = arith.constant 0 : i32
    %c0_i32_0 = arith.constant 0 : i32
    %c0_i32_1 = arith.constant 0 : i32
    return %c0_i32, %arg0, %c0_i32_0 : i32, i32, i32
  }
  func.func @transform_1(%arg0: i32) -> (i32, i32) {
    %c0_i32 = arith.constant 0 : i32
    %c0_i32_0 = arith.constant 0 : i32
    %c0_i32_1 = arith.constant 0 : i32
    return %c0_i32, %c0_i32_0 : i32, i32
  }
  func.func @transform_2(%arg0: i32) -> (i32, i32) {
    %c0_i32 = arith.constant 0 : i32
    %c0_i32_0 = arith.constant 0 : i32
    %c0_i32_1 = arith.constant 0 : i32
    return %c0_i32, %c0_i32_0 : i32, i32
  }
  func.func @transform_3(%arg0: i32) -> (i32, i32) {
    %c0_i32 = arith.constant 0 : i32
    %c0_i32_0 = arith.constant 0 : i32
    %c0_i32_1 = arith.constant 0 : i32
    return %c0_i32, %c0_i32_0 : i32, i32
  }
  func.func @transform_4(%arg0: i32) -> (i32, i32) {
    %c0_i32 = arith.constant 0 : i32
    %c0_i32_0 = arith.constant 0 : i32
    return %arg0, %c0_i32 : i32, i32
  }
}

</mosaic_0001>

<llo_original>
// kernel: transition_block_forward.2
$region0: #{transition_block_forward.2}
  #allocation0 [shape = 'u32[]', space=smem, size = 0x4, offset = 0x4, fixed_abs, tag = 'smem constant byte address 0x4 - core index']
  #allocation1 [shape = 'u32[144,128]{1,0:T(1,128)}', space=vmem, size = 0x12000, scoped, tag = 'internal scratch']
  #allocation2 [shape = 'f32[1,128]{1,0:T(1,128)}', space=vmem, size = 0x200, scoped, tag = 'scratch operand']
  #allocation3 [shape = 'f32[1,128]{1,0:T(1,128)}', space=vmem, size = 0x200, scoped, tag = 'scratch operand']
  %s0 = inlined_call_operand.vmem [shape: f32[4,512,128], index: 0, kind: input, shape index: {}]
  %s1 = inlined_call_operand.vmem [shape: f32[1,128], index: 1, kind: input, shape index: {}]
  %s2 = inlined_call_operand.vmem [shape: f32[1,128], index: 2, kind: input, shape index: {}]
  %s3 = inlined_call_operand.vmem [shape: f32[1,128], index: 3, kind: output, shape index: {0}]
  %s4 = inlined_call_operand.vmem [shape: f32[1,128], index: 4, kind: output, shape index: {1}]
  %5 = xla_tuple %s3, %s4
  %s6 = sld [smem:[#allocation0]]
  $region99: #{transition_block_forward.2} parent=0
    _
  %s8 = ssub.s32 1, %s6
  %s9 = scalar_select 0, %s8, %s6
  $region1: #{transition_block_forward.2} parent=0
    #allocation4 [shape = 'u8[1048576]{0}', space=vmem, size = 0x100000, scoped, tag = 'input window, operand 0']
    loop: start=0, step=1, limit=4
    $region2: #{transition_block_forward.2} parent=1 // loop_pre_header
      _
    $region3: #{transition_block_forward.2} parent=1 // loop_header
      %s11 = sphi 0, %s15
      %p12 = scmp.ge.s32.totalorder %s11, 4
      %s21 = sphi 0, %s23
      %s24 = sphi 0, %s21
      %s25 = sphi 0, %s24
      %s41 = sphi 0, %s25
      %s45 = sphi 0, %s45
      %s47 = sphi 0, %s45
      %s48 = sphi 0, %s47
      %s62 = sphi 0, %s48
      %s66 = sphi 0, %s66
      %s68 = sphi 0, %s66
      %s69 = sphi 0, %s68
      %s83 = sphi 0, %s69
      %s87 = sphi 0, %s87
      %s89 = sphi 0, %s87
      %s90 = sphi 0, %s89
      %s104 = sphi 0, %s90
      %s108 = sphi 0, %s108
      %s110 = sphi 0, %s108
      %s111 = sphi 0, %s110
      %s125 = sphi 0, %s111
    $region4: #{transition_block_forward.2} parent=1 // loop_header_branch
      %14 = sbr.rel (%p12) target = $region8
    $region5: #{transition_block_forward.2} parent=1 // loop_body
      %s16 = ssub.s32 %s11, 1
      %s17 = ssub.s32 %s11, 2
      %s18 = sadd.s32 %s11, 1
      %s19 = ssub.s32 %s11, %s18
      %p20 = scmp.eq.s32.totalorder %s19, 0
      %s22 = sadd.s32 %s21, 1
      %s23 = scalar_select %p20, %s21, %s22
      %p26 = pneg %p20
      %p27 = scmp.eq.s32.totalorder %s11, 1
      %p28 = por %p26, %p27
      %p29 = scmp.ne.s32.totalorder %s21, %s24
      %p30 = scmp.eq.s32.totalorder %s11, 0
      %p31 = por %p29, %p30
      %p32 = scmp.ne.s32.totalorder %s21, %s24
      %p33 = scmp.eq.s32.totalorder %s16, 1
      %p34 = por %p32, %p33
      %p35 = scmp.ne.s32.totalorder %s24, %s25
      %p36 = scmp.eq.s32.totalorder %s16, 0
      %p37 = por %p35, %p36
      %p38 = scmp.ne.s32.totalorder %s24, %s25
      %p39 = scmp.eq.s32.totalorder %s17, 1
      %p40 = por %p38, %p39
      %p42 = scmp.ne.s32.totalorder %s25, %s41
      %p43 = scmp.eq.s32.totalorder %s17, 0
      %p44 = por %p42, %p43
      %s46 = sadd.s32 %s45, 1
      %p49 = scmp.eq.s32.totalorder %s11, 1
      %p50 = scmp.ne.s32.totalorder %s45, %s47
      %p51 = scmp.eq.s32.totalorder %s11, 0
      %p52 = por %p50, %p51
      %p53 = scmp.ne.s32.totalorder %s45, %s47
      %p54 = scmp.eq.s32.totalorder %s16, 1
      %p55 = por %p53, %p54
      %p56 = scmp.ne.s32.totalorder %s47, %s48
      %p57 = scmp.eq.s32.totalorder %s16, 0
      %p58 = por %p56, %p57
      %p59 = scmp.ne.s32.totalorder %s47, %s48
      %p60 = scmp.eq.s32.totalorder %s17, 1
      %p61 = por %p59, %p60
      %p63 = scmp.ne.s32.totalorder %s48, %s62
      %p64 = scmp.eq.s32.totalorder %s17, 0
      %p65 = por %p63, %p64
      %s67 = sadd.s32 %s66, 1
      %p70 = scmp.eq.s32.totalorder %s11, 1
      %p71 = scmp.ne.s32.totalorder %s66, %s68
      %p72 = scmp.eq.s32.totalorder %s11, 0
      %p73 = por %p71, %p72
      %p74 = scmp.ne.s32.totalorder %s66, %s68
      %p75 = scmp.eq.s32.totalorder %s16, 1
      %p76 = por %p74, %p75
      %p77 = scmp.ne.s32.totalorder %s68, %s69
      %p78 = scmp.eq.s32.totalorder %s16, 0
      %p79 = por %p77, %p78
      %p80 = scmp.ne.s32.totalorder %s68, %s69
      %p81 = scmp.eq.s32.totalorder %s17, 1
      %p82 = por %p80, %p81
      %p84 = scmp.ne.s32.totalorder %s69, %s83
      %p85 = scmp.eq.s32.totalorder %s17, 0
      %p86 = por %p84, %p85
      %s88 = sadd.s32 %s87, 1
      %p91 = scmp.eq.s32.totalorder %s11, 1
      %p92 = scmp.ne.s32.totalorder %s87, %s89
      %p93 = scmp.eq.s32.totalorder %s11, 0
      %p94 = por %p92, %p93
      %p95 = scmp.ne.s32.totalorder %s87, %s89
      %p96 = scmp.eq.s32.totalorder %s16, 1
      %p97 = por %p95, %p96
      %p98 = scmp.ne.s32.totalorder %s89, %s90
      %p99 = scmp.eq.s32.totalorder %s16, 0
      %p100 = por %p98, %p99
      %p101 = scmp.ne.s32.totalorder %s89, %s90
      %p102 = scmp.eq.s32.totalorder %s17, 1
      %p103 = por %p101, %p102
      %p105 = scmp.ne.s32.totalorder %s90, %s104
      %p106 = scmp.eq.s32.totalorder %s17, 0
      %p107 = por %p105, %p106
      %s109 = sadd.s32 %s108, 1
      %p112 = scmp.eq.s32.totalorder %s11, 1
      %p113 = scmp.ne.s32.totalorder %s108, %s110
      %p114 = scmp.eq.s32.totalorder %s11, 0
      %p115 = por %p113, %p114
      %p116 = scmp.ne.s32.totalorder %s108, %s110
      %p117 = scmp.eq.s32.totalorder %s16, 1
      %p118 = por %p116, %p117
      %p119 = scmp.ne.s32.totalorder %s110, %s111
      %p120 = scmp.eq.s32.totalorder %s16, 0
      %p121 = por %p119, %p120
      %p122 = scmp.ne.s32.totalorder %s110, %s111
      %p123 = scmp.eq.s32.totalorder %s17, 1
      %p124 = por %p122, %p123
      %p126 = scmp.ne.s32.totalorder %s111, %s125
      %p127 = scmp.eq.s32.totalorder %s17, 0
      %p128 = por %p126, %p127
      %p129 = scmp.le.s32.totalorder 1, %s11
      %p130 = scmp.lt.s32.totalorder %s11, 3
      %p131 = pnand %p129, %p130
      %p132 = pneg %p131
      // Predicated region
      $region9: #{transition_block_forward.2} parent=5 // pred_check
        _
      $region10: #{transition_block_forward.2} parent=5 // pred_check_branch
        %134 = sbr.rel (%p131) target = $region12
      $region11: #{transition_block_forward.2} parent=5 // pred_region
        %s135 = ssub.s32 %s11, 1
        // Predicated region
        $region13: #{transition_block_forward.2} parent=11 // pred_check
          %p136 = pneg %p58
        $region14: #{transition_block_forward.2} parent=11 // pred_check_branch
          %138 = sbr.rel (%p136) target = $region16
        $region15: #{transition_block_forward.2} parent=11 // pred_region
          _
        $region16: #{transition_block_forward.2} parent=11 // pred_fallthru
          _
        // Predicated region
        $region17: #{transition_block_forward.2} parent=11 // pred_check
          %p139 = pneg %p79
        $region18: #{transition_block_forward.2} parent=11 // pred_check_branch
          %141 = sbr.rel (%p139) target = $region20
        $region19: #{transition_block_forward.2} parent=11 // pred_region
          _
        $region20: #{transition_block_forward.2} parent=11 // pred_fallthru
          _
      $region12: #{transition_block_forward.2} parent=5 // pred_fallthru
        _
      %p142 = scmp.lt.s32.totalorder %s11, 2
      // Predicated region
      $region21: #{transition_block_forward.2} parent=5 // pred_check
        %p143 = pneg %p142
      $region22: #{transition_block_forward.2} parent=5 // pred_check_branch
        %145 = sbr.rel (%p143) target = $region24
      $region23: #{transition_block_forward.2} parent=5 // pred_region
        // Predicated region
        $region25: #{transition_block_forward.2} parent=23 // pred_check
          %p146 = pneg %p31
        $region26: #{transition_block_forward.2} parent=23 // pred_check_branch
          %148 = sbr.rel (%p146) target = $region28
        $region27: #{transition_block_forward.2} parent=23 // pred_region
          %s149 = sand.u32 %s21, 1
          %s150 = sand.u32 %s21, 1
          %s151 = smul.addr %s150, 1024
          %s152 = scalar_lea.vmem [#allocation4], %s151
          %s153 = smul.u32 32, %s11
          %s154 = smul.addr %s153, 8
          %s155 = scalar_lea.vmem %s0, %s154
          // Predicated region
          $region29: #{transition_block_forward.2} parent=27 // pred_check
            _
          $region30: #{transition_block_forward.2} parent=27 // pred_check_branch
            %157 = sbr.rel (0) target = $region32
          $region31: #{transition_block_forward.2} parent=27 // pred_region
            // Predicated region
            $region33: #{transition_block_forward.2} parent=31 // pred_check
              _
            $region34: #{transition_block_forward.2} parent=31 // pred_check_branch
              %159 = sbr.rel (0) target = $region36
            $region35: #{transition_block_forward.2} parent=31 // pred_region
              // Predicated region
              $region48: #{transition_block_forward.2} parent=35 // pred_check
                _
              $region49: #{transition_block_forward.2} parent=35 // pred_check_branch
                %429 = sbr.rel (0) target = $region51
              $region50: #{transition_block_forward.2} parent=35 // pred_region
                loop: start=0, step=1, limit=1
                $region52: #{transition_block_forward.2} parent=50 // loop_pre_header
                  _
                $region53: #{transition_block_forward.2} parent=50 // loop_header
                  %s431 = sphi 0, %s435
                  %p432 = scmp.ge.s32.totalorder %s431, 1
                  %s436 = sphi %s155, %s155
                  %s437 = sphi %s152, %s152
                $region54: #{transition_block_forward.2} parent=50 // loop_header_branch
                  %434 = sbr.rel (%p432) target = $region58
                $region55: #{transition_block_forward.2} parent=50 // loop_body
                  %v438 = vld [vmem:[%s436] sm:$0xff]
                  %439 = vst [vmem:[%s437] sm:$0xff] %v438
                  %v440 = vld [vmem:[%s436 + $0x8] sm:$0xff]
                  %441 = vst [vmem:[%s437 + $0x8] sm:$0xff] %v440
                  %v442 = vld [vmem:[%s436 + $0x10] sm:$0xff]
                  %443 = vst [vmem:[%s437 + $0x10] sm:$0xff] %v442
                  %v444 = vld [vmem:[%s436 + $0x18] sm:$0xff]
                  %445 = vst [vmem:[%s437 + $0x18] sm:$0xff] %v444
                  %v446 = vld [vmem:[%s436 + $0x20] sm:$0xff]
                  %447 = vst [vmem:[%s437 + $0x20] sm:$0xff] %v446
                  %v448 = vld [vmem:[%s436 + $0x28] sm:$0xff]
                  %449 = vst [vmem:[%s437 + $0x28] sm:$0xff] %v448
                  %v450 = vld [vmem:[%s436 + $0x30] sm:$0xff]
                  %451 = vst [vmem:[%s437 + $0x30] sm:$0xff] %v450
                  %v452 = vld [vmem:[%s436 + $0x38] sm:$0xff]
                  %453 = vst [vmem:[%s437 + $0x38] sm:$0xff] %v452
                  %v454 = vld [vmem:[%s436 + $0x40] sm:$0xff]
                  %455 = vst [vmem:[%s437 + $0x40] sm:$0xff] %v454
                  %v456 = vld [vmem:[%s436 + $0x48] sm:$0xff]
                  %457 = vst [vmem:[%s437 + $0x48] sm:$0xff] %v456
                  %v458 = vld [vmem:[%s436 + $0x50] sm:$0xff]
                  %459 = vst [vmem:[%s437 + $0x50] sm:$0xff] %v458
                  %v460 = vld [vmem:[%s436 + $0x58] sm:$0xff]
                  %461 = vst [vmem:[%s437 + $0x58] sm:$0xff] %v460
                  %v462 = vld [vmem:[%s436 + $0x60] sm:$0xff]
                  %463 = vst [vmem:[%s437 + $0x60] sm:$0xff] %v462
                  %v464 = vld [vmem:[%s436 + $0x68] sm:$0xff]
                  %465 = vst [vmem:[%s437 + $0x68] sm:$0xff] %v464
                  %v466 = vld [vmem:[%s436 + $0x70] sm:$0xff]
                  %467 = vst [vmem:[%s437 + $0x70] sm:$0xff] %v466
                  %v468 = vld [vmem:[%s436 + $0x78] sm:$0xff]
                  %469 = vst [vmem:[%s437 + $0x78] sm:$0xff] %v468
                  %v470 = vld [vmem:[%s436 + $0x80] sm:$0xff]
                  %471 = vst [vmem:[%s437 + $0x80] sm:$0xff] %v470
                  %v472 = vld [vmem:[%s436 + $0x88] sm:$0xff]
                  %473 = vst [vmem:[%s437 + $0x88] sm:$0xff] %v472
                  %v474 = vld [vmem:[%s436 + $0x90] sm:$0xff]
                  %475 = vst [vmem:[%s437 + $0x90] sm:$0xff] %v474
                  %v476 = vld [vmem:[%s436 + $0x98] sm:$0xff]
                  %477 = vst [vmem:[%s437 + $0x98] sm:$0xff] %v476
                  %v478 = vld [vmem:[%s436 + $0xa0] sm:$0xff]
                  %479 = vst [vmem:[%s437 + $0xa0] sm:$0xff] %v478
                  %v480 = vld [vmem:[%s436 + $0xa8] sm:$0xff]
                  %481 = vst [vmem:[%s437 + $0xa8] sm:$0xff] %v480
                  %v482 = vld [vmem:[%s436 + $0xb0] sm:$0xff]
                  %483 = vst [vmem:[%s437 + $0xb0] sm:$0xff] %v482
                  %v484 = vld [vmem:[%s436 + $0xb8] sm:$0xff]
                  %485 = vst [vmem:[%s437 + $0xb8] sm:$0xff] %v484
                  %v486 = vld [vmem:[%s436 + $0xc0] sm:$0xff]
                  %487 = vst [vmem:[%s437 + $0xc0] sm:$0xff] %v486
                  %v488 = vld [vmem:[%s436 + $0xc8] sm:$0xff]
                  %489 = vst [vmem:[%s437 + $0xc8] sm:$0xff] %v488
                  %v490 = vld [vmem:[%s436 + $0xd0] sm:$0xff]
                  %491 = vst [vmem:[%s437 + $0xd0] sm:$0xff] %v490
                  %v492 = vld [vmem:[%s436 + $0xd8] sm:$0xff]
                  %493 = vst [vmem:[%s437 + $0xd8] sm:$0xff] %v492
                  %v494 = vld [vmem:[%s436 + $0xe0] sm:$0xff]
                  %495 = vst [vmem:[%s437 + $0xe0] sm:$0xff] %v494
                  %v496 = vld [vmem:[%s436 + $0xe8] sm:$0xff]
                  %497 = vst [vmem:[%s437 + $0xe8] sm:$0xff] %v496
                  %v498 = vld [vmem:[%s436 + $0xf0] sm:$0xff]
                  %499 = vst [vmem:[%s437 + $0xf0] sm:$0xff] %v498
                  %v500 = vld [vmem:[%s436 + $0xf8] sm:$0xff]
                  %501 = vst [vmem:[%s437 + $0xf8] sm:$0xff] %v500
                  %v502 = vld [vmem:[%s436 + $0x200] sm:$0xff]
                  %503 = vst [vmem:[%s437 + $0x100] sm:$0xff] %v502
                  %v504 = vld [vmem:[%s436 + $0x208] sm:$0xff]
                  %505 = vst [vmem:[%s437 + $0x108] sm:$0xff] %v504
                  %v506 = vld [vmem:[%s436 + $0x210] sm:$0xff]
                  %507 = vst [vmem:[%s437 + $0x110] sm:$0xff] %v506
                  %v508 = vld [vmem:[%s436 + $0x218] sm:$0xff]
                  %509 = vst [vmem:[%s437 + $0x118] sm:$0xff] %v508
                  %v510 = vld [vmem:[%s436 + $0x220] sm:$0xff]
                  %511 = vst [vmem:[%s437 + $0x120] sm:$0xff] %v510
                  %v512 = vld [vmem:[%s436 + $0x228] sm:$0xff]
                  %513 = vst [vmem:[%s437 + $0x128] sm:$0xff] %v512
                  %v514 = vld [vmem:[%s436 + $0x230] sm:$0xff]
                  %515 = vst [vmem:[%s437 + $0x130] sm:$0xff] %v514
                  %v516 = vld [vmem:[%s436 + $0x238] sm:$0xff]
                  %517 = vst [vmem:[%s437 + $0x138] sm:$0xff] %v516
                  %v518 = vld [vmem:[%s436 + $0x240] sm:$0xff]
                  %519 = vst [vmem:[%s437 + $0x140] sm:$0xff] %v518
                  %v520 = vld [vmem:[%s436 + $0x248] sm:$0xff]
                  %521 = vst [vmem:[%s437 + $0x148] sm:$0xff] %v520
                  %v522 = vld [vmem:[%s436 + $0x250] sm:$0xff]
                  %523 = vst [vmem:[%s437 + $0x150] sm:$0xff] %v522
                  %v524 = vld [vmem:[%s436 + $0x258] sm:$0xff]
                  %525 = vst [vmem:[%s437 + $0x158] sm:$0xff] %v524
                  %v526 = vld [vmem:[%s436 + $0x260] sm:$0xff]
                  %527 = vst [vmem:[%s437 + $0x160] sm:$0xff] %v526
                  %v528 = vld [vmem:[%s436 + $0x268] sm:$0xff]
                  %529 = vst [vmem:[%s437 + $0x168] sm:$0xff] %v528
                  %v530 = vld [vmem:[%s436 + $0x270] sm:$0xff]
                  %531 = vst [vmem:[%s437 + $0x170] sm:$0xff] %v530
                  %v532 = vld [vmem:[%s436 + $0x278] sm:$0xff]
                  %533 = vst [vmem:[%s437 + $0x178] sm:$0xff] %v532
                  %v534 = vld [vmem:[%s436 + $0x280] sm:$0xff]
                  %535 = vst [vmem:[%s437 + $0x180] sm:$0xff] %v534
                  %v536 = vld [vmem:[%s436 + $0x288] sm:$0xff]
                  %537 = vst [vmem:[%s437 + $0x188] sm:$0xff] %v536
                  %v538 = vld [vmem:[%s436 + $0x290] sm:$0xff]
                  %539 = vst [vmem:[%s437 + $0x190] sm:$0xff] %v538
                  %v540 = vld [vmem:[%s436 + $0x298] sm:$0xff]
                  %541 = vst [vmem:[%s437 + $0x198] sm:$0xff] %v540
                  %v542 = vld [vmem:[%s436 + $0x2a0] sm:$0xff]
                  %543 = vst [vmem:[%s437 + $0x1a0] sm:$0xff] %v542
                  %v544 = vld [vmem:[%s436 + $0x2a8] sm:$0xff]
                  %545 = vst [vmem:[%s437 + $0x1a8] sm:$0xff] %v544
                  %v546 = vld [vmem:[%s436 + $0x2b0] sm:$0xff]
                  %547 = vst [vmem:[%s437 + $0x1b0] sm:$0xff] %v546
                  %v548 = vld [vmem:[%s436 + $0x2b8] sm:$0xff]
                  %549 = vst [vmem:[%s437 + $0x1b8] sm:$0xff] %v548
                  %v550 = vld [vmem:[%s436 + $0x2c0] sm:$0xff]
                  %551 = vst [vmem:[%s437 + $0x1c0] sm:$0xff] %v550
                  %v552 = vld [vmem:[%s436 + $0x2c8] sm:$0xff]
                  %553 = vst [vmem:[%s437 + $0x1c8] sm:$0xff] %v552
                  %v554 = vld [vmem:[%s436 + $0x2d0] sm:$0xff]
                  %555 = vst [vmem:[%s437 + $0x1d0] sm:$0xff] %v554
                  %v556 = vld [vmem:[%s436 + $0x2d8] sm:$0xff]
                  %557 = vst [vmem:[%s437 + $0x1d8] sm:$0xff] %v556
                  %v558 = vld [vmem:[%s436 + $0x2e0] sm:$0xff]
                  %559 = vst [vmem:[%s437 + $0x1e0] sm:$0xff] %v558
                  %v560 = vld [vmem:[%s436 + $0x2e8] sm:$0xff]
                  %561 = vst [vmem:[%s437 + $0x1e8] sm:$0xff] %v560
                  %v562 = vld [vmem:[%s436 + $0x2f0] sm:$0xff]
                  %563 = vst [vmem:[%s437 + $0x1f0] sm:$0xff] %v562
                  %v564 = vld [vmem:[%s436 + $0x2f8] sm:$0xff]
                  %565 = vst [vmem:[%s437 + $0x1f8] sm:$0xff] %v564
                  %v566 = vld [vmem:[%s436 + $0x400] sm:$0xff]
                  %567 = vst [vmem:[%s437 + $0x200] sm:$0xff] %v566
                  %v568 = vld [vmem:[%s436 + $0x408] sm:$0xff]
                  %569 = vst [vmem:[%s437 + $0x208] sm:$0xff] %v568
                  %v570 = vld [vmem:[%s436 + $0x410] sm:$0xff]
                  %571 = vst [vmem:[%s437 + $0x210] sm:$0xff] %v570
                  %v572 = vld [vmem:[%s436 + $0x418] sm:$0xff]
                  %573 = vst [vmem:[%s437 + $0x218] sm:$0xff] %v572
                  %v574 = vld [vmem:[%s436 + $0x420] sm:$0xff]
                  %575 = vst [vmem:[%s437 + $0x220] sm:$0xff] %v574
                  %v576 = vld [vmem:[%s436 + $0x428] sm:$0xff]
                  %577 = vst [vmem:[%s437 + $0x228] sm:$0xff] %v576
                  %v578 = vld [vmem:[%s436 + $0x430] sm:$0xff]
                  %579 = vst [vmem:[%s437 + $0x230] sm:$0xff] %v578
                  %v580 = vld [vmem:[%s436 + $0x438] sm:$0xff]
                  %581 = vst [vmem:[%s437 + $0x238] sm:$0xff] %v580
                  %v582 = vld [vmem:[%s436 + $0x440] sm:$0xff]
                  %583 = vst [vmem:[%s437 + $0x240] sm:$0xff] %v582
                  %v584 = vld [vmem:[%s436 + $0x448] sm:$0xff]
                  %585 = vst [vmem:[%s437 + $0x248] sm:$0xff] %v584
                  %v586 = vld [vmem:[%s436 + $0x450] sm:$0xff]
                  %587 = vst [vmem:[%s437 + $0x250] sm:$0xff] %v586
                  %v588 = vld [vmem:[%s436 + $0x458] sm:$0xff]
                  %589 = vst [vmem:[%s437 + $0x258] sm:$0xff] %v588
                  %v590 = vld [vmem:[%s436 + $0x460] sm:$0xff]
                  %591 = vst [vmem:[%s437 + $0x260] sm:$0xff] %v590
                  %v592 = vld [vmem:[%s436 + $0x468] sm:$0xff]
                  %593 = vst [vmem:[%s437 + $0x268] sm:$0xff] %v592
                  %v594 = vld [vmem:[%s436 + $0x470] sm:$0xff]
                  %595 = vst [vmem:[%s437 + $0x270] sm:$0xff] %v594
                  %v596 = vld [vmem:[%s436 + $0x478] sm:$0xff]
                  %597 = vst [vmem:[%s437 + $0x278] sm:$0xff] %v596
                  %v598 = vld [vmem:[%s436 + $0x480] sm:$0xff]
                  %599 = vst [vmem:[%s437 + $0x280] sm:$0xff] %v598
                  %v600 = vld [vmem:[%s436 + $0x488] sm:$0xff]
                  %601 = vst [vmem:[%s437 + $0x288] sm:$0xff] %v600
                  %v602 = vld [vmem:[%s436 + $0x490] sm:$0xff]
                  %603 = vst [vmem:[%s437 + $0x290] sm:$0xff] %v602
                  %v604 = vld [vmem:[%s436 + $0x498] sm:$0xff]
                  %605 = vst [vmem:[%s437 + $0x298] sm:$0xff] %v604
                  %v606 = vld [vmem:[%s436 + $0x4a0] sm:$0xff]
                  %607 = vst [vmem:[%s437 + $0x2a0] sm:$0xff] %v606
                  %v608 = vld [vmem:[%s436 + $0x4a8] sm:$0xff]
                  %609 = vst [vmem:[%s437 + $0x2a8] sm:$0xff] %v608
                  %v610 = vld [vmem:[%s436 + $0x4b0] sm:$0xff]
                  %611 = vst [vmem:[%s437 + $0x2b0] sm:$0xff] %v610
                  %v612 = vld [vmem:[%s436 + $0x4b8] sm:$0xff]
                  %613 = vst [vmem:[%s437 + $0x2b8] sm:$0xff] %v612
                  %v614 = vld [vmem:[%s436 + $0x4c0] sm:$0xff]
                  %615 = vst [vmem:[%s437 + $0x2c0] sm:$0xff] %v614
                  %v616 = vld [vmem:[%s436 + $0x4c8] sm:$0xff]
                  %617 = vst [vmem:[%s437 + $0x2c8] sm:$0xff] %v616
                  %v618 = vld [vmem:[%s436 + $0x4d0] sm:$0xff]
                  %619 = vst [vmem:[%s437 + $0x2d0] sm:$0xff] %v618
                  %v620 = vld [vmem:[%s436 + $0x4d8] sm:$0xff]
                  %621 = vst [vmem:[%s437 + $0x2d8] sm:$0xff] %v620
                  %v622 = vld [vmem:[%s436 + $0x4e0] sm:$0xff]
                  %623 = vst [vmem:[%s437 + $0x2e0] sm:$0xff] %v622
                  %v624 = vld [vmem:[%s436 + $0x4e8] sm:$0xff]
                  %625 = vst [vmem:[%s437 + $0x2e8] sm:$0xff] %v624
                  %v626 = vld [vmem:[%s436 + $0x4f0] sm:$0xff]
                  %627 = vst [vmem:[%s437 + $0x2f0] sm:$0xff] %v626
                  %v628 = vld [vmem:[%s436 + $0x4f8] sm:$0xff]
                  %629 = vst [vmem:[%s437 + $0x2f8] sm:$0xff] %v628
                  %v630 = vld [vmem:[%s436 + $0x600] sm:$0xff]
                  %631 = vst [vmem:[%s437 + $0x300] sm:$0xff] %v630
                  %v632 = vld [vmem:[%s436 + $0x608] sm:$0xff]
                  %633 = vst [vmem:[%s437 + $0x308] sm:$0xff] %v632
                  %v634 = vld [vmem:[%s436 + $0x610] sm:$0xff]
                  %635 = vst [vmem:[%s437 + $0x310] sm:$0xff] %v634
                  %v636 = vld [vmem:[%s436 + $0x618] sm:$0xff]
                  %637 = vst [vmem:[%s437 + $0x318] sm:$0xff] %v636
                  %v638 = vld [vmem:[%s436 + $0x620] sm:$0xff]
                  %639 = vst [vmem:[%s437 + $0x320] sm:$0xff] %v638
                  %v640 = vld [vmem:[%s436 + $0x628] sm:$0xff]
                  %641 = vst [vmem:[%s437 + $0x328] sm:$0xff] %v640
                  %v642 = vld [vmem:[%s436 + $0x630] sm:$0xff]
                  %643 = vst [vmem:[%s437 + $0x330] sm:$0xff] %v642
                  %v644 = vld [vmem:[%s436 + $0x638] sm:$0xff]
                  %645 = vst [vmem:[%s437 + $0x338] sm:$0xff] %v644
                  %v646 = vld [vmem:[%s436 + $0x640] sm:$0xff]
                  %647 = vst [vmem:[%s437 + $0x340] sm:$0xff] %v646
                  %v648 = vld [vmem:[%s436 + $0x648] sm:$0xff]
                  %649 = vst [vmem:[%s437 + $0x348] sm:$0xff] %v648
                  %v650 = vld [vmem:[%s436 + $0x650] sm:$0xff]
                  %651 = vst [vmem:[%s437 + $0x350] sm:$0xff] %v650
                  %v652 = vld [vmem:[%s436 + $0x658] sm:$0xff]
                  %653 = vst [vmem:[%s437 + $0x358] sm:$0xff] %v652
                  %v654 = vld [vmem:[%s436 + $0x660] sm:$0xff]
                  %655 = vst [vmem:[%s437 + $0x360] sm:$0xff] %v654
                  %v656 = vld [vmem:[%s436 + $0x668] sm:$0xff]
                  %657 = vst [vmem:[%s437 + $0x368] sm:$0xff] %v656
                  %v658 = vld [vmem:[%s436 + $0x670] sm:$0xff]
                  %659 = vst [vmem:[%s437 + $0x370] sm:$0xff] %v658
                  %v660 = vld [vmem:[%s436 + $0x678] sm:$0xff]
                  %661 = vst [vmem:[%s437 + $0x378] sm:$0xff] %v660
                  %v662 = vld [vmem:[%s436 + $0x680] sm:$0xff]
                  %663 = vst [vmem:[%s437 + $0x380] sm:$0xff] %v662
                  %v664 = vld [vmem:[%s436 + $0x688] sm:$0xff]
                  %665 = vst [vmem:[%s437 + $0x388] sm:$0xff] %v664
                  %v666 = vld [vmem:[%s436 + $0x690] sm:$0xff]
                  %667 = vst [vmem:[%s437 + $0x390] sm:$0xff] %v666
                  %v668 = vld [vmem:[%s436 + $0x698] sm:$0xff]
                  %669 = vst [vmem:[%s437 + $0x398] sm:$0xff] %v668
                  %v670 = vld [vmem:[%s436 + $0x6a0] sm:$0xff]
                  %671 = vst [vmem:[%s437 + $0x3a0] sm:$0xff] %v670
                  %v672 = vld [vmem:[%s436 + $0x6a8] sm:$0xff]
                  %673 = vst [vmem:[%s437 + $0x3a8] sm:$0xff] %v672
                  %v674 = vld [vmem:[%s436 + $0x6b0] sm:$0xff]
                  %675 = vst [vmem:[%s437 + $0x3b0] sm:$0xff] %v674
                  %v676 = vld [vmem:[%s436 + $0x6b8] sm:$0xff]
                  %677 = vst [vmem:[%s437 + $0x3b8] sm:$0xff] %v676
                  %v678 = vld [vmem:[%s436 + $0x6c0] sm:$0xff]
                  %679 = vst [vmem:[%s437 + $0x3c0] sm:$0xff] %v678
                  %v680 = vld [vmem:[%s436 + $0x6c8] sm:$0xff]
                  %681 = vst [vmem:[%s437 + $0x3c8] sm:$0xff] %v680
                  %v682 = vld [vmem:[%s436 + $0x6d0] sm:$0xff]
                  %683 = vst [vmem:[%s437 + $0x3d0] sm:$0xff] %v682
                  %v684 = vld [vmem:[%s436 + $0x6d8] sm:$0xff]
                  %685 = vst [vmem:[%s437 + $0x3d8] sm:$0xff] %v684
                  %v686 = vld [vmem:[%s436 + $0x6e0] sm:$0xff]
                  %687 = vst [vmem:[%s437 + $0x3e0] sm:$0xff] %v686
                  %v688 = vld [vmem:[%s436 + $0x6e8] sm:$0xff]
                  %689 = vst [vmem:[%s437 + $0x3e8] sm:$0xff] %v688
                  %v690 = vld [vmem:[%s436 + $0x6f0] sm:$0xff]
                  %691 = vst [vmem:[%s437 + $0x3f0] sm:$0xff] %v690
                  %v692 = vld [vmem:[%s436 + $0x6f8] sm:$0xff]
                  %693 = vst [vmem:[%s437 + $0x3f8] sm:$0xff] %v692
                $region56: #{transition_block_forward.2} parent=50 // loop_footer
                  %s435 = sadd.s32 1, %s431
                $region57: #{transition_block_forward.2} parent=50 // loop_footer_branch
                  %430 = sbr.rel target = $region53
                $region58: #{transition_block_forward.2} parent=50 // loop_exit
                  _
              $region51: #{transition_block_forward.2} parent=35 // pred_fallthru
                _
              // Predicated region
              $region59: #{transition_block_forward.2} parent=35 // pred_check
                _
              $region60: #{transition_block_forward.2} parent=35 // pred_check_branch
                %695 = sbr.rel target = $region62
              $region61: #{transition_block_forward.2} parent=35 // pred_region
                _
              $region62: #{transition_block_forward.2} parent=35 // pred_fallthru
                _
            $region36: #{transition_block_forward.2} parent=31 // pred_fallthru
              _
            // Predicated region
            $region37: #{transition_block_forward.2} parent=31 // pred_check
              _
            $region38: #{transition_block_forward.2} parent=31 // pred_check_branch
              %161 = sbr.rel target = $region40
            $region39: #{transition_block_forward.2} parent=31 // pred_region
              %s163 = ssub.s32 256, 1
              loop: start=0, step=1, limit=1
              $region41: #{transition_block_forward.2} parent=39 // loop_pre_header
                _
              $region42: #{transition_block_forward.2} parent=39 // loop_header
                %s165 = sphi 0, %s169
                %p166 = scmp.ge.s32.totalorder %s165, 1
                %s170 = sphi %s155, %s155
                %s171 = sphi %s152, %s152
              $region43: #{transition_block_forward.2} parent=39 // loop_header_branch
                %168 = sbr.rel (%p166) target = $region47
              $region44: #{transition_block_forward.2} parent=39 // loop_body
                %v172 = vld [vmem:[%s170] sm:%s163]
                %173 = vst [vmem:[%s171] sm:%s163] %v172
                %v174 = vld [vmem:[%s170 + $0x8] sm:%s163]
                %175 = vst [vmem:[%s171 + $0x8] sm:%s163] %v174
                %v176 = vld [vmem:[%s170 + $0x10] sm:%s163]
                %177 = vst [vmem:[%s171 + $0x10] sm:%s163] %v176
                %v178 = vld [vmem:[%s170 + $0x18] sm:%s163]
                %179 = vst [vmem:[%s171 + $0x18] sm:%s163] %v178
                %v180 = vld [vmem:[%s170 + $0x20] sm:%s163]
                %181 = vst [vmem:[%s171 + $0x20] sm:%s163] %v180
                %v182 = vld [vmem:[%s170 + $0x28] sm:%s163]
                %183 = vst [vmem:[%s171 + $0x28] sm:%s163] %v182
                %v184 = vld [vmem:[%s170 + $0x30] sm:%s163]
                %185 = vst [vmem:[%s171 + $0x30] sm:%s163] %v184
                %v186 = vld [vmem:[%s170 + $0x38] sm:%s163]
                %187 = vst [vmem:[%s171 + $0x38] sm:%s163] %v186
                %v188 = vld [vmem:[%s170 + $0x40] sm:%s163]
                %189 = vst [vmem:[%s171 + $0x40] sm:%s163] %v188
                %v190 = vld [vmem:[%s170 + $0x48] sm:%s163]
                %191 = vst [vmem:[%s171 + $0x48] sm:%s163] %v190
                %v192 = vld [vmem:[%s170 + $0x50] sm:%s163]
                %193 = vst [vmem:[%s171 + $0x50] sm:%s163] %v192
                %v194 = vld [vmem:[%s170 + $0x58] sm:%s163]
                %195 = vst [vmem:[%s171 + $0x58] sm:%s163] %v194
                %v196 = vld [vmem:[%s170 + $0x60] sm:%s163]
                %197 = vst [vmem:[%s171 + $0x60] sm:%s163] %v196
                %v198 = vld [vmem:[%s170 + $0x68] sm:%s163]
                %199 = vst [vmem:[%s171 + $0x68] sm:%s163] %v198
                %v200 = vld [vmem:[%s170 + $0x70] sm:%s163]
                %201 = vst [vmem:[%s171 + $0x70] sm:%s163] %v200
                %v202 = vld [vmem:[%s170 + $0x78] sm:%s163]
                %203 = vst [vmem:[%s171 + $0x78] sm:%s163] %v202
                %v204 = vld [vmem:[%s170 + $0x80] sm:%s163]
                %205 = vst [vmem:[%s171 + $0x80] sm:%s163] %v204
                %v206 = vld [vmem:[%s170 + $0x88] sm:%s163]
                %207 = vst [vmem:[%s171 + $0x88] sm:%s163] %v206
                %v208 = vld [vmem:[%s170 + $0x90] sm:%s163]
                %209 = vst [vmem:[%s171 + $0x90] sm:%s163] %v208
                %v210 = vld [vmem:[%s170 + $0x98] sm:%s163]
                %211 = vst [vmem:[%s171 + $0x98] sm:%s163] %v210
                %v212 = vld [vmem:[%s170 + $0xa0] sm:%s163]
                %213 = vst [vmem:[%s171 + $0xa0] sm:%s163] %v212
                %v214 = vld [vmem:[%s170 + $0xa8] sm:%s163]
                %215 = vst [vmem:[%s171 + $0xa8] sm:%s163] %v214
                %v216 = vld [vmem:[%s170 + $0xb0] sm:%s163]
                %217 = vst [vmem:[%s171 + $0xb0] sm:%s163] %v216
                %v218 = vld [vmem:[%s170 + $0xb8] sm:%s163]
                %219 = vst [vmem:[%s171 + $0xb8] sm:%s163] %v218
                %v220 = vld [vmem:[%s170 + $0xc0] sm:%s163]
                %221 = vst [vmem:[%s171 + $0xc0] sm:%s163] %v220
                %v222 = vld [vmem:[%s170 + $0xc8] sm:%s163]
                %223 = vst [vmem:[%s171 + $0xc8] sm:%s163] %v222
                %v224 = vld [vmem:[%s170 + $0xd0] sm:%s163]
                %225 = vst [vmem:[%s171 + $0xd0] sm:%s163] %v224
                %v226 = vld [vmem:[%s170 + $0xd8] sm:%s163]
                %227 = vst [vmem:[%s171 + $0xd8] sm:%s163] %v226
                %v228 = vld [vmem:[%s170 + $0xe0] sm:%s163]
                %229 = vst [vmem:[%s171 + $0xe0] sm:%s163] %v228
                %v230 = vld [vmem:[%s170 + $0xe8] sm:%s163]
                %231 = vst [vmem:[%s171 + $0xe8] sm:%s163] %v230
                %v232 = vld [vmem:[%s170 + $0xf0] sm:%s163]
                %233 = vst [vmem:[%s171 + $0xf0] sm:%s163] %v232
                %v234 = vld [vmem:[%s170 + $0xf8] sm:%s163]
                %235 = vst [vmem:[%s171 + $0xf8] sm:%s163] %v234
                %v236 = vld [vmem:[%s170 + $0x200] sm:%s163]
                %237 = vst [vmem:[%s171 + $0x100] sm:%s163] %v236
                %v238 = vld [vmem:[%s170 + $0x208] sm:%s163]
                %239 = vst [vmem:[%s171 + $0x108] sm:%s163] %v238
                %v240 = vld [vmem:[%s170 + $0x210] sm:%s163]
                %241 = vst [vmem:[%s171 + $0x110] sm:%s163] %v240
                %v242 = vld [vmem:[%s170 + $0x218] sm:%s163]
                %243 = vst [vmem:[%s171 + $0x118] sm:%s163] %v242
                %v244 = vld [vmem:[%s170 + $0x220] sm:%s163]
                %245 = vst [vmem:[%s171 + $0x120] sm:%s163] %v244
                %v246 = vld [vmem:[%s170 + $0x228] sm:%s163]
                %247 = vst [vmem:[%s171 + $0x128] sm:%s163] %v246
                %v248 = vld [vmem:[%s170 + $0x230] sm:%s163]
                %249 = vst [vmem:[%s171 + $0x130] sm:%s163] %v248
                %v250 = vld [vmem:[%s170 + $0x238] sm:%s163]
                %251 = vst [vmem:[%s171 + $0x138] sm:%s163] %v250
                %v252 = vld [vmem:[%s170 + $0x240] sm:%s163]
                %253 = vst [vmem:[%s171 + $0x140] sm:%s163] %v252
                %v254 = vld [vmem:[%s170 + $0x248] sm:%s163]
                %255 = vst [vmem:[%s171 + $0x148] sm:%s163] %v254
                %v256 = vld [vmem:[%s170 + $0x250] sm:%s163]
                %257 = vst [vmem:[%s171 + $0x150] sm:%s163] %v256
                %v258 = vld [vmem:[%s170 + $0x258] sm:%s163]
                %259 = vst [vmem:[%s171 + $0x158] sm:%s163] %v258
                %v260 = vld [vmem:[%s170 + $0x260] sm:%s163]
                %261 = vst [vmem:[%s171 + $0x160] sm:%s163] %v260
                %v262 = vld [vmem:[%s170 + $0x268] sm:%s163]
                %263 = vst [vmem:[%s171 + $0x168] sm:%s163] %v262
                %v264 = vld [vmem:[%s170 + $0x270] sm:%s163]
                %265 = vst [vmem:[%s171 + $0x170] sm:%s163] %v264
                %v266 = vld [vmem:[%s170 + $0x278] sm:%s163]
                %267 = vst [vmem:[%s171 + $0x178] sm:%s163] %v266
                %v268 = vld [vmem:[%s170 + $0x280] sm:%s163]
                %269 = vst [vmem:[%s171 + $0x180] sm:%s163] %v268
                %v270 = vld [vmem:[%s170 + $0x288] sm:%s163]
                %271 = vst [vmem:[%s171 + $0x188] sm:%s163] %v270
                %v272 = vld [vmem:[%s170 + $0x290] sm:%s163]
                %273 = vst [vmem:[%s171 + $0x190] sm:%s163] %v272
                %v274 = vld [vmem:[%s170 + $0x298] sm:%s163]
                %275 = vst [vmem:[%s171 + $0x198] sm:%s163] %v274
                %v276 = vld [vmem:[%s170 + $0x2a0] sm:%s163]
                %277 = vst [vmem:[%s171 + $0x1a0] sm:%s163] %v276
                %v278 = vld [vmem:[%s170 + $0x2a8] sm:%s163]
                %279 = vst [vmem:[%s171 + $0x1a8] sm:%s163] %v278
                %v280 = vld [vmem:[%s170 + $0x2b0] sm:%s163]
                %281 = vst [vmem:[%s171 + $0x1b0] sm:%s163] %v280
                %v282 = vld [vmem:[%s170 + $0x2b8] sm:%s163]
                %283 = vst [vmem:[%s171 + $0x1b8] sm:%s163] %v282
                %v284 = vld [vmem:[%s170 + $0x2c0] sm:%s163]
                %285 = vst [vmem:[%s171 + $0x1c0] sm:%s163] %v284
                %v286 = vld [vmem:[%s170 + $0x2c8] sm:%s163]
                %287 = vst [vmem:[%s171 + $0x1c8] sm:%s163] %v286
                %v288 = vld [vmem:[%s170 + $0x2d0] sm:%s163]
                %289 = vst [vmem:[%s171 + $0x1d0] sm:%s163] %v288
                %v290 = vld [vmem:[%s170 + $0x2d8] sm:%s163]
                %291 = vst [vmem:[%s171 + $0x1d8] sm:%s163] %v290
                %v292 = vld [vmem:[%s170 + $0x2e0] sm:%s163]
                %293 = vst [vmem:[%s171 + $0x1e0] sm:%s163] %v292
                %v294 = vld [vmem:[%s170 + $0x2e8] sm:%s163]
                %295 = vst [vmem:[%s171 + $0x1e8] sm:%s163] %v294
                %v296 = vld [vmem:[%s170 + $0x2f0] sm:%s163]
                %297 = vst [vmem:[%s171 + $0x1f0] sm:%s163] %v296
                %v298 = vld [vmem:[%s170 + $0x2f8] sm:%s163]
                %299 = vst [vmem:[%s171 + $0x1f8] sm:%s163] %v298
                %v300 = vld [vmem:[%s170 + $0x400] sm:%s163]
                %301 = vst [vmem:[%s171 + $0x200] sm:%s163] %v300
                %v302 = vld [vmem:[%s170 + $0x408] sm:%s163]
                %303 = vst [vmem:[%s171 + $0x208] sm:%s163] %v302
                %v304 = vld [vmem:[%s170 + $0x410] sm:%s163]
                %305 = vst [vmem:[%s171 + $0x210] sm:%s163] %v304
                %v306 = vld [vmem:[%s170 + $0x418] sm:%s163]
                %307 = vst [vmem:[%s171 + $0x218] sm:%s163] %v306
                %v308 = vld [vmem:[%s170 + $0x420] sm:%s163]
                %309 = vst [vmem:[%s171 + $0x220] sm:%s163] %v308
                %v310 = vld [vmem:[%s170 + $0x428] sm:%s163]
                %311 = vst [vmem:[%s171 + $0x228] sm:%s163] %v310
                %v312 = vld [vmem:[%s170 + $0x430] sm:%s163]
                %313 = vst [vmem:[%s171 + $0x230] sm:%s163] %v312
                %v314 = vld [vmem:[%s170 + $0x438] sm:%s163]
                %315 = vst [vmem:[%s171 + $0x238] sm:%s163] %v314
                %v316 = vld [vmem:[%s170 + $0x440] sm:%s163]
                %317 = vst [vmem:[%s171 + $0x240] sm:%s163] %v316
                %v318 = vld [vmem:[%s170 + $0x448] sm:%s163]
                %319 = vst [vmem:[%s171 + $0x248] sm:%s163] %v318
                %v320 = vld [vmem:[%s170 + $0x450] sm:%s163]
                %321 = vst [vmem:[%s171 + $0x250] sm:%s163] %v320
                %v322 = vld [vmem:[%s170 + $0x458] sm:%s163]
                %323 = vst [vmem:[%s171 + $0x258] sm:%s163] %v322
                %v324 = vld [vmem:[%s170 + $0x460] sm:%s163]
                %325 = vst [vmem:[%s171 + $0x260] sm:%s163] %v324
                %v326 = vld [vmem:[%s170 + $0x468] sm:%s163]
                %327 = vst [vmem:[%s171 + $0x268] sm:%s163] %v326
                %v328 = vld [vmem:[%s170 + $0x470] sm:%s163]
                %329 = vst [vmem:[%s171 + $0x270] sm:%s163] %v328
                %v330 = vld [vmem:[%s170 + $0x478] sm:%s163]
                %331 = vst [vmem:[%s171 + $0x278] sm:%s163] %v330
                %v332 = vld [vmem:[%s170 + $0x480] sm:%s163]
                %333 = vst [vmem:[%s171 + $0x280] sm:%s163] %v332
                %v334 = vld [vmem:[%s170 + $0x488] sm:%s163]
                %335 = vst [vmem:[%s171 + $0x288] sm:%s163] %v334
                %v336 = vld [vmem:[%s170 + $0x490] sm:%s163]
                %337 = vst [vmem:[%s171 + $0x290] sm:%s163] %v336
                %v338 = vld [vmem:[%s170 + $0x498] sm:%s163]
                %339 = vst [vmem:[%s171 + $0x298] sm:%s163] %v338
                %v340 = vld [vmem:[%s170 + $0x4a0] sm:%s163]
                %341 = vst [vmem:[%s171 + $0x2a0] sm:%s163] %v340
                %v342 = vld [vmem:[%s170 + $0x4a8] sm:%s163]
                %343 = vst [vmem:[%s171 + $0x2a8] sm:%s163] %v342
                %v344 = vld [vmem:[%s170 + $0x4b0] sm:%s163]
                %345 = vst [vmem:[%s171 + $0x2b0] sm:%s163] %v344
                %v346 = vld [vmem:[%s170 + $0x4b8] sm:%s163]
                %347 = vst [vmem:[%s171 + $0x2b8] sm:%s163] %v346
                %v348 = vld [vmem:[%s170 + $0x4c0] sm:%s163]
                %349 = vst [vmem:[%s171 + $0x2c0] sm:%s163] %v348
                %v350 = vld [vmem:[%s170 + $0x4c8] sm:%s163]
                %351 = vst [vmem:[%s171 + $0x2c8] sm:%s163] %v350
                %v352 = vld [vmem:[%s170 + $0x4d0] sm:%s163]
                %353 = vst [vmem:[%s171 + $0x2d0] sm:%s163] %v352
                %v354 = vld [vmem:[%s170 + $0x4d8] sm:%s163]
                %355 = vst [vmem:[%s171 + $0x2d8] sm:%s163] %v354
                %v356 = vld [vmem:[%s170 + $0x4e0] sm:%s163]
                %357 = vst [vmem:[%s171 + $0x2e0] sm:%s163] %v356
                %v358 = vld [vmem:[%s170 + $0x4e8] sm:%s163]
                %359 = vst [vmem:[%s171 + $0x2e8] sm:%s163] %v358
                %v360 = vld [vmem:[%s170 + $0x4f0] sm:%s163]
                %361 = vst [vmem:[%s171 + $0x2f0] sm:%s163] %v360
                %v362 = vld [vmem:[%s170 + $0x4f8] sm:%s163]
                %363 = vst [vmem:[%s171 + $0x2f8] sm:%s163] %v362
                %v364 = vld [vmem:[%s170 + $0x600] sm:%s163]
                %365 = vst [vmem:[%s171 + $0x300] sm:%s163] %v364
                %v366 = vld [vmem:[%s170 + $0x608] sm:%s163]
                %367 = vst [vmem:[%s171 + $0x308] sm:%s163] %v366
                %v368 = vld [vmem:[%s170 + $0x610] sm:%s163]
                %369 = vst [vmem:[%s171 + $0x310] sm:%s163] %v368
                %v370 = vld [vmem:[%s170 + $0x618] sm:%s163]
                %371 = vst [vmem:[%s171 + $0x318] sm:%s163] %v370
                %v372 = vld [vmem:[%s170 + $0x620] sm:%s163]
                %373 = vst [vmem:[%s171 + $0x320] sm:%s163] %v372
                %v374 = vld [vmem:[%s170 + $0x628] sm:%s163]
                %375 = vst [vmem:[%s171 + $0x328] sm:%s163] %v374
                %v376 = vld [vmem:[%s170 + $0x630] sm:%s163]
                %377 = vst [vmem:[%s171 + $0x330] sm:%s163] %v376
                %v378 = vld [vmem:[%s170 + $0x638] sm:%s163]
                %379 = vst [vmem:[%s171 + $0x338] sm:%s163] %v378
                %v380 = vld [vmem:[%s170 + $0x640] sm:%s163]
                %381 = vst [vmem:[%s171 + $0x340] sm:%s163] %v380
                %v382 = vld [vmem:[%s170 + $0x648] sm:%s163]
                %383 = vst [vmem:[%s171 + $0x348] sm:%s163] %v382
                %v384 = vld [vmem:[%s170 + $0x650] sm:%s163]
                %385 = vst [vmem:[%s171 + $0x350] sm:%s163] %v384
                %v386 = vld [vmem:[%s170 + $0x658] sm:%s163]
                %387 = vst [vmem:[%s171 + $0x358] sm:%s163] %v386
                %v388 = vld [vmem:[%s170 + $0x660] sm:%s163]
                %389 = vst [vmem:[%s171 + $0x360] sm:%s163] %v388
                %v390 = vld [vmem:[%s170 + $0x668] sm:%s163]
                %391 = vst [vmem:[%s171 + $0x368] sm:%s163] %v390
                %v392 = vld [vmem:[%s170 + $0x670] sm:%s163]
                %393 = vst [vmem:[%s171 + $0x370] sm:%s163] %v392
                %v394 = vld [vmem:[%s170 + $0x678] sm:%s163]
                %395 = vst [vmem:[%s171 + $0x378] sm:%s163] %v394
                %v396 = vld [vmem:[%s170 + $0x680] sm:%s163]
                %397 = vst [vmem:[%s171 + $0x380] sm:%s163] %v396
                %v398 = vld [vmem:[%s170 + $0x688] sm:%s163]
                %399 = vst [vmem:[%s171 + $0x388] sm:%s163] %v398
                %v400 = vld [vmem:[%s170 + $0x690] sm:%s163]
                %401 = vst [vmem:[%s171 + $0x390] sm:%s163] %v400
                %v402 = vld [vmem:[%s170 + $0x698] sm:%s163]
                %403 = vst [vmem:[%s171 + $0x398] sm:%s163] %v402
                %v404 = vld [vmem:[%s170 + $0x6a0] sm:%s163]
                %405 = vst [vmem:[%s171 + $0x3a0] sm:%s163] %v404
                %v406 = vld [vmem:[%s170 + $0x6a8] sm:%s163]
                %407 = vst [vmem:[%s171 + $0x3a8] sm:%s163] %v406
                %v408 = vld [vmem:[%s170 + $0x6b0] sm:%s163]
                %409 = vst [vmem:[%s171 + $0x3b0] sm:%s163] %v408
                %v410 = vld [vmem:[%s170 + $0x6b8] sm:%s163]
                %411 = vst [vmem:[%s171 + $0x3b8] sm:%s163] %v410
                %v412 = vld [vmem:[%s170 + $0x6c0] sm:%s163]
                %413 = vst [vmem:[%s171 + $0x3c0] sm:%s163] %v412
                %v414 = vld [vmem:[%s170 + $0x6c8] sm:%s163]
                %415 = vst [vmem:[%s171 + $0x3c8] sm:%s163] %v414
                %v416 = vld [vmem:[%s170 + $0x6d0] sm:%s163]
                %417 = vst [vmem:[%s171 + $0x3d0] sm:%s163] %v416
                %v418 = vld [vmem:[%s170 + $0x6d8] sm:%s163]
                %419 = vst [vmem:[%s171 + $0x3d8] sm:%s163] %v418
                %v420 = vld [vmem:[%s170 + $0x6e0] sm:%s163]
                %421 = vst [vmem:[%s171 + $0x3e0] sm:%s163] %v420
                %v422 = vld [vmem:[%s170 + $0x6e8] sm:%s163]
                %423 = vst [vmem:[%s171 + $0x3e8] sm:%s163] %v422
                %v424 = vld [vmem:[%s170 + $0x6f0] sm:%s163]
                %425 = vst [vmem:[%s171 + $0x3f0] sm:%s163] %v424
                %v426 = vld [vmem:[%s170 + $0x6f8] sm:%s163]
                %427 = vst [vmem:[%s171 + $0x3f8] sm:%s163] %v426
              $region45: #{transition_block_forward.2} parent=39 // loop_footer
                %s169 = sadd.s32 1, %s165
              $region46: #{transition_block_forward.2} parent=39 // loop_footer_branch
                %164 = sbr.rel target = $region42
              $region47: #{transition_block_forward.2} parent=39 // loop_exit
                _
            $region40: #{transition_block_forward.2} parent=31 // pred_fallthru
              _
          $region32: #{transition_block_forward.2} parent=27 // pred_fallthru
            _
          %696 = vnop
        $region28: #{transition_block_forward.2} parent=23 // pred_fallthru
          _
      $region24: #{transition_block_forward.2} parent=5 // pred_fallthru
        _
      %p697 = scmp.le.s32.totalorder 1, %s11
      %p698 = scmp.lt.s32.totalorder %s11, 3
      %p699 = pnand %p697, %p698
      %p700 = pneg %p699
      // Predicated region
      $region63: #{transition_block_forward.2} parent=5 // pred_check
        _
      $region64: #{transition_block_forward.2} parent=5 // pred_check_branch
        %702 = sbr.rel (%p699) target = $region66
      $region65: #{transition_block_forward.2} parent=5 // pred_region
        %s703 = ssub.s32 %s11, 1
        %s704 = sand.u32 %s24, 1
        %s705 = sand.u32 %s24, 1
        %s706 = smul.addr %s705, 1024
        %s707 = scalar_lea.vmem [#allocation4], %s706
        // Predicated region
        $region67: #{transition_block_forward.2} parent=65 // pred_check
          %p708 = pneg %p37
        $region68: #{transition_block_forward.2} parent=65 // pred_check_branch
          %710 = sbr.rel (%p708) target = $region70
        $region69: #{transition_block_forward.2} parent=65 // pred_region
          _
        $region70: #{transition_block_forward.2} parent=65 // pred_fallthru
          _
        %s711 = sand.u32 %s24, 1
        %s712 = sand.u32 %s24, 1
        %s713 = smul.addr %s712, 1024
        %s714 = scalar_lea.vmem [#allocation4], %s713
        %p715 = pneg %p37
        %p716 = pneg %p34
        %p717 = pneg %p58
        %p718 = pneg %p55
        %p719 = pneg %p79
        %p720 = pneg %p76
        %p721 = pneg %p100
        %p722 = pneg %p97
        %p723 = pneg %p121
        %p724 = pneg %p118
        %s725 = smul.u32 32, %s16
        %p726 = scmp.eq.s32.totalorder %s16, 0
        // Predicated region
        $region71: #{transition_block_forward.2} parent=65 // pred_check
          %p727 = pneg %p726
        $region72: #{transition_block_forward.2} parent=65 // pred_check_branch
          %729 = sbr.rel (%p727) target = $region74
        $region73: #{transition_block_forward.2} parent=65 // pred_region
          %730 = vst [vmem:[#allocation2] sm:$0x1] 0.0
          %731 = vst [vmem:[#allocation3] sm:$0x1] 0.0
        $region74: #{transition_block_forward.2} parent=65 // pred_fallthru
          _
        %v732 = vld [vmem:[%s707] sm:$0xff]
        %v733 = vld [vmem:[%s707 + $0x8] sm:$0xff]
        %v734 = vld [vmem:[%s707 + $0x10] sm:$0xff]
        %v735 = vld [vmem:[%s707 + $0x18] sm:$0xff]
        %v736 = vld [vmem:[%s707 + $0x20] sm:$0xff]
        %v737 = vld [vmem:[%s707 + $0x28] sm:$0xff]
        %v738 = vld [vmem:[%s707 + $0x30] sm:$0xff]
        %v739 = vld [vmem:[%s707 + $0x38] sm:$0xff]
        %v740 = vld [vmem:[%s707 + $0x40] sm:$0xff]
        %v741 = vld [vmem:[%s707 + $0x48] sm:$0xff]
        %v742 = vld [vmem:[%s707 + $0x50] sm:$0xff]
        %v743 = vld [vmem:[%s707 + $0x58] sm:$0xff]
        %v744 = vld [vmem:[%s707 + $0x60] sm:$0xff]
        %v745 = vld [vmem:[%s707 + $0x68] sm:$0xff]
        %v746 = vld [vmem:[%s707 + $0x70] sm:$0xff]
        %v747 = vld [vmem:[%s707 + $0x78] sm:$0xff]
        %v748 = vld [vmem:[%s707 + $0x80] sm:$0xff]
        %v749 = vld [vmem:[%s707 + $0x88] sm:$0xff]
        %v750 = vld [vmem:[%s707 + $0x90] sm:$0xff]
        %v751 = vld [vmem:[%s707 + $0x98] sm:$0xff]
        %v752 = vld [vmem:[%s707 + $0xa0] sm:$0xff]
        %v753 = vld [vmem:[%s707 + $0xa8] sm:$0xff]
        %v754 = vld [vmem:[%s707 + $0xb0] sm:$0xff]
        %v755 = vld [vmem:[%s707 + $0xb8] sm:$0xff]
        %v756 = vld [vmem:[%s707 + $0xc0] sm:$0xff]
        %v757 = vld [vmem:[%s707 + $0xc8] sm:$0xff]
        %v758 = vld [vmem:[%s707 + $0xd0] sm:$0xff]
        %v759 = vld [vmem:[%s707 + $0xd8] sm:$0xff]
        %v760 = vld [vmem:[%s707 + $0xe0] sm:$0xff]
        %v761 = vld [vmem:[%s707 + $0xe8] sm:$0xff]
        %v762 = vld [vmem:[%s707 + $0xf0] sm:$0xff]
        %v763 = vld [vmem:[%s707 + $0xf8] sm:$0xff]
        %v764 = vld [vmem:[#allocation2] sm:$0x1]
        %v765 = vadd.f32 %v732, %v733
        %v766 = vadd.f32 %v765, %v734
        %v767 = vadd.f32 %v766, %v735
        %v768 = vadd.f32 %v767, %v736
        %v769 = vadd.f32 %v768, %v737
        %v770 = vadd.f32 %v769, %v738
        %v771 = vadd.f32 %v770, %v739
        %v772 = vadd.f32 %v771, %v740
        %v773 = vadd.f32 %v772, %v741
        %v774 = vadd.f32 %v773, %v742
        %v775 = vadd.f32 %v774, %v743
        %v776 = vadd.f32 %v775, %v744
        %v777 = vadd.f32 %v776, %v745
        %v778 = vadd.f32 %v777, %v746
        %v779 = vadd.f32 %v778, %v747
        %v780 = vadd.f32 %v779, %v748
        %v781 = vadd.f32 %v780, %v749
        %v782 = vadd.f32 %v781, %v750
        %v783 = vadd.f32 %v782, %v751
        %v784 = vadd.f32 %v783, %v752
        %v785 = vadd.f32 %v784, %v753
        %v786 = vadd.f32 %v785, %v754
        %v787 = vadd.f32 %v786, %v755
        %v788 = vadd.f32 %v787, %v756
        %v789 = vadd.f32 %v788, %v757
        %v790 = vadd.f32 %v789, %v758
        %v791 = vadd.f32 %v790, %v759
        %v792 = vadd.f32 %v791, %v760
        %v793 = vadd.f32 %v792, %v761
        %v794 = vadd.f32 %v793, %v762
        %v795 = vadd.f32 %v794, %v763
        %v796 = vrot.slane %v795, 4
        %v797 = vadd.f32 %v795, %v796
        %v798 = vrot.slane %v797, 2
        %v799 = vadd.f32 %v797, %v798
        %v800 = vrot.slane %v799, 1
        %v801 = vadd.f32 %v799, %v800
        %v802 = vadd.f32 %v764, %v801
        %803 = vst [vmem:[#allocation2] sm:$0x1] %v802
        %v804 = vld [vmem:[#allocation3] sm:$0x1]
        %v805 = vmul.f32 %v732, %v732
        %v806 = vmul.f32 %v733, %v733
        %v807 = vmul.f32 %v734, %v734
        %v808 = vmul.f32 %v735, %v735
        %v809 = vmul.f32 %v736, %v736
        %v810 = vmul.f32 %v737, %v737
        %v811 = vmul.f32 %v738, %v738
        %v812 = vmul.f32 %v739, %v739
        %v813 = vmul.f32 %v740, %v740
        %v814 = vmul.f32 %v741, %v741
        %v815 = vmul.f32 %v742, %v742
        %v816 = vmul.f32 %v743, %v743
        %v817 = vmul.f32 %v744, %v744
        %v818 = vmul.f32 %v745, %v745
        %v819 = vmul.f32 %v746, %v746
        %v820 = vmul.f32 %v747, %v747
        %v821 = vmul.f32 %v748, %v748
        %v822 = vmul.f32 %v749, %v749
        %v823 = vmul.f32 %v750, %v750
        %v824 = vmul.f32 %v751, %v751
        %v825 = vmul.f32 %v752, %v752
        %v826 = vmul.f32 %v753, %v753
        %v827 = vmul.f32 %v754, %v754
        %v828 = vmul.f32 %v755, %v755
        %v829 = vmul.f32 %v756, %v756
        %v830 = vmul.f32 %v757, %v757
        %v831 = vmul.f32 %v758, %v758
        %v832 = vmul.f32 %v759, %v759
        %v833 = vmul.f32 %v760, %v760
        %v834 = vmul.f32 %v761, %v761
        %v835 = vmul.f32 %v762, %v762
        %v836 = vmul.f32 %v763, %v763
        %v837 = vadd.f32 %v805, %v806
        %v838 = vadd.f32 %v837, %v807
        %v839 = vadd.f32 %v838, %v808
        %v840 = vadd.f32 %v839, %v809
        %v841 = vadd.f32 %v840, %v810
        %v842 = vadd.f32 %v841, %v811
        %v843 = vadd.f32 %v842, %v812
        %v844 = vadd.f32 %v843, %v813
        %v845 = vadd.f32 %v844, %v814
        %v846 = vadd.f32 %v845, %v815
        %v847 = vadd.f32 %v846, %v816
        %v848 = vadd.f32 %v847, %v817
        %v849 = vadd.f32 %v848, %v818
        %v850 = vadd.f32 %v849, %v819
        %v851 = vadd.f32 %v850, %v820
        %v852 = vadd.f32 %v851, %v821
        %v853 = vadd.f32 %v852, %v822
        %v854 = vadd.f32 %v853, %v823
        %v855 = vadd.f32 %v854, %v824
        %v856 = vadd.f32 %v855, %v825
        %v857 = vadd.f32 %v856, %v826
        %v858 = vadd.f32 %v857, %v827
        %v859 = vadd.f32 %v858, %v828
        %v860 = vadd.f32 %v859, %v829
        %v861 = vadd.f32 %v860, %v830
        %v862 = vadd.f32 %v861, %v831
        %v863 = vadd.f32 %v862, %v832
        %v864 = vadd.f32 %v863, %v833
        %v865 = vadd.f32 %v864, %v834
        %v866 = vadd.f32 %v865, %v835
        %v867 = vadd.f32 %v866, %v836
        %v868 = vrot.slane %v867, 4
        %v869 = vadd.f32 %v867, %v868
        %v870 = vrot.slane %v869, 2
        %v871 = vadd.f32 %v869, %v870
        %v872 = vrot.slane %v871, 1
        %v873 = vadd.f32 %v871, %v872
        %v874 = vadd.f32 %v804, %v873
        %875 = vst [vmem:[#allocation3] sm:$0x1] %v874
        %s876 = scalar_lea.vmem %s707, 256 [#allocation4]
        %v877 = vld [vmem:[%s876] sm:$0xff]
        %v878 = vld [vmem:[%s876 + $0x8] sm:$0xff]
        %v879 = vld [vmem:[%s876 + $0x10] sm:$0xff]
        %v880 = vld [vmem:[%s876 + $0x18] sm:$0xff]
        %v881 = vld [vmem:[%s876 + $0x20] sm:$0xff]
        %v882 = vld [vmem:[%s876 + $0x28] sm:$0xff]
        %v883 = vld [vmem:[%s876 + $0x30] sm:$0xff]
        %v884 = vld [vmem:[%s876 + $0x38] sm:$0xff]
        %v885 = vld [vmem:[%s876 + $0x40] sm:$0xff]
        %v886 = vld [vmem:[%s876 + $0x48] sm:$0xff]
        %v887 = vld [vmem:[%s876 + $0x50] sm:$0xff]
        %v888 = vld [vmem:[%s876 + $0x58] sm:$0xff]
        %v889 = vld [vmem:[%s876 + $0x60] sm:$0xff]
        %v890 = vld [vmem:[%s876 + $0x68] sm:$0xff]
        %v891 = vld [vmem:[%s876 + $0x70] sm:$0xff]
        %v892 = vld [vmem:[%s876 + $0x78] sm:$0xff]
        %v893 = vld [vmem:[%s876 + $0x80] sm:$0xff]
        %v894 = vld [vmem:[%s876 + $0x88] sm:$0xff]
        %v895 = vld [vmem:[%s876 + $0x90] sm:$0xff]
        %v896 = vld [vmem:[%s876 + $0x98] sm:$0xff]
        %v897 = vld [vmem:[%s876 + $0xa0] sm:$0xff]
        %v898 = vld [vmem:[%s876 + $0xa8] sm:$0xff]
        %v899 = vld [vmem:[%s876 + $0xb0] sm:$0xff]
        %v900 = vld [vmem:[%s876 + $0xb8] sm:$0xff]
        %v901 = vld [vmem:[%s876 + $0xc0] sm:$0xff]
        %v902 = vld [vmem:[%s876 + $0xc8] sm:$0xff]
        %v903 = vld [vmem:[%s876 + $0xd0] sm:$0xff]
        %v904 = vld [vmem:[%s876 + $0xd8] sm:$0xff]
        %v905 = vld [vmem:[%s876 + $0xe0] sm:$0xff]
        %v906 = vld [vmem:[%s876 + $0xe8] sm:$0xff]
        %v907 = vld [vmem:[%s876 + $0xf0] sm:$0xff]
        %v908 = vld [vmem:[%s876 + $0xf8] sm:$0xff]
        %v909 = vld [vmem:[#allocation2] sm:$0x1]
        %v910 = vadd.f32 %v877, %v878
        %v911 = vadd.f32 %v910, %v879
        %v912 = vadd.f32 %v911, %v880
        %v913 = vadd.f32 %v912, %v881
        %v914 = vadd.f32 %v913, %v882
        %v915 = vadd.f32 %v914, %v883
        %v916 = vadd.f32 %v915, %v884
        %v917 = vadd.f32 %v916, %v885
        %v918 = vadd.f32 %v917, %v886
        %v919 = vadd.f32 %v918, %v887
        %v920 = vadd.f32 %v919, %v888
        %v921 = vadd.f32 %v920, %v889
        %v922 = vadd.f32 %v921, %v890
        %v923 = vadd.f32 %v922, %v891
        %v924 = vadd.f32 %v923, %v892
        %v925 = vadd.f32 %v924, %v893
        %v926 = vadd.f32 %v925, %v894
        %v927 = vadd.f32 %v926, %v895
        %v928 = vadd.f32 %v927, %v896
        %v929 = vadd.f32 %v928, %v897
        %v930 = vadd.f32 %v929, %v898
        %v931 = vadd.f32 %v930, %v899
        %v932 = vadd.f32 %v931, %v900
        %v933 = vadd.f32 %v932, %v901
        %v934 = vadd.f32 %v933, %v902
        %v935 = vadd.f32 %v934, %v903
        %v936 = vadd.f32 %v935, %v904
        %v937 = vadd.f32 %v936, %v905
        %v938 = vadd.f32 %v937, %v906
        %v939 = vadd.f32 %v938, %v907
        %v940 = vadd.f32 %v939, %v908
        %v941 = vrot.slane %v940, 4
        %v942 = vadd.f32 %v940, %v941
        %v943 = vrot.slane %v942, 2
        %v944 = vadd.f32 %v942, %v943
        %v945 = vrot.slane %v944, 1
        %v946 = vadd.f32 %v944, %v945
        %v947 = vadd.f32 %v909, %v946
        %948 = vst [vmem:[#allocation2] sm:$0x1] %v947
        %v949 = vld [vmem:[#allocation3] sm:$0x1]
        %v950 = vmul.f32 %v877, %v877
        %v951 = vmul.f32 %v878, %v878
        %v952 = vmul.f32 %v879, %v879
        %v953 = vmul.f32 %v880, %v880
        %v954 = vmul.f32 %v881, %v881
        %v955 = vmul.f32 %v882, %v882
        %v956 = vmul.f32 %v883, %v883
        %v957 = vmul.f32 %v884, %v884
        %v958 = vmul.f32 %v885, %v885
        %v959 = vmul.f32 %v886, %v886
        %v960 = vmul.f32 %v887, %v887
        %v961 = vmul.f32 %v888, %v888
        %v962 = vmul.f32 %v889, %v889
        %v963 = vmul.f32 %v890, %v890
        %v964 = vmul.f32 %v891, %v891
        %v965 = vmul.f32 %v892, %v892
        %v966 = vmul.f32 %v893, %v893
        %v967 = vmul.f32 %v894, %v894
        %v968 = vmul.f32 %v895, %v895
        %v969 = vmul.f32 %v896, %v896
        %v970 = vmul.f32 %v897, %v897
        %v971 = vmul.f32 %v898, %v898
        %v972 = vmul.f32 %v899, %v899
        %v973 = vmul.f32 %v900, %v900
        %v974 = vmul.f32 %v901, %v901
        %v975 = vmul.f32 %v902, %v902
        %v976 = vmul.f32 %v903, %v903
        %v977 = vmul.f32 %v904, %v904
        %v978 = vmul.f32 %v905, %v905
        %v979 = vmul.f32 %v906, %v906
        %v980 = vmul.f32 %v907, %v907
        %v981 = vmul.f32 %v908, %v908
        %v982 = vadd.f32 %v950, %v951
        %v983 = vadd.f32 %v982, %v952
        %v984 = vadd.f32 %v983, %v953
        %v985 = vadd.f32 %v984, %v954
        %v986 = vadd.f32 %v985, %v955
        %v987 = vadd.f32 %v986, %v956
        %v988 = vadd.f32 %v987, %v957
        %v989 = vadd.f32 %v988, %v958
        %v990 = vadd.f32 %v989, %v959
        %v991 = vadd.f32 %v990, %v960
        %v992 = vadd.f32 %v991, %v961
        %v993 = vadd.f32 %v992, %v962
        %v994 = vadd.f32 %v993, %v963
        %v995 = vadd.f32 %v994, %v964
        %v996 = vadd.f32 %v995, %v965
        %v997 = vadd.f32 %v996, %v966
        %v998 = vadd.f32 %v997, %v967
        %v999 = vadd.f32 %v998, %v968
        %v1000 = vadd.f32 %v999, %v969
        %v1001 = vadd.f32 %v1000, %v970
        %v1002 = vadd.f32 %v1001, %v971
        %v1003 = vadd.f32 %v1002, %v972
        %v1004 = vadd.f32 %v1003, %v973
        %v1005 = vadd.f32 %v1004, %v974
        %v1006 = vadd.f32 %v1005, %v975
        %v1007 = vadd.f32 %v1006, %v976
        %v1008 = vadd.f32 %v1007, %v977
        %v1009 = vadd.f32 %v1008, %v978
        %v1010 = vadd.f32 %v1009, %v979
        %v1011 = vadd.f32 %v1010, %v980
        %v1012 = vadd.f32 %v1011, %v981
        %v1013 = vrot.slane %v1012, 4
        %v1014 = vadd.f32 %v1012, %v1013
        %v1015 = vrot.slane %v1014, 2
        %v1016 = vadd.f32 %v1014, %v1015
        %v1017 = vrot.slane %v1016, 1
        %v1018 = vadd.f32 %v1016, %v1017
        %v1019 = vadd.f32 %v949, %v1018
        %1020 = vst [vmem:[#allocation3] sm:$0x1] %v1019
        %s1021 = scalar_lea.vmem %s707, 512 [#allocation4]
        %v1022 = vld [vmem:[%s1021] sm:$0xff]
        %v1023 = vld [vmem:[%s1021 + $0x8] sm:$0xff]
        %v1024 = vld [vmem:[%s1021 + $0x10] sm:$0xff]
        %v1025 = vld [vmem:[%s1021 + $0x18] sm:$0xff]
        %v1026 = vld [vmem:[%s1021 + $0x20] sm:$0xff]
        %v1027 = vld [vmem:[%s1021 + $0x28] sm:$0xff]
        %v1028 = vld [vmem:[%s1021 + $0x30] sm:$0xff]
        %v1029 = vld [vmem:[%s1021 + $0x38] sm:$0xff]
        %v1030 = vld [vmem:[%s1021 + $0x40] sm:$0xff]
        %v1031 = vld [vmem:[%s1021 + $0x48] sm:$0xff]
        %v1032 = vld [vmem:[%s1021 + $0x50] sm:$0xff]
        %v1033 = vld [vmem:[%s1021 + $0x58] sm:$0xff]
        %v1034 = vld [vmem:[%s1021 + $0x60] sm:$0xff]
        %v1035 = vld [vmem:[%s1021 + $0x68] sm:$0xff]
        %v1036 = vld [vmem:[%s1021 + $0x70] sm:$0xff]
        %v1037 = vld [vmem:[%s1021 + $0x78] sm:$0xff]
        %v1038 = vld [vmem:[%s1021 + $0x80] sm:$0xff]
        %v1039 = vld [vmem:[%s1021 + $0x88] sm:$0xff]
        %v1040 = vld [vmem:[%s1021 + $0x90] sm:$0xff]
        %v1041 = vld [vmem:[%s1021 + $0x98] sm:$0xff]
        %v1042 = vld [vmem:[%s1021 + $0xa0] sm:$0xff]
        %v1043 = vld [vmem:[%s1021 + $0xa8] sm:$0xff]
        %v1044 = vld [vmem:[%s1021 + $0xb0] sm:$0xff]
        %v1045 = vld [vmem:[%s1021 + $0xb8] sm:$0xff]
        %v1046 = vld [vmem:[%s1021 + $0xc0] sm:$0xff]
        %v1047 = vld [vmem:[%s1021 + $0xc8] sm:$0xff]
        %v1048 = vld [vmem:[%s1021 + $0xd0] sm:$0xff]
        %v1049 = vld [vmem:[%s1021 + $0xd8] sm:$0xff]
        %v1050 = vld [vmem:[%s1021 + $0xe0] sm:$0xff]
        %v1051 = vld [vmem:[%s1021 + $0xe8] sm:$0xff]
        %v1052 = vld [vmem:[%s1021 + $0xf0] sm:$0xff]
        %v1053 = vld [vmem:[%s1021 + $0xf8] sm:$0xff]
        %v1054 = vld [vmem:[#allocation2] sm:$0x1]
        %v1055 = vadd.f32 %v1022, %v1023
        %v1056 = vadd.f32 %v1055, %v1024
        %v1057 = vadd.f32 %v1056, %v1025
        %v1058 = vadd.f32 %v1057, %v1026
        %v1059 = vadd.f32 %v1058, %v1027
        %v1060 = vadd.f32 %v1059, %v1028
        %v1061 = vadd.f32 %v1060, %v1029
        %v1062 = vadd.f32 %v1061, %v1030
        %v1063 = vadd.f32 %v1062, %v1031
        %v1064 = vadd.f32 %v1063, %v1032
        %v1065 = vadd.f32 %v1064, %v1033
        %v1066 = vadd.f32 %v1065, %v1034
        %v1067 = vadd.f32 %v1066, %v1035
        %v1068 = vadd.f32 %v1067, %v1036
        %v1069 = vadd.f32 %v1068, %v1037
        %v1070 = vadd.f32 %v1069, %v1038
        %v1071 = vadd.f32 %v1070, %v1039
        %v1072 = vadd.f32 %v1071, %v1040
        %v1073 = vadd.f32 %v1072, %v1041
        %v1074 = vadd.f32 %v1073, %v1042
        %v1075 = vadd.f32 %v1074, %v1043
        %v1076 = vadd.f32 %v1075, %v1044
        %v1077 = vadd.f32 %v1076, %v1045
        %v1078 = vadd.f32 %v1077, %v1046
        %v1079 = vadd.f32 %v1078, %v1047
        %v1080 = vadd.f32 %v1079, %v1048
        %v1081 = vadd.f32 %v1080, %v1049
        %v1082 = vadd.f32 %v1081, %v1050
        %v1083 = vadd.f32 %v1082, %v1051
        %v1084 = vadd.f32 %v1083, %v1052
        %v1085 = vadd.f32 %v1084, %v1053
        %v1086 = vrot.slane %v1085, 4
        %v1087 = vadd.f32 %v1085, %v1086
        %v1088 = vrot.slane %v1087, 2
        %v1089 = vadd.f32 %v1087, %v1088
        %v1090 = vrot.slane %v1089, 1
        %v1091 = vadd.f32 %v1089, %v1090
        %v1092 = vadd.f32 %v1054, %v1091
        %1093 = vst [vmem:[#allocation2] sm:$0x1] %v1092
        %v1094 = vld [vmem:[#allocation3] sm:$0x1]
        %v1095 = vmul.f32 %v1022, %v1022
        %v1096 = vmul.f32 %v1023, %v1023
        %v1097 = vmul.f32 %v1024, %v1024
        %v1098 = vmul.f32 %v1025, %v1025
        %v1099 = vmul.f32 %v1026, %v1026
        %v1100 = vmul.f32 %v1027, %v1027
        %v1101 = vmul.f32 %v1028, %v1028
        %v1102 = vmul.f32 %v1029, %v1029
        %v1103 = vmul.f32 %v1030, %v1030
        %v1104 = vmul.f32 %v1031, %v1031
        %v1105 = vmul.f32 %v1032, %v1032
        %v1106 = vmul.f32 %v1033, %v1033
        %v1107 = vmul.f32 %v1034, %v1034
        %v1108 = vmul.f32 %v1035, %v1035
        %v1109 = vmul.f32 %v1036, %v1036
        %v1110 = vmul.f32 %v1037, %v1037
        %v1111 = vmul.f32 %v1038, %v1038
        %v1112 = vmul.f32 %v1039, %v1039
        %v1113 = vmul.f32 %v1040, %v1040
        %v1114 = vmul.f32 %v1041, %v1041
        %v1115 = vmul.f32 %v1042, %v1042
        %v1116 = vmul.f32 %v1043, %v1043
        %v1117 = vmul.f32 %v1044, %v1044
        %v1118 = vmul.f32 %v1045, %v1045
        %v1119 = vmul.f32 %v1046, %v1046
        %v1120 = vmul.f32 %v1047, %v1047
        %v1121 = vmul.f32 %v1048, %v1048
        %v1122 = vmul.f32 %v1049, %v1049
        %v1123 = vmul.f32 %v1050, %v1050
        %v1124 = vmul.f32 %v1051, %v1051
        %v1125 = vmul.f32 %v1052, %v1052
        %v1126 = vmul.f32 %v1053, %v1053
        %v1127 = vadd.f32 %v1095, %v1096
        %v1128 = vadd.f32 %v1127, %v1097
        %v1129 = vadd.f32 %v1128, %v1098
        %v1130 = vadd.f32 %v1129, %v1099
        %v1131 = vadd.f32 %v1130, %v1100
        %v1132 = vadd.f32 %v1131, %v1101
        %v1133 = vadd.f32 %v1132, %v1102
        %v1134 = vadd.f32 %v1133, %v1103
        %v1135 = vadd.f32 %v1134, %v1104
        %v1136 = vadd.f32 %v1135, %v1105
        %v1137 = vadd.f32 %v1136, %v1106
        %v1138 = vadd.f32 %v1137, %v1107
        %v1139 = vadd.f32 %v1138, %v1108
        %v1140 = vadd.f32 %v1139, %v1109
        %v1141 = vadd.f32 %v1140, %v1110
        %v1142 = vadd.f32 %v1141, %v1111
        %v1143 = vadd.f32 %v1142, %v1112
        %v1144 = vadd.f32 %v1143, %v1113
        %v1145 = vadd.f32 %v1144, %v1114
        %v1146 = vadd.f32 %v1145, %v1115
        %v1147 = vadd.f32 %v1146, %v1116
        %v1148 = vadd.f32 %v1147, %v1117
        %v1149 = vadd.f32 %v1148, %v1118
        %v1150 = vadd.f32 %v1149, %v1119
        %v1151 = vadd.f32 %v1150, %v1120
        %v1152 = vadd.f32 %v1151, %v1121
        %v1153 = vadd.f32 %v1152, %v1122
        %v1154 = vadd.f32 %v1153, %v1123
        %v1155 = vadd.f32 %v1154, %v1124
        %v1156 = vadd.f32 %v1155, %v1125
        %v1157 = vadd.f32 %v1156, %v1126
        %v1158 = vrot.slane %v1157, 4
        %v1159 = vadd.f32 %v1157, %v1158
        %v1160 = vrot.slane %v1159, 2
        %v1161 = vadd.f32 %v1159, %v1160
        %v1162 = vrot.slane %v1161, 1
        %v1163 = vadd.f32 %v1161, %v1162
        %v1164 = vadd.f32 %v1094, %v1163
        %1165 = vst [vmem:[#allocation3] sm:$0x1] %v1164
        %s1166 = scalar_lea.vmem %s707, 768 [#allocation4]
        %v1167 = vld [vmem:[%s1166] sm:$0xff]
        %v1168 = vld [vmem:[%s1166 + $0x8] sm:$0xff]
        %v1169 = vld [vmem:[%s1166 + $0x10] sm:$0xff]
        %v1170 = vld [vmem:[%s1166 + $0x18] sm:$0xff]
        %v1171 = vld [vmem:[%s1166 + $0x20] sm:$0xff]
        %v1172 = vld [vmem:[%s1166 + $0x28] sm:$0xff]
        %v1173 = vld [vmem:[%s1166 + $0x30] sm:$0xff]
        %v1174 = vld [vmem:[%s1166 + $0x38] sm:$0xff]
        %v1175 = vld [vmem:[%s1166 + $0x40] sm:$0xff]
        %v1176 = vld [vmem:[%s1166 + $0x48] sm:$0xff]
        %v1177 = vld [vmem:[%s1166 + $0x50] sm:$0xff]
        %v1178 = vld [vmem:[%s1166 + $0x58] sm:$0xff]
        %v1179 = vld [vmem:[%s1166 + $0x60] sm:$0xff]
        %v1180 = vld [vmem:[%s1166 + $0x68] sm:$0xff]
        %v1181 = vld [vmem:[%s1166 + $0x70] sm:$0xff]
        %v1182 = vld [vmem:[%s1166 + $0x78] sm:$0xff]
        %v1183 = vld [vmem:[%s1166 + $0x80] sm:$0xff]
        %v1184 = vld [vmem:[%s1166 + $0x88] sm:$0xff]
        %v1185 = vld [vmem:[%s1166 + $0x90] sm:$0xff]
        %v1186 = vld [vmem:[%s1166 + $0x98] sm:$0xff]
        %v1187 = vld [vmem:[%s1166 + $0xa0] sm:$0xff]
        %v1188 = vld [vmem:[%s1166 + $0xa8] sm:$0xff]
        %v1189 = vld [vmem:[%s1166 + $0xb0] sm:$0xff]
        %v1190 = vld [vmem:[%s1166 + $0xb8] sm:$0xff]
        %v1191 = vld [vmem:[%s1166 + $0xc0] sm:$0xff]
        %v1192 = vld [vmem:[%s1166 + $0xc8] sm:$0xff]
        %v1193 = vld [vmem:[%s1166 + $0xd0] sm:$0xff]
        %v1194 = vld [vmem:[%s1166 + $0xd8] sm:$0xff]
        %v1195 = vld [vmem:[%s1166 + $0xe0] sm:$0xff]
        %v1196 = vld [vmem:[%s1166 + $0xe8] sm:$0xff]
        %v1197 = vld [vmem:[%s1166 + $0xf0] sm:$0xff]
        %v1198 = vld [vmem:[%s1166 + $0xf8] sm:$0xff]
        %v1199 = vld [vmem:[#allocation2] sm:$0x1]
        %v1200 = vadd.f32 %v1167, %v1168
        %v1201 = vadd.f32 %v1200, %v1169
        %v1202 = vadd.f32 %v1201, %v1170
        %v1203 = vadd.f32 %v1202, %v1171
        %v1204 = vadd.f32 %v1203, %v1172
        %v1205 = vadd.f32 %v1204, %v1173
        %v1206 = vadd.f32 %v1205, %v1174
        %v1207 = vadd.f32 %v1206, %v1175
        %v1208 = vadd.f32 %v1207, %v1176
        %v1209 = vadd.f32 %v1208, %v1177
        %v1210 = vadd.f32 %v1209, %v1178
        %v1211 = vadd.f32 %v1210, %v1179
        %v1212 = vadd.f32 %v1211, %v1180
        %v1213 = vadd.f32 %v1212, %v1181
        %v1214 = vadd.f32 %v1213, %v1182
        %v1215 = vadd.f32 %v1214, %v1183
        %v1216 = vadd.f32 %v1215, %v1184
        %v1217 = vadd.f32 %v1216, %v1185
        %v1218 = vadd.f32 %v1217, %v1186
        %v1219 = vadd.f32 %v1218, %v1187
        %v1220 = vadd.f32 %v1219, %v1188
        %v1221 = vadd.f32 %v1220, %v1189
        %v1222 = vadd.f32 %v1221, %v1190
        %v1223 = vadd.f32 %v1222, %v1191
        %v1224 = vadd.f32 %v1223, %v1192
        %v1225 = vadd.f32 %v1224, %v1193
        %v1226 = vadd.f32 %v1225, %v1194
        %v1227 = vadd.f32 %v1226, %v1195
        %v1228 = vadd.f32 %v1227, %v1196
        %v1229 = vadd.f32 %v1228, %v1197
        %v1230 = vadd.f32 %v1229, %v1198
        %v1231 = vrot.slane %v1230, 4
        %v1232 = vadd.f32 %v1230, %v1231
        %v1233 = vrot.slane %v1232, 2
        %v1234 = vadd.f32 %v1232, %v1233
        %v1235 = vrot.slane %v1234, 1
        %v1236 = vadd.f32 %v1234, %v1235
        %v1237 = vadd.f32 %v1199, %v1236
        %1238 = vst [vmem:[#allocation2] sm:$0x1] %v1237
        %v1239 = vld [vmem:[#allocation3] sm:$0x1]
        %v1240 = vmul.f32 %v1167, %v1167
        %v1241 = vmul.f32 %v1168, %v1168
        %v1242 = vmul.f32 %v1169, %v1169
        %v1243 = vmul.f32 %v1170, %v1170
        %v1244 = vmul.f32 %v1171, %v1171
        %v1245 = vmul.f32 %v1172, %v1172
        %v1246 = vmul.f32 %v1173, %v1173
        %v1247 = vmul.f32 %v1174, %v1174
        %v1248 = vmul.f32 %v1175, %v1175
        %v1249 = vmul.f32 %v1176, %v1176
        %v1250 = vmul.f32 %v1177, %v1177
        %v1251 = vmul.f32 %v1178, %v1178
        %v1252 = vmul.f32 %v1179, %v1179
        %v1253 = vmul.f32 %v1180, %v1180
        %v1254 = vmul.f32 %v1181, %v1181
        %v1255 = vmul.f32 %v1182, %v1182
        %v1256 = vmul.f32 %v1183, %v1183
        %v1257 = vmul.f32 %v1184, %v1184
        %v1258 = vmul.f32 %v1185, %v1185
        %v1259 = vmul.f32 %v1186, %v1186
        %v1260 = vmul.f32 %v1187, %v1187
        %v1261 = vmul.f32 %v1188, %v1188
        %v1262 = vmul.f32 %v1189, %v1189
        %v1263 = vmul.f32 %v1190, %v1190
        %v1264 = vmul.f32 %v1191, %v1191
        %v1265 = vmul.f32 %v1192, %v1192
        %v1266 = vmul.f32 %v1193, %v1193
        %v1267 = vmul.f32 %v1194, %v1194
        %v1268 = vmul.f32 %v1195, %v1195
        %v1269 = vmul.f32 %v1196, %v1196
        %v1270 = vmul.f32 %v1197, %v1197
        %v1271 = vmul.f32 %v1198, %v1198
        %v1272 = vadd.f32 %v1240, %v1241
        %v1273 = vadd.f32 %v1272, %v1242
        %v1274 = vadd.f32 %v1273, %v1243
        %v1275 = vadd.f32 %v1274, %v1244
        %v1276 = vadd.f32 %v1275, %v1245
        %v1277 = vadd.f32 %v1276, %v1246
        %v1278 = vadd.f32 %v1277, %v1247
        %v1279 = vadd.f32 %v1278, %v1248
        %v1280 = vadd.f32 %v1279, %v1249
        %v1281 = vadd.f32 %v1280, %v1250
        %v1282 = vadd.f32 %v1281, %v1251
        %v1283 = vadd.f32 %v1282, %v1252
        %v1284 = vadd.f32 %v1283, %v1253
        %v1285 = vadd.f32 %v1284, %v1254
        %v1286 = vadd.f32 %v1285, %v1255
        %v1287 = vadd.f32 %v1286, %v1256
        %v1288 = vadd.f32 %v1287, %v1257
        %v1289 = vadd.f32 %v1288, %v1258
        %v1290 = vadd.f32 %v1289, %v1259
        %v1291 = vadd.f32 %v1290, %v1260
        %v1292 = vadd.f32 %v1291, %v1261
        %v1293 = vadd.f32 %v1292, %v1262
        %v1294 = vadd.f32 %v1293, %v1263
        %v1295 = vadd.f32 %v1294, %v1264
        %v1296 = vadd.f32 %v1295, %v1265
        %v1297 = vadd.f32 %v1296, %v1266
        %v1298 = vadd.f32 %v1297, %v1267
        %v1299 = vadd.f32 %v1298, %v1268
        %v1300 = vadd.f32 %v1299, %v1269
        %v1301 = vadd.f32 %v1300, %v1270
        %v1302 = vadd.f32 %v1301, %v1271
        %v1303 = vrot.slane %v1302, 4
        %v1304 = vadd.f32 %v1302, %v1303
        %v1305 = vrot.slane %v1304, 2
        %v1306 = vadd.f32 %v1304, %v1305
        %v1307 = vrot.slane %v1306, 1
        %v1308 = vadd.f32 %v1306, %v1307
        %v1309 = vadd.f32 %v1239, %v1308
        %1310 = vst [vmem:[#allocation3] sm:$0x1] %v1309
        %p1311 = scmp.eq.s32.totalorder %s16, 1
        // Predicated region
        $region75: #{transition_block_forward.2} parent=65 // pred_check
          %p1312 = pneg %p1311
        $region76: #{transition_block_forward.2} parent=65 // pred_check_branch
          %1314 = sbr.rel (%p1312) target = $region78
        $region77: #{transition_block_forward.2} parent=65 // pred_region
          %v1315 = vld [vmem:[#allocation2] sm:$0x1]
          %v1316 = vmul.f32 %v1315, 0.00048828125
          %v1317 = vld [vmem:[#allocation3] sm:$0x1]
          %v1318 = vmul.f32 %v1317, 0.00048828125
          %v1319 = vmul.f32 %v1316, %v1316
          %v1320 = vsub.f32 %v1318, %v1319
          %v1321 = vadd.f32 %v1320, 1e-05
          %v1322 = vrsqrt.pop %v1321
          %v1323 = vld [vmem:[%s1] sm:$0x1]
          %v1324 = vmul.f32 %v1323, %v1322
          %1325 = vst [vmem:[%s3] sm:$0x1] %v1324
          %v1326 = vld [vmem:[%s2] sm:$0x1]
          %v1327 = vmul.f32 %v1316, %v1324
          %v1328 = vsub.f32 %v1326, %v1327
          %1329 = vst [vmem:[%s4] sm:$0x1] %v1328
        $region78: #{transition_block_forward.2} parent=65 // pred_fallthru
          _
        // Predicated region
        $region79: #{transition_block_forward.2} parent=65 // pred_check
          %p1330 = pneg %p97
        $region80: #{transition_block_forward.2} parent=65 // pred_check_branch
          %1332 = sbr.rel (%p1330) target = $region82
        $region81: #{transition_block_forward.2} parent=65 // pred_region
          _
        $region82: #{transition_block_forward.2} parent=65 // pred_fallthru
          _
        // Predicated region
        $region83: #{transition_block_forward.2} parent=65 // pred_check
          %p1333 = pneg %p118
        $region84: #{transition_block_forward.2} parent=65 // pred_check_branch
          %1335 = sbr.rel (%p1333) target = $region86
        $region85: #{transition_block_forward.2} parent=65 // pred_region
          _
        $region86: #{transition_block_forward.2} parent=65 // pred_fallthru
          _
        // Predicated region
        $region87: #{transition_block_forward.2} parent=65 // pred_check
          %p1336 = pneg %p97
        $region88: #{transition_block_forward.2} parent=65 // pred_check_branch
          %1338 = sbr.rel (%p1336) target = $region90
        $region89: #{transition_block_forward.2} parent=65 // pred_region
          _
        $region90: #{transition_block_forward.2} parent=65 // pred_fallthru
          _
        // Predicated region
        $region91: #{transition_block_forward.2} parent=65 // pred_check
          %p1339 = pneg %p118
        $region92: #{transition_block_forward.2} parent=65 // pred_check_branch
          %1341 = sbr.rel (%p1339) target = $region94
        $region93: #{transition_block_forward.2} parent=65 // pred_region
          _
        $region94: #{transition_block_forward.2} parent=65 // pred_fallthru
          _
      $region66: #{transition_block_forward.2} parent=5 // pred_fallthru
        _
      %p1342 = scmp.le.s32.totalorder 2, %s11
      // Predicated region
      $region95: #{transition_block_forward.2} parent=5 // pred_check
        %p1343 = pneg %p1342
      $region96: #{transition_block_forward.2} parent=5 // pred_check_branch
        %1345 = sbr.rel (%p1343) target = $region98
      $region97: #{transition_block_forward.2} parent=5 // pred_region
        %s1346 = ssub.s32 %s11, 2
      $region98: #{transition_block_forward.2} parent=5 // pred_fallthru
        _
    $region6: #{transition_block_forward.2} parent=1 // loop_footer
      %s15 = sadd.s32 1, %s11
    $region7: #{transition_block_forward.2} parent=1 // loop_footer_branch
      %10 = sbr.rel target = $region3
    $region8: #{transition_block_forward.2} parent=1 // loop_exit
      _

// kernel: transition_block_forward.3
$region0: #{transition_block_forward.3}
  #allocation0 [shape = 'u32[]', space=smem, size = 0x4, offset = 0x4, fixed_abs, tag = 'smem constant byte address 0x4 - core index']
  #allocation1 [shape = 'u32[144,128]{1,0:T(1,128)}', space=vmem, size = 0x12000, scoped, tag = 'internal scratch']
  %s0 = inlined_call_operand.vmem [shape: f32[4,512,128], index: 0, kind: input, shape index: {}]
  %s1 = inlined_call_operand.vmem [shape: f32[1,128], index: 1, kind: input, shape index: {}]
  %s2 = inlined_call_operand.vmem [shape: f32[1,128], index: 2, kind: input, shape index: {}]
  %s3 = inlined_call_operand.vmem [shape: bf16[128,64], index: 3, kind: input, shape index: {}]
  %s4 = inlined_call_operand.hbm [shape: f32[512,64], index: 4, kind: output, shape index: {}]
  %s5 = sld [smem:[#allocation0]]
  $region87: #{transition_block_forward.3} parent=0
    _
  %s7 = ssub.s32 1, %s5
  %s8 = scalar_select 0, %s7, %s5
  $region1: #{transition_block_forward.3} parent=0
    #allocation2 [shape = 'u8[1048576]{0}', space=vmem, size = 0x100000, scoped, tag = 'input window, operand 0']
    #allocation3 [shape = 'u8[262144]{0}', space=vmem, size = 0x40000, scoped, tag = 'output window, operand 0']
    #allocation4 [shape = 's32[2]{0}', space=sflag, size = 0x8, scoped, tag = 'scoped memory for transition_block_forward.3']
    %9 = vsyncpa [#allocation4], 0
    %s10 = scalar_lea.sflag [#allocation4], 1
    %11 = vsyncpa %s10, 0
    loop: start=0, step=1, limit=4
    $region2: #{transition_block_forward.3} parent=1 // loop_pre_header
      _
    $region3: #{transition_block_forward.3} parent=1 // loop_header
      %s13 = sphi 0, %s17
      %p14 = scmp.ge.s32.totalorder %s13, 4
      %s23 = sphi 0, %s25
      %s26 = sphi 0, %s23
      %s27 = sphi 0, %s26
      %s43 = sphi 0, %s27
      %s47 = sphi 0, %s47
      %s49 = sphi 0, %s47
      %s50 = sphi 0, %s49
      %s64 = sphi 0, %s50
      %s68 = sphi 0, %s68
      %s70 = sphi 0, %s68
      %s71 = sphi 0, %s70
      %s85 = sphi 0, %s71
      %s89 = sphi 0, %s89
      %s91 = sphi 0, %s89
      %s92 = sphi 0, %s91
      %s106 = sphi 0, %s92
      %s112 = sphi 0, %s114
      %s115 = sphi 0, %s112
      %s116 = sphi 0, %s115
      %s132 = sphi 0, %s116
    $region4: #{transition_block_forward.3} parent=1 // loop_header_branch
      %16 = sbr.rel (%p14) target = $region8
    $region5: #{transition_block_forward.3} parent=1 // loop_body
      %s18 = ssub.s32 %s13, 1
      %s19 = ssub.s32 %s13, 2
      %s20 = sadd.s32 %s13, 1
      %s21 = ssub.s32 %s13, %s20
      %p22 = scmp.eq.s32.totalorder %s21, 0
      %s24 = sadd.s32 %s23, 1
      %s25 = scalar_select %p22, %s23, %s24
      %p28 = pneg %p22
      %p29 = scmp.eq.s32.totalorder %s13, 1
      %p30 = por %p28, %p29
      %p31 = scmp.ne.s32.totalorder %s23, %s26
      %p32 = scmp.eq.s32.totalorder %s13, 0
      %p33 = por %p31, %p32
      %p34 = scmp.ne.s32.totalorder %s23, %s26
      %p35 = scmp.eq.s32.totalorder %s18, 1
      %p36 = por %p34, %p35
      %p37 = scmp.ne.s32.totalorder %s26, %s27
      %p38 = scmp.eq.s32.totalorder %s18, 0
      %p39 = por %p37, %p38
      %p40 = scmp.ne.s32.totalorder %s26, %s27
      %p41 = scmp.eq.s32.totalorder %s19, 1
      %p42 = por %p40, %p41
      %p44 = scmp.ne.s32.totalorder %s27, %s43
      %p45 = scmp.eq.s32.totalorder %s19, 0
      %p46 = por %p44, %p45
      %s48 = sadd.s32 %s47, 1
      %p51 = scmp.eq.s32.totalorder %s13, 1
      %p52 = scmp.ne.s32.totalorder %s47, %s49
      %p53 = scmp.eq.s32.totalorder %s13, 0
      %p54 = por %p52, %p53
      %p55 = scmp.ne.s32.totalorder %s47, %s49
      %p56 = scmp.eq.s32.totalorder %s18, 1
      %p57 = por %p55, %p56
      %p58 = scmp.ne.s32.totalorder %s49, %s50
      %p59 = scmp.eq.s32.totalorder %s18, 0
      %p60 = por %p58, %p59
      %p61 = scmp.ne.s32.totalorder %s49, %s50
      %p62 = scmp.eq.s32.totalorder %s19, 1
      %p63 = por %p61, %p62
      %p65 = scmp.ne.s32.totalorder %s50, %s64
      %p66 = scmp.eq.s32.totalorder %s19, 0
      %p67 = por %p65, %p66
      %s69 = sadd.s32 %s68, 1
      %p72 = scmp.eq.s32.totalorder %s13, 1
      %p73 = scmp.ne.s32.totalorder %s68, %s70
      %p74 = scmp.eq.s32.totalorder %s13, 0
      %p75 = por %p73, %p74
      %p76 = scmp.ne.s32.totalorder %s68, %s70
      %p77 = scmp.eq.s32.totalorder %s18, 1
      %p78 = por %p76, %p77
      %p79 = scmp.ne.s32.totalorder %s70, %s71
      %p80 = scmp.eq.s32.totalorder %s18, 0
      %p81 = por %p79, %p80
      %p82 = scmp.ne.s32.totalorder %s70, %s71
      %p83 = scmp.eq.s32.totalorder %s19, 1
      %p84 = por %p82, %p83
      %p86 = scmp.ne.s32.totalorder %s71, %s85
      %p87 = scmp.eq.s32.totalorder %s19, 0
      %p88 = por %p86, %p87
      %s90 = sadd.s32 %s89, 1
      %p93 = scmp.eq.s32.totalorder %s13, 1
      %p94 = scmp.ne.s32.totalorder %s89, %s91
      %p95 = scmp.eq.s32.totalorder %s13, 0
      %p96 = por %p94, %p95
      %p97 = scmp.ne.s32.totalorder %s89, %s91
      %p98 = scmp.eq.s32.totalorder %s18, 1
      %p99 = por %p97, %p98
      %p100 = scmp.ne.s32.totalorder %s91, %s92
      %p101 = scmp.eq.s32.totalorder %s18, 0
      %p102 = por %p100, %p101
      %p103 = scmp.ne.s32.totalorder %s91, %s92
      %p104 = scmp.eq.s32.totalorder %s19, 1
      %p105 = por %p103, %p104
      %p107 = scmp.ne.s32.totalorder %s92, %s106
      %p108 = scmp.eq.s32.totalorder %s19, 0
      %p109 = por %p107, %p108
      %s110 = ssub.s32 %s13, %s20
      %p111 = scmp.eq.s32.totalorder %s110, 0
      %s113 = sadd.s32 %s112, 1
      %s114 = scalar_select %p111, %s112, %s113
      %p117 = pneg %p111
      %p118 = scmp.eq.s32.totalorder %s13, 1
      %p119 = por %p117, %p118
      %p120 = scmp.ne.s32.totalorder %s112, %s115
      %p121 = scmp.eq.s32.totalorder %s13, 0
      %p122 = por %p120, %p121
      %p123 = scmp.ne.s32.totalorder %s112, %s115
      %p124 = scmp.eq.s32.totalorder %s18, 1
      %p125 = por %p123, %p124
      %p126 = scmp.ne.s32.totalorder %s115, %s116
      %p127 = scmp.eq.s32.totalorder %s18, 0
      %p128 = por %p126, %p127
      %p129 = scmp.ne.s32.totalorder %s115, %s116
      %p130 = scmp.eq.s32.totalorder %s19, 1
      %p131 = por %p129, %p130
      %p133 = scmp.ne.s32.totalorder %s116, %s132
      %p134 = scmp.eq.s32.totalorder %s19, 0
      %p135 = por %p133, %p134
      %p136 = scmp.le.s32.totalorder 1, %s13
      %p137 = scmp.lt.s32.totalorder %s13, 3
      %p138 = pnand %p136, %p137
      %p139 = pneg %p138
      // Predicated region
      $region9: #{transition_block_forward.3} parent=5 // pred_check
        _
      $region10: #{transition_block_forward.3} parent=5 // pred_check_branch
        %141 = sbr.rel (%p138) target = $region12
      $region11: #{transition_block_forward.3} parent=5 // pred_region
        %s142 = ssub.s32 %s13, 1
        // Predicated region
        $region13: #{transition_block_forward.3} parent=11 // pred_check
          %p143 = pneg %p60
        $region14: #{transition_block_forward.3} parent=11 // pred_check_branch
          %145 = sbr.rel (%p143) target = $region16
        $region15: #{transition_block_forward.3} parent=11 // pred_region
          _
        $region16: #{transition_block_forward.3} parent=11 // pred_fallthru
          _
        // Predicated region
        $region17: #{transition_block_forward.3} parent=11 // pred_check
          %p146 = pneg %p81
        $region18: #{transition_block_forward.3} parent=11 // pred_check_branch
          %148 = sbr.rel (%p146) target = $region20
        $region19: #{transition_block_forward.3} parent=11 // pred_region
          _
        $region20: #{transition_block_forward.3} parent=11 // pred_fallthru
          _
        // Predicated region
        $region21: #{transition_block_forward.3} parent=11 // pred_check
          %p149 = pneg %p102
        $region22: #{transition_block_forward.3} parent=11 // pred_check_branch
          %151 = sbr.rel (%p149) target = $region24
        $region23: #{transition_block_forward.3} parent=11 // pred_region
          _
        $region24: #{transition_block_forward.3} parent=11 // pred_fallthru
          _
      $region12: #{transition_block_forward.3} parent=5 // pred_fallthru
        _
      %p152 = scmp.lt.s32.totalorder %s13, 2
      // Predicated region
      $region25: #{transition_block_forward.3} parent=5 // pred_check
        %p153 = pneg %p152
      $region26: #{transition_block_forward.3} parent=5 // pred_check_branch
        %155 = sbr.rel (%p153) target = $region28
      $region27: #{transition_block_forward.3} parent=5 // pred_region
        // Predicated region
        $region29: #{transition_block_forward.3} parent=27 // pred_check
          %p156 = pneg %p33
        $region30: #{transition_block_forward.3} parent=27 // pred_check_branch
          %158 = sbr.rel (%p156) target = $region32
        $region31: #{transition_block_forward.3} parent=27 // pred_region
          %s159 = sand.u32 %s23, 1
          %s160 = sand.u32 %s23, 1
          %s161 = smul.addr %s160, 1024
          %s162 = scalar_lea.vmem [#allocation2], %s161
          %s163 = smul.u32 32, %s13
          %s164 = smul.addr %s163, 8
          %s165 = scalar_lea.vmem %s0, %s164
          // Predicated region
          $region33: #{transition_block_forward.3} parent=31 // pred_check
            _
          $region34: #{transition_block_forward.3} parent=31 // pred_check_branch
            %167 = sbr.rel (0) target = $region36
          $region35: #{transition_block_forward.3} parent=31 // pred_region
            // Predicated region
            $region37: #{transition_block_forward.3} parent=35 // pred_check
              _
            $region38: #{transition_block_forward.3} parent=35 // pred_check_branch
              %169 = sbr.rel (0) target = $region40
            $region39: #{transition_block_forward.3} parent=35 // pred_region
              // Predicated region
              $region52: #{transition_block_forward.3} parent=39 // pred_check
                _
              $region53: #{transition_block_forward.3} parent=39 // pred_check_branch
                %439 = sbr.rel (0) target = $region55
              $region54: #{transition_block_forward.3} parent=39 // pred_region
                loop: start=0, step=1, limit=1
                $region56: #{transition_block_forward.3} parent=54 // loop_pre_header
                  _
                $region57: #{transition_block_forward.3} parent=54 // loop_header
                  %s441 = sphi 0, %s445
                  %p442 = scmp.ge.s32.totalorder %s441, 1
                  %s446 = sphi %s165, %s165
                  %s447 = sphi %s162, %s162
                $region58: #{transition_block_forward.3} parent=54 // loop_header_branch
                  %444 = sbr.rel (%p442) target = $region62
                $region59: #{transition_block_forward.3} parent=54 // loop_body
                  %v448 = vld [vmem:[%s446] sm:$0xff]
                  %449 = vst [vmem:[%s447] sm:$0xff] %v448
                  %v450 = vld [vmem:[%s446 + $0x8] sm:$0xff]
                  %451 = vst [vmem:[%s447 + $0x8] sm:$0xff] %v450
                  %v452 = vld [vmem:[%s446 + $0x10] sm:$0xff]
                  %453 = vst [vmem:[%s447 + $0x10] sm:$0xff] %v452
                  %v454 = vld [vmem:[%s446 + $0x18] sm:$0xff]
                  %455 = vst [vmem:[%s447 + $0x18] sm:$0xff] %v454
                  %v456 = vld [vmem:[%s446 + $0x20] sm:$0xff]
                  %457 = vst [vmem:[%s447 + $0x20] sm:$0xff] %v456
                  %v458 = vld [vmem:[%s446 + $0x28] sm:$0xff]
                  %459 = vst [vmem:[%s447 + $0x28] sm:$0xff] %v458
                  %v460 = vld [vmem:[%s446 + $0x30] sm:$0xff]
                  %461 = vst [vmem:[%s447 + $0x30] sm:$0xff] %v460
                  %v462 = vld [vmem:[%s446 + $0x38] sm:$0xff]
                  %463 = vst [vmem:[%s447 + $0x38] sm:$0xff] %v462
                  %v464 = vld [vmem:[%s446 + $0x40] sm:$0xff]
                  %465 = vst [vmem:[%s447 + $0x40] sm:$0xff] %v464
                  %v466 = vld [vmem:[%s446 + $0x48] sm:$0xff]
                  %467 = vst [vmem:[%s447 + $0x48] sm:$0xff] %v466
                  %v468 = vld [vmem:[%s446 + $0x50] sm:$0xff]
                  %469 = vst [vmem:[%s447 + $0x50] sm:$0xff] %v468
                  %v470 = vld [vmem:[%s446 + $0x58] sm:$0xff]
                  %471 = vst [vmem:[%s447 + $0x58] sm:$0xff] %v470
                  %v472 = vld [vmem:[%s446 + $0x60] sm:$0xff]
                  %473 = vst [vmem:[%s447 + $0x60] sm:$0xff] %v472
                  %v474 = vld [vmem:[%s446 + $0x68] sm:$0xff]
                  %475 = vst [vmem:[%s447 + $0x68] sm:$0xff] %v474
                  %v476 = vld [vmem:[%s446 + $0x70] sm:$0xff]
                  %477 = vst [vmem:[%s447 + $0x70] sm:$0xff] %v476
                  %v478 = vld [vmem:[%s446 + $0x78] sm:$0xff]
                  %479 = vst [vmem:[%s447 + $0x78] sm:$0xff] %v478
                  %v480 = vld [vmem:[%s446 + $0x80] sm:$0xff]
                  %481 = vst [vmem:[%s447 + $0x80] sm:$0xff] %v480
                  %v482 = vld [vmem:[%s446 + $0x88] sm:$0xff]
                  %483 = vst [vmem:[%s447 + $0x88] sm:$0xff] %v482
                  %v484 = vld [vmem:[%s446 + $0x90] sm:$0xff]
                  %485 = vst [vmem:[%s447 + $0x90] sm:$0xff] %v484
                  %v486 = vld [vmem:[%s446 + $0x98] sm:$0xff]
                  %487 = vst [vmem:[%s447 + $0x98] sm:$0xff] %v486
                  %v488 = vld [vmem:[%s446 + $0xa0] sm:$0xff]
                  %489 = vst [vmem:[%s447 + $0xa0] sm:$0xff] %v488
                  %v490 = vld [vmem:[%s446 + $0xa8] sm:$0xff]
                  %491 = vst [vmem:[%s447 + $0xa8] sm:$0xff] %v490
                  %v492 = vld [vmem:[%s446 + $0xb0] sm:$0xff]
                  %493 = vst [vmem:[%s447 + $0xb0] sm:$0xff] %v492
                  %v494 = vld [vmem:[%s446 + $0xb8] sm:$0xff]
                  %495 = vst [vmem:[%s447 + $0xb8] sm:$0xff] %v494
                  %v496 = vld [vmem:[%s446 + $0xc0] sm:$0xff]
                  %497 = vst [vmem:[%s447 + $0xc0] sm:$0xff] %v496
                  %v498 = vld [vmem:[%s446 + $0xc8] sm:$0xff]
                  %499 = vst [vmem:[%s447 + $0xc8] sm:$0xff] %v498
                  %v500 = vld [vmem:[%s446 + $0xd0] sm:$0xff]
                  %501 = vst [vmem:[%s447 + $0xd0] sm:$0xff] %v500
                  %v502 = vld [vmem:[%s446 + $0xd8] sm:$0xff]
                  %503 = vst [vmem:[%s447 + $0xd8] sm:$0xff] %v502
                  %v504 = vld [vmem:[%s446 + $0xe0] sm:$0xff]
                  %505 = vst [vmem:[%s447 + $0xe0] sm:$0xff] %v504
                  %v506 = vld [vmem:[%s446 + $0xe8] sm:$0xff]
                  %507 = vst [vmem:[%s447 + $0xe8] sm:$0xff] %v506
                  %v508 = vld [vmem:[%s446 + $0xf0] sm:$0xff]
                  %509 = vst [vmem:[%s447 + $0xf0] sm:$0xff] %v508
                  %v510 = vld [vmem:[%s446 + $0xf8] sm:$0xff]
                  %511 = vst [vmem:[%s447 + $0xf8] sm:$0xff] %v510
                  %v512 = vld [vmem:[%s446 + $0x200] sm:$0xff]
                  %513 = vst [vmem:[%s447 + $0x100] sm:$0xff] %v512
                  %v514 = vld [vmem:[%s446 + $0x208] sm:$0xff]
                  %515 = vst [vmem:[%s447 + $0x108] sm:$0xff] %v514
                  %v516 = vld [vmem:[%s446 + $0x210] sm:$0xff]
                  %517 = vst [vmem:[%s447 + $0x110] sm:$0xff] %v516
                  %v518 = vld [vmem:[%s446 + $0x218] sm:$0xff]
                  %519 = vst [vmem:[%s447 + $0x118] sm:$0xff] %v518
                  %v520 = vld [vmem:[%s446 + $0x220] sm:$0xff]
                  %521 = vst [vmem:[%s447 + $0x120] sm:$0xff] %v520
                  %v522 = vld [vmem:[%s446 + $0x228] sm:$0xff]
                  %523 = vst [vmem:[%s447 + $0x128] sm:$0xff] %v522
                  %v524 = vld [vmem:[%s446 + $0x230] sm:$0xff]
                  %525 = vst [vmem:[%s447 + $0x130] sm:$0xff] %v524
                  %v526 = vld [vmem:[%s446 + $0x238] sm:$0xff]
                  %527 = vst [vmem:[%s447 + $0x138] sm:$0xff] %v526
                  %v528 = vld [vmem:[%s446 + $0x240] sm:$0xff]
                  %529 = vst [vmem:[%s447 + $0x140] sm:$0xff] %v528
                  %v530 = vld [vmem:[%s446 + $0x248] sm:$0xff]
                  %531 = vst [vmem:[%s447 + $0x148] sm:$0xff] %v530
                  %v532 = vld [vmem:[%s446 + $0x250] sm:$0xff]
                  %533 = vst [vmem:[%s447 + $0x150] sm:$0xff] %v532
                  %v534 = vld [vmem:[%s446 + $0x258] sm:$0xff]
                  %535 = vst [vmem:[%s447 + $0x158] sm:$0xff] %v534
                  %v536 = vld [vmem:[%s446 + $0x260] sm:$0xff]
                  %537 = vst [vmem:[%s447 + $0x160] sm:$0xff] %v536
                  %v538 = vld [vmem:[%s446 + $0x268] sm:$0xff]
                  %539 = vst [vmem:[%s447 + $0x168] sm:$0xff] %v538
                  %v540 = vld [vmem:[%s446 + $0x270] sm:$0xff]
                  %541 = vst [vmem:[%s447 + $0x170] sm:$0xff] %v540
                  %v542 = vld [vmem:[%s446 + $0x278] sm:$0xff]
                  %543 = vst [vmem:[%s447 + $0x178] sm:$0xff] %v542
                  %v544 = vld [vmem:[%s446 + $0x280] sm:$0xff]
                  %545 = vst [vmem:[%s447 + $0x180] sm:$0xff] %v544
                  %v546 = vld [vmem:[%s446 + $0x288] sm:$0xff]
                  %547 = vst [vmem:[%s447 + $0x188] sm:$0xff] %v546
                  %v548 = vld [vmem:[%s446 + $0x290] sm:$0xff]
                  %549 = vst [vmem:[%s447 + $0x190] sm:$0xff] %v548
                  %v550 = vld [vmem:[%s446 + $0x298] sm:$0xff]
                  %551 = vst [vmem:[%s447 + $0x198] sm:$0xff] %v550
                  %v552 = vld [vmem:[%s446 + $0x2a0] sm:$0xff]
                  %553 = vst [vmem:[%s447 + $0x1a0] sm:$0xff] %v552
                  %v554 = vld [vmem:[%s446 + $0x2a8] sm:$0xff]
                  %555 = vst [vmem:[%s447 + $0x1a8] sm:$0xff] %v554
                  %v556 = vld [vmem:[%s446 + $0x2b0] sm:$0xff]
                  %557 = vst [vmem:[%s447 + $0x1b0] sm:$0xff] %v556
                  %v558 = vld [vmem:[%s446 + $0x2b8] sm:$0xff]
                  %559 = vst [vmem:[%s447 + $0x1b8] sm:$0xff] %v558
                  %v560 = vld [vmem:[%s446 + $0x2c0] sm:$0xff]
                  %561 = vst [vmem:[%s447 + $0x1c0] sm:$0xff] %v560
                  %v562 = vld [vmem:[%s446 + $0x2c8] sm:$0xff]
                  %563 = vst [vmem:[%s447 + $0x1c8] sm:$0xff] %v562
                  %v564 = vld [vmem:[%s446 + $0x2d0] sm:$0xff]
                  %565 = vst [vmem:[%s447 + $0x1d0] sm:$0xff] %v564
                  %v566 = vld [vmem:[%s446 + $0x2d8] sm:$0xff]
                  %567 = vst [vmem:[%s447 + $0x1d8] sm:$0xff] %v566
                  %v568 = vld [vmem:[%s446 + $0x2e0] sm:$0xff]
                  %569 = vst [vmem:[%s447 + $0x1e0] sm:$0xff] %v568
                  %v570 = vld [vmem:[%s446 + $0x2e8] sm:$0xff]
                  %571 = vst [vmem:[%s447 + $0x1e8] sm:$0xff] %v570
                  %v572 = vld [vmem:[%s446 + $0x2f0] sm:$0xff]
                  %573 = vst [vmem:[%s447 + $0x1f0] sm:$0xff] %v572
                  %v574 = vld [vmem:[%s446 + $0x2f8] sm:$0xff]
                  %575 = vst [vmem:[%s447 + $0x1f8] sm:$0xff] %v574
                  %v576 = vld [vmem:[%s446 + $0x400] sm:$0xff]
                  %577 = vst [vmem:[%s447 + $0x200] sm:$0xff] %v576
                  %v578 = vld [vmem:[%s446 + $0x408] sm:$0xff]
                  %579 = vst [vmem:[%s447 + $0x208] sm:$0xff] %v578
                  %v580 = vld [vmem:[%s446 + $0x410] sm:$0xff]
                  %581 = vst [vmem:[%s447 + $0x210] sm:$0xff] %v580
                  %v582 = vld [vmem:[%s446 + $0x418] sm:$0xff]
                  %583 = vst [vmem:[%s447 + $0x218] sm:$0xff] %v582
                  %v584 = vld [vmem:[%s446 + $0x420] sm:$0xff]
                  %585 = vst [vmem:[%s447 + $0x220] sm:$0xff] %v584
                  %v586 = vld [vmem:[%s446 + $0x428] sm:$0xff]
                  %587 = vst [vmem:[%s447 + $0x228] sm:$0xff] %v586
                  %v588 = vld [vmem:[%s446 + $0x430] sm:$0xff]
                  %589 = vst [vmem:[%s447 + $0x230] sm:$0xff] %v588
                  %v590 = vld [vmem:[%s446 + $0x438] sm:$0xff]
                  %591 = vst [vmem:[%s447 + $0x238] sm:$0xff] %v590
                  %v592 = vld [vmem:[%s446 + $0x440] sm:$0xff]
                  %593 = vst [vmem:[%s447 + $0x240] sm:$0xff] %v592
                  %v594 = vld [vmem:[%s446 + $0x448] sm:$0xff]
                  %595 = vst [vmem:[%s447 + $0x248] sm:$0xff] %v594
                  %v596 = vld [vmem:[%s446 + $0x450] sm:$0xff]
                  %597 = vst [vmem:[%s447 + $0x250] sm:$0xff] %v596
                  %v598 = vld [vmem:[%s446 + $0x458] sm:$0xff]
                  %599 = vst [vmem:[%s447 + $0x258] sm:$0xff] %v598
                  %v600 = vld [vmem:[%s446 + $0x460] sm:$0xff]
                  %601 = vst [vmem:[%s447 + $0x260] sm:$0xff] %v600
                  %v602 = vld [vmem:[%s446 + $0x468] sm:$0xff]
                  %603 = vst [vmem:[%s447 + $0x268] sm:$0xff] %v602
                  %v604 = vld [vmem:[%s446 + $0x470] sm:$0xff]
                  %605 = vst [vmem:[%s447 + $0x270] sm:$0xff] %v604
                  %v606 = vld [vmem:[%s446 + $0x478] sm:$0xff]
                  %607 = vst [vmem:[%s447 + $0x278] sm:$0xff] %v606
                  %v608 = vld [vmem:[%s446 + $0x480] sm:$0xff]
                  %609 = vst [vmem:[%s447 + $0x280] sm:$0xff] %v608
                  %v610 = vld [vmem:[%s446 + $0x488] sm:$0xff]
                  %611 = vst [vmem:[%s447 + $0x288] sm:$0xff] %v610
                  %v612 = vld [vmem:[%s446 + $0x490] sm:$0xff]
                  %613 = vst [vmem:[%s447 + $0x290] sm:$0xff] %v612
                  %v614 = vld [vmem:[%s446 + $0x498] sm:$0xff]
                  %615 = vst [vmem:[%s447 + $0x298] sm:$0xff] %v614
                  %v616 = vld [vmem:[%s446 + $0x4a0] sm:$0xff]
                  %617 = vst [vmem:[%s447 + $0x2a0] sm:$0xff] %v616
                  %v618 = vld [vmem:[%s446 + $0x4a8] sm:$0xff]
                  %619 = vst [vmem:[%s447 + $0x2a8] sm:$0xff] %v618
                  %v620 = vld [vmem:[%s446 + $0x4b0] sm:$0xff]
                  %621 = vst [vmem:[%s447 + $0x2b0] sm:$0xff] %v620
                  %v622 = vld [vmem:[%s446 + $0x4b8] sm:$0xff]
                  %623 = vst [vmem:[%s447 + $0x2b8] sm:$0xff] %v622
                  %v624 = vld [vmem:[%s446 + $0x4c0] sm:$0xff]
                  %625 = vst [vmem:[%s447 + $0x2c0] sm:$0xff] %v624
                  %v626 = vld [vmem:[%s446 + $0x4c8] sm:$0xff]
                  %627 = vst [vmem:[%s447 + $0x2c8] sm:$0xff] %v626
                  %v628 = vld [vmem:[%s446 + $0x4d0] sm:$0xff]
                  %629 = vst [vmem:[%s447 + $0x2d0] sm:$0xff] %v628
                  %v630 = vld [vmem:[%s446 + $0x4d8] sm:$0xff]
                  %631 = vst [vmem:[%s447 + $0x2d8] sm:$0xff] %v630
                  %v632 = vld [vmem:[%s446 + $0x4e0] sm:$0xff]
                  %633 = vst [vmem:[%s447 + $0x2e0] sm:$0xff] %v632
                  %v634 = vld [vmem:[%s446 + $0x4e8] sm:$0xff]
                  %635 = vst [vmem:[%s447 + $0x2e8] sm:$0xff] %v634
                  %v636 = vld [vmem:[%s446 + $0x4f0] sm:$0xff]
                  %637 = vst [vmem:[%s447 + $0x2f0] sm:$0xff] %v636
                  %v638 = vld [vmem:[%s446 + $0x4f8] sm:$0xff]
                  %639 = vst [vmem:[%s447 + $0x2f8] sm:$0xff] %v638
                  %v640 = vld [vmem:[%s446 + $0x600] sm:$0xff]
                  %641 = vst [vmem:[%s447 + $0x300] sm:$0xff] %v640
                  %v642 = vld [vmem:[%s446 + $0x608] sm:$0xff]
                  %643 = vst [vmem:[%s447 + $0x308] sm:$0xff] %v642
                  %v644 = vld [vmem:[%s446 + $0x610] sm:$0xff]
                  %645 = vst [vmem:[%s447 + $0x310] sm:$0xff] %v644
                  %v646 = vld [vmem:[%s446 + $0x618] sm:$0xff]
                  %647 = vst [vmem:[%s447 + $0x318] sm:$0xff] %v646
                  %v648 = vld [vmem:[%s446 + $0x620] sm:$0xff]
                  %649 = vst [vmem:[%s447 + $0x320] sm:$0xff] %v648
                  %v650 = vld [vmem:[%s446 + $0x628] sm:$0xff]
                  %651 = vst [vmem:[%s447 + $0x328] sm:$0xff] %v650
                  %v652 = vld [vmem:[%s446 + $0x630] sm:$0xff]
                  %653 = vst [vmem:[%s447 + $0x330] sm:$0xff] %v652
                  %v654 = vld [vmem:[%s446 + $0x638] sm:$0xff]
                  %655 = vst [vmem:[%s447 + $0x338] sm:$0xff] %v654
                  %v656 = vld [vmem:[%s446 + $0x640] sm:$0xff]
                  %657 = vst [vmem:[%s447 + $0x340] sm:$0xff] %v656
                  %v658 = vld [vmem:[%s446 + $0x648] sm:$0xff]
                  %659 = vst [vmem:[%s447 + $0x348] sm:$0xff] %v658
                  %v660 = vld [vmem:[%s446 + $0x650] sm:$0xff]
                  %661 = vst [vmem:[%s447 + $0x350] sm:$0xff] %v660
                  %v662 = vld [vmem:[%s446 + $0x658] sm:$0xff]
                  %663 = vst [vmem:[%s447 + $0x358] sm:$0xff] %v662
                  %v664 = vld [vmem:[%s446 + $0x660] sm:$0xff]
                  %665 = vst [vmem:[%s447 + $0x360] sm:$0xff] %v664
                  %v666 = vld [vmem:[%s446 + $0x668] sm:$0xff]
                  %667 = vst [vmem:[%s447 + $0x368] sm:$0xff] %v666
                  %v668 = vld [vmem:[%s446 + $0x670] sm:$0xff]
                  %669 = vst [vmem:[%s447 + $0x370] sm:$0xff] %v668
                  %v670 = vld [vmem:[%s446 + $0x678] sm:$0xff]
                  %671 = vst [vmem:[%s447 + $0x378] sm:$0xff] %v670
                  %v672 = vld [vmem:[%s446 + $0x680] sm:$0xff]
                  %673 = vst [vmem:[%s447 + $0x380] sm:$0xff] %v672
                  %v674 = vld [vmem:[%s446 + $0x688] sm:$0xff]
                  %675 = vst [vmem:[%s447 + $0x388] sm:$0xff] %v674
                  %v676 = vld [vmem:[%s446 + $0x690] sm:$0xff]
                  %677 = vst [vmem:[%s447 + $0x390] sm:$0xff] %v676
                  %v678 = vld [vmem:[%s446 + $0x698] sm:$0xff]
                  %679 = vst [vmem:[%s447 + $0x398] sm:$0xff] %v678
                  %v680 = vld [vmem:[%s446 + $0x6a0] sm:$0xff]
                  %681 = vst [vmem:[%s447 + $0x3a0] sm:$0xff] %v680
                  %v682 = vld [vmem:[%s446 + $0x6a8] sm:$0xff]
                  %683 = vst [vmem:[%s447 + $0x3a8] sm:$0xff] %v682
                  %v684 = vld [vmem:[%s446 + $0x6b0] sm:$0xff]
                  %685 = vst [vmem:[%s447 + $0x3b0] sm:$0xff] %v684
                  %v686 = vld [vmem:[%s446 + $0x6b8] sm:$0xff]
                  %687 = vst [vmem:[%s447 + $0x3b8] sm:$0xff] %v686
                  %v688 = vld [vmem:[%s446 + $0x6c0] sm:$0xff]
                  %689 = vst [vmem:[%s447 + $0x3c0] sm:$0xff] %v688
                  %v690 = vld [vmem:[%s446 + $0x6c8] sm:$0xff]
                  %691 = vst [vmem:[%s447 + $0x3c8] sm:$0xff] %v690
                  %v692 = vld [vmem:[%s446 + $0x6d0] sm:$0xff]
                  %693 = vst [vmem:[%s447 + $0x3d0] sm:$0xff] %v692
                  %v694 = vld [vmem:[%s446 + $0x6d8] sm:$0xff]
                  %695 = vst [vmem:[%s447 + $0x3d8] sm:$0xff] %v694
                  %v696 = vld [vmem:[%s446 + $0x6e0] sm:$0xff]
                  %697 = vst [vmem:[%s447 + $0x3e0] sm:$0xff] %v696
                  %v698 = vld [vmem:[%s446 + $0x6e8] sm:$0xff]
                  %699 = vst [vmem:[%s447 + $0x3e8] sm:$0xff] %v698
                  %v700 = vld [vmem:[%s446 + $0x6f0] sm:$0xff]
                  %701 = vst [vmem:[%s447 + $0x3f0] sm:$0xff] %v700
                  %v702 = vld [vmem:[%s446 + $0x6f8] sm:$0xff]
                  %703 = vst [vmem:[%s447 + $0x3f8] sm:$0xff] %v702
                $region60: #{transition_block_forward.3} parent=54 // loop_footer
                  %s445 = sadd.s32 1, %s441
                $region61: #{transition_block_forward.3} parent=54 // loop_footer_branch
                  %440 = sbr.rel target = $region57
                $region62: #{transition_block_forward.3} parent=54 // loop_exit
                  _
              $region55: #{transition_block_forward.3} parent=39 // pred_fallthru
                _
              // Predicated region
              $region63: #{transition_block_forward.3} parent=39 // pred_check
                _
              $region64: #{transition_block_forward.3} parent=39 // pred_check_branch
                %705 = sbr.rel target = $region66
              $region65: #{transition_block_forward.3} parent=39 // pred_region
                _
              $region66: #{transition_block_forward.3} parent=39 // pred_fallthru
                _
            $region40: #{transition_block_forward.3} parent=35 // pred_fallthru
              _
            // Predicated region
            $region41: #{transition_block_forward.3} parent=35 // pred_check
              _
            $region42: #{transition_block_forward.3} parent=35 // pred_check_branch
              %171 = sbr.rel target = $region44
            $region43: #{transition_block_forward.3} parent=35 // pred_region
              %s173 = ssub.s32 256, 1
              loop: start=0, step=1, limit=1
              $region45: #{transition_block_forward.3} parent=43 // loop_pre_header
                _
              $region46: #{transition_block_forward.3} parent=43 // loop_header
                %s175 = sphi 0, %s179
                %p176 = scmp.ge.s32.totalorder %s175, 1
                %s180 = sphi %s165, %s165
                %s181 = sphi %s162, %s162
              $region47: #{transition_block_forward.3} parent=43 // loop_header_branch
                %178 = sbr.rel (%p176) target = $region51
              $region48: #{transition_block_forward.3} parent=43 // loop_body
                %v182 = vld [vmem:[%s180] sm:%s173]
                %183 = vst [vmem:[%s181] sm:%s173] %v182
                %v184 = vld [vmem:[%s180 + $0x8] sm:%s173]
                %185 = vst [vmem:[%s181 + $0x8] sm:%s173] %v184
                %v186 = vld [vmem:[%s180 + $0x10] sm:%s173]
                %187 = vst [vmem:[%s181 + $0x10] sm:%s173] %v186
                %v188 = vld [vmem:[%s180 + $0x18] sm:%s173]
                %189 = vst [vmem:[%s181 + $0x18] sm:%s173] %v188
                %v190 = vld [vmem:[%s180 + $0x20] sm:%s173]
                %191 = vst [vmem:[%s181 + $0x20] sm:%s173] %v190
                %v192 = vld [vmem:[%s180 + $0x28] sm:%s173]
                %193 = vst [vmem:[%s181 + $0x28] sm:%s173] %v192
                %v194 = vld [vmem:[%s180 + $0x30] sm:%s173]
                %195 = vst [vmem:[%s181 + $0x30] sm:%s173] %v194
                %v196 = vld [vmem:[%s180 + $0x38] sm:%s173]
                %197 = vst [vmem:[%s181 + $0x38] sm:%s173] %v196
                %v198 = vld [vmem:[%s180 + $0x40] sm:%s173]
                %199 = vst [vmem:[%s181 + $0x40] sm:%s173] %v198
                %v200 = vld [vmem:[%s180 + $0x48] sm:%s173]
                %201 = vst [vmem:[%s181 + $0x48] sm:%s173] %v200
                %v202 = vld [vmem:[%s180 + $0x50] sm:%s173]
                %203 = vst [vmem:[%s181 + $0x50] sm:%s173] %v202
                %v204 = vld [vmem:[%s180 + $0x58] sm:%s173]
                %205 = vst [vmem:[%s181 + $0x58] sm:%s173] %v204
                %v206 = vld [vmem:[%s180 + $0x60] sm:%s173]
                %207 = vst [vmem:[%s181 + $0x60] sm:%s173] %v206
                %v208 = vld [vmem:[%s180 + $0x68] sm:%s173]
                %209 = vst [vmem:[%s181 + $0x68] sm:%s173] %v208
                %v210 = vld [vmem:[%s180 + $0x70] sm:%s173]
                %211 = vst [vmem:[%s181 + $0x70] sm:%s173] %v210
                %v212 = vld [vmem:[%s180 + $0x78] sm:%s173]
                %213 = vst [vmem:[%s181 + $0x78] sm:%s173] %v212
                %v214 = vld [vmem:[%s180 + $0x80] sm:%s173]
                %215 = vst [vmem:[%s181 + $0x80] sm:%s173] %v214
                %v216 = vld [vmem:[%s180 + $0x88] sm:%s173]
                %217 = vst [vmem:[%s181 + $0x88] sm:%s173] %v216
                %v218 = vld [vmem:[%s180 + $0x90] sm:%s173]
                %219 = vst [vmem:[%s181 + $0x90] sm:%s173] %v218
                %v220 = vld [vmem:[%s180 + $0x98] sm:%s173]
                %221 = vst [vmem:[%s181 + $0x98] sm:%s173] %v220
                %v222 = vld [vmem:[%s180 + $0xa0] sm:%s173]
                %223 = vst [vmem:[%s181 + $0xa0] sm:%s173] %v222
                %v224 = vld [vmem:[%s180 + $0xa8] sm:%s173]
                %225 = vst [vmem:[%s181 + $0xa8] sm:%s173] %v224
                %v226 = vld [vmem:[%s180 + $0xb0] sm:%s173]
                %227 = vst [vmem:[%s181 + $0xb0] sm:%s173] %v226
                %v228 = vld [vmem:[%s180 + $0xb8] sm:%s173]
                %229 = vst [vmem:[%s181 + $0xb8] sm:%s173] %v228
                %v230 = vld [vmem:[%s180 + $0xc0] sm:%s173]
                %231 = vst [vmem:[%s181 + $0xc0] sm:%s173] %v230
                %v232 = vld [vmem:[%s180 + $0xc8] sm:%s173]
                %233 = vst [vmem:[%s181 + $0xc8] sm:%s173] %v232
                %v234 = vld [vmem:[%s180 + $0xd0] sm:%s173]
                %235 = vst [vmem:[%s181 + $0xd0] sm:%s173] %v234
                %v236 = vld [vmem:[%s180 + $0xd8] sm:%s173]
                %237 = vst [vmem:[%s181 + $0xd8] sm:%s173] %v236
                %v238 = vld [vmem:[%s180 + $0xe0] sm:%s173]
                %239 = vst [vmem:[%s181 + $0xe0] sm:%s173] %v238
                %v240 = vld [vmem:[%s180 + $0xe8] sm:%s173]
                %241 = vst [vmem:[%s181 + $0xe8] sm:%s173] %v240
                %v242 = vld [vmem:[%s180 + $0xf0] sm:%s173]
                %243 = vst [vmem:[%s181 + $0xf0] sm:%s173] %v242
                %v244 = vld [vmem:[%s180 + $0xf8] sm:%s173]
                %245 = vst [vmem:[%s181 + $0xf8] sm:%s173] %v244
                %v246 = vld [vmem:[%s180 + $0x200] sm:%s173]
                %247 = vst [vmem:[%s181 + $0x100] sm:%s173] %v246
                %v248 = vld [vmem:[%s180 + $0x208] sm:%s173]
                %249 = vst [vmem:[%s181 + $0x108] sm:%s173] %v248
                %v250 = vld [vmem:[%s180 + $0x210] sm:%s173]
                %251 = vst [vmem:[%s181 + $0x110] sm:%s173] %v250
                %v252 = vld [vmem:[%s180 + $0x218] sm:%s173]
                %253 = vst [vmem:[%s181 + $0x118] sm:%s173] %v252
                %v254 = vld [vmem:[%s180 + $0x220] sm:%s173]
                %255 = vst [vmem:[%s181 + $0x120] sm:%s173] %v254
                %v256 = vld [vmem:[%s180 + $0x228] sm:%s173]
                %257 = vst [vmem:[%s181 + $0x128] sm:%s173] %v256
                %v258 = vld [vmem:[%s180 + $0x230] sm:%s173]
                %259 = vst [vmem:[%s181 + $0x130] sm:%s173] %v258
                %v260 = vld [vmem:[%s180 + $0x238] sm:%s173]
                %261 = vst [vmem:[%s181 + $0x138] sm:%s173] %v260
                %v262 = vld [vmem:[%s180 + $0x240] sm:%s173]
                %263 = vst [vmem:[%s181 + $0x140] sm:%s173] %v262
                %v264 = vld [vmem:[%s180 + $0x248] sm:%s173]
                %265 = vst [vmem:[%s181 + $0x148] sm:%s173] %v264
                %v266 = vld [vmem:[%s180 + $0x250] sm:%s173]
                %267 = vst [vmem:[%s181 + $0x150] sm:%s173] %v266
                %v268 = vld [vmem:[%s180 + $0x258] sm:%s173]
                %269 = vst [vmem:[%s181 + $0x158] sm:%s173] %v268
                %v270 = vld [vmem:[%s180 + $0x260] sm:%s173]
                %271 = vst [vmem:[%s181 + $0x160] sm:%s173] %v270
                %v272 = vld [vmem:[%s180 + $0x268] sm:%s173]
                %273 = vst [vmem:[%s181 + $0x168] sm:%s173] %v272
                %v274 = vld [vmem:[%s180 + $0x270] sm:%s173]
                %275 = vst [vmem:[%s181 + $0x170] sm:%s173] %v274
                %v276 = vld [vmem:[%s180 + $0x278] sm:%s173]
                %277 = vst [vmem:[%s181 + $0x178] sm:%s173] %v276
                %v278 = vld [vmem:[%s180 + $0x280] sm:%s173]
                %279 = vst [vmem:[%s181 + $0x180] sm:%s173] %v278
                %v280 = vld [vmem:[%s180 + $0x288] sm:%s173]
                %281 = vst [vmem:[%s181 + $0x188] sm:%s173] %v280
                %v282 = vld [vmem:[%s180 + $0x290] sm:%s173]
                %283 = vst [vmem:[%s181 + $0x190] sm:%s173] %v282
                %v284 = vld [vmem:[%s180 + $0x298] sm:%s173]
                %285 = vst [vmem:[%s181 + $0x198] sm:%s173] %v284
                %v286 = vld [vmem:[%s180 + $0x2a0] sm:%s173]
                %287 = vst [vmem:[%s181 + $0x1a0] sm:%s173] %v286
                %v288 = vld [vmem:[%s180 + $0x2a8] sm:%s173]
                %289 = vst [vmem:[%s181 + $0x1a8] sm:%s173] %v288
                %v290 = vld [vmem:[%s180 + $0x2b0] sm:%s173]
                %291 = vst [vmem:[%s181 + $0x1b0] sm:%s173] %v290
                %v292 = vld [vmem:[%s180 + $0x2b8] sm:%s173]
                %293 = vst [vmem:[%s181 + $0x1b8] sm:%s173] %v292
                %v294 = vld [vmem:[%s180 + $0x2c0] sm:%s173]
                %295 = vst [vmem:[%s181 + $0x1c0] sm:%s173] %v294
                %v296 = vld [vmem:[%s180 + $0x2c8] sm:%s173]
                %297 = vst [vmem:[%s181 + $0x1c8] sm:%s173] %v296
                %v298 = vld [vmem:[%s180 + $0x2d0] sm:%s173]
                %299 = vst [vmem:[%s181 + $0x1d0] sm:%s173] %v298
                %v300 = vld [vmem:[%s180 + $0x2d8] sm:%s173]
                %301 = vst [vmem:[%s181 + $0x1d8] sm:%s173] %v300
                %v302 = vld [vmem:[%s180 + $0x2e0] sm:%s173]
                %303 = vst [vmem:[%s181 + $0x1e0] sm:%s173] %v302
                %v304 = vld [vmem:[%s180 + $0x2e8] sm:%s173]
                %305 = vst [vmem:[%s181 + $0x1e8] sm:%s173] %v304
                %v306 = vld [vmem:[%s180 + $0x2f0] sm:%s173]
                %307 = vst [vmem:[%s181 + $0x1f0] sm:%s173] %v306
                %v308 = vld [vmem:[%s180 + $0x2f8] sm:%s173]
                %309 = vst [vmem:[%s181 + $0x1f8] sm:%s173] %v308
                %v310 = vld [vmem:[%s180 + $0x400] sm:%s173]
                %311 = vst [vmem:[%s181 + $0x200] sm:%s173] %v310
                %v312 = vld [vmem:[%s180 + $0x408] sm:%s173]
                %313 = vst [vmem:[%s181 + $0x208] sm:%s173] %v312
                %v314 = vld [vmem:[%s180 + $0x410] sm:%s173]
                %315 = vst [vmem:[%s181 + $0x210] sm:%s173] %v314
                %v316 = vld [vmem:[%s180 + $0x418] sm:%s173]
                %317 = vst [vmem:[%s181 + $0x218] sm:%s173] %v316
                %v318 = vld [vmem:[%s180 + $0x420] sm:%s173]
                %319 = vst [vmem:[%s181 + $0x220] sm:%s173] %v318
                %v320 = vld [vmem:[%s180 + $0x428] sm:%s173]
                %321 = vst [vmem:[%s181 + $0x228] sm:%s173] %v320
                %v322 = vld [vmem:[%s180 + $0x430] sm:%s173]
                %323 = vst [vmem:[%s181 + $0x230] sm:%s173] %v322
                %v324 = vld [vmem:[%s180 + $0x438] sm:%s173]
                %325 = vst [vmem:[%s181 + $0x238] sm:%s173] %v324
                %v326 = vld [vmem:[%s180 + $0x440] sm:%s173]
                %327 = vst [vmem:[%s181 + $0x240] sm:%s173] %v326
                %v328 = vld [vmem:[%s180 + $0x448] sm:%s173]
                %329 = vst [vmem:[%s181 + $0x248] sm:%s173] %v328
                %v330 = vld [vmem:[%s180 + $0x450] sm:%s173]
                %331 = vst [vmem:[%s181 + $0x250] sm:%s173] %v330
                %v332 = vld [vmem:[%s180 + $0x458] sm:%s173]
                %333 = vst [vmem:[%s181 + $0x258] sm:%s173] %v332
                %v334 = vld [vmem:[%s180 + $0x460] sm:%s173]
                %335 = vst [vmem:[%s181 + $0x260] sm:%s173] %v334
                %v336 = vld [vmem:[%s180 + $0x468] sm:%s173]
                %337 = vst [vmem:[%s181 + $0x268] sm:%s173] %v336
                %v338 = vld [vmem:[%s180 + $0x470] sm:%s173]
                %339 = vst [vmem:[%s181 + $0x270] sm:%s173] %v338
                %v340 = vld [vmem:[%s180 + $0x478] sm:%s173]
                %341 = vst [vmem:[%s181 + $0x278] sm:%s173] %v340
                %v342 = vld [vmem:[%s180 + $0x480] sm:%s173]
                %343 = vst [vmem:[%s181 + $0x280] sm:%s173] %v342
                %v344 = vld [vmem:[%s180 + $0x488] sm:%s173]
                %345 = vst [vmem:[%s181 + $0x288] sm:%s173] %v344
                %v346 = vld [vmem:[%s180 + $0x490] sm:%s173]
                %347 = vst [vmem:[%s181 + $0x290] sm:%s173] %v346
                %v348 = vld [vmem:[%s180 + $0x498] sm:%s173]
                %349 = vst [vmem:[%s181 + $0x298] sm:%s173] %v348
                %v350 = vld [vmem:[%s180 + $0x4a0] sm:%s173]
                %351 = vst [vmem:[%s181 + $0x2a0] sm:%s173] %v350
                %v352 = vld [vmem:[%s180 + $0x4a8] sm:%s173]
                %353 = vst [vmem:[%s181 + $0x2a8] sm:%s173] %v352
                %v354 = vld [vmem:[%s180 + $0x4b0] sm:%s173]
                %355 = vst [vmem:[%s181 + $0x2b0] sm:%s173] %v354
                %v356 = vld [vmem:[%s180 + $0x4b8] sm:%s173]
                %357 = vst [vmem:[%s181 + $0x2b8] sm:%s173] %v356
                %v358 = vld [vmem:[%s180 + $0x4c0] sm:%s173]
                %359 = vst [vmem:[%s181 + $0x2c0] sm:%s173] %v358
                %v360 = vld [vmem:[%s180 + $0x4c8] sm:%s173]
                %361 = vst [vmem:[%s181 + $0x2c8] sm:%s173] %v360
                %v362 = vld [vmem:[%s180 + $0x4d0] sm:%s173]
                %363 = vst [vmem:[%s181 + $0x2d0] sm:%s173] %v362
                %v364 = vld [vmem:[%s180 + $0x4d8] sm:%s173]
                %365 = vst [vmem:[%s181 + $0x2d8] sm:%s173] %v364
                %v366 = vld [vmem:[%s180 + $0x4e0] sm:%s173]
                %367 = vst [vmem:[%s181 + $0x2e0] sm:%s173] %v366
                %v368 = vld [vmem:[%s180 + $0x4e8] sm:%s173]
                %369 = vst [vmem:[%s181 + $0x2e8] sm:%s173] %v368
                %v370 = vld [vmem:[%s180 + $0x4f0] sm:%s173]
                %371 = vst [vmem:[%s181 + $0x2f0] sm:%s173] %v370
                %v372 = vld [vmem:[%s180 + $0x4f8] sm:%s173]
                %373 = vst [vmem:[%s181 + $0x2f8] sm:%s173] %v372
                %v374 = vld [vmem:[%s180 + $0x600] sm:%s173]
                %375 = vst [vmem:[%s181 + $0x300] sm:%s173] %v374
                %v376 = vld [vmem:[%s180 + $0x608] sm:%s173]
                %377 = vst [vmem:[%s181 + $0x308] sm:%s173] %v376
                %v378 = vld [vmem:[%s180 + $0x610] sm:%s173]
                %379 = vst [vmem:[%s181 + $0x310] sm:%s173] %v378
                %v380 = vld [vmem:[%s180 + $0x618] sm:%s173]
                %381 = vst [vmem:[%s181 + $0x318] sm:%s173] %v380
                %v382 = vld [vmem:[%s180 + $0x620] sm:%s173]
                %383 = vst [vmem:[%s181 + $0x320] sm:%s173] %v382
                %v384 = vld [vmem:[%s180 + $0x628] sm:%s173]
                %385 = vst [vmem:[%s181 + $0x328] sm:%s173] %v384
                %v386 = vld [vmem:[%s180 + $0x630] sm:%s173]
                %387 = vst [vmem:[%s181 + $0x330] sm:%s173] %v386
                %v388 = vld [vmem:[%s180 + $0x638] sm:%s173]
                %389 = vst [vmem:[%s181 + $0x338] sm:%s173] %v388
                %v390 = vld [vmem:[%s180 + $0x640] sm:%s173]
                %391 = vst [vmem:[%s181 + $0x340] sm:%s173] %v390
                %v392 = vld [vmem:[%s180 + $0x648] sm:%s173]
                %393 = vst [vmem:[%s181 + $0x348] sm:%s173] %v392
                %v394 = vld [vmem:[%s180 + $0x650] sm:%s173]
                %395 = vst [vmem:[%s181 + $0x350] sm:%s173] %v394
                %v396 = vld [vmem:[%s180 + $0x658] sm:%s173]
                %397 = vst [vmem:[%s181 + $0x358] sm:%s173] %v396
                %v398 = vld [vmem:[%s180 + $0x660] sm:%s173]
                %399 = vst [vmem:[%s181 + $0x360] sm:%s173] %v398
                %v400 = vld [vmem:[%s180 + $0x668] sm:%s173]
                %401 = vst [vmem:[%s181 + $0x368] sm:%s173] %v400
                %v402 = vld [vmem:[%s180 + $0x670] sm:%s173]
                %403 = vst [vmem:[%s181 + $0x370] sm:%s173] %v402
                %v404 = vld [vmem:[%s180 + $0x678] sm:%s173]
                %405 = vst [vmem:[%s181 + $0x378] sm:%s173] %v404
                %v406 = vld [vmem:[%s180 + $0x680] sm:%s173]
                %407 = vst [vmem:[%s181 + $0x380] sm:%s173] %v406
                %v408 = vld [vmem:[%s180 + $0x688] sm:%s173]
                %409 = vst [vmem:[%s181 + $0x388] sm:%s173] %v408
                %v410 = vld [vmem:[%s180 + $0x690] sm:%s173]
                %411 = vst [vmem:[%s181 + $0x390] sm:%s173] %v410
                %v412 = vld [vmem:[%s180 + $0x698] sm:%s173]
                %413 = vst [vmem:[%s181 + $0x398] sm:%s173] %v412
                %v414 = vld [vmem:[%s180 + $0x6a0] sm:%s173]
                %415 = vst [vmem:[%s181 + $0x3a0] sm:%s173] %v414
                %v416 = vld [vmem:[%s180 + $0x6a8] sm:%s173]
                %417 = vst [vmem:[%s181 + $0x3a8] sm:%s173] %v416
                %v418 = vld [vmem:[%s180 + $0x6b0] sm:%s173]
                %419 = vst [vmem:[%s181 + $0x3b0] sm:%s173] %v418
                %v420 = vld [vmem:[%s180 + $0x6b8] sm:%s173]
                %421 = vst [vmem:[%s181 + $0x3b8] sm:%s173] %v420
                %v422 = vld [vmem:[%s180 + $0x6c0] sm:%s173]
                %423 = vst [vmem:[%s181 + $0x3c0] sm:%s173] %v422
                %v424 = vld [vmem:[%s180 + $0x6c8] sm:%s173]
                %425 = vst [vmem:[%s181 + $0x3c8] sm:%s173] %v424
                %v426 = vld [vmem:[%s180 + $0x6d0] sm:%s173]
                %427 = vst [vmem:[%s181 + $0x3d0] sm:%s173] %v426
                %v428 = vld [vmem:[%s180 + $0x6d8] sm:%s173]
                %429 = vst [vmem:[%s181 + $0x3d8] sm:%s173] %v428
                %v430 = vld [vmem:[%s180 + $0x6e0] sm:%s173]
                %431 = vst [vmem:[%s181 + $0x3e0] sm:%s173] %v430
                %v432 = vld [vmem:[%s180 + $0x6e8] sm:%s173]
                %433 = vst [vmem:[%s181 + $0x3e8] sm:%s173] %v432
                %v434 = vld [vmem:[%s180 + $0x6f0] sm:%s173]
                %435 = vst [vmem:[%s181 + $0x3f0] sm:%s173] %v434
                %v436 = vld [vmem:[%s180 + $0x6f8] sm:%s173]
                %437 = vst [vmem:[%s181 + $0x3f8] sm:%s173] %v436
              $region49: #{transition_block_forward.3} parent=43 // loop_footer
                %s179 = sadd.s32 1, %s175
              $region50: #{transition_block_forward.3} parent=43 // loop_footer_branch
                %174 = sbr.rel target = $region46
              $region51: #{transition_block_forward.3} parent=43 // loop_exit
                _
            $region44: #{transition_block_forward.3} parent=35 // pred_fallthru
              _
          $region36: #{transition_block_forward.3} parent=31 // pred_fallthru
            _
          %706 = vnop
        $region32: #{transition_block_forward.3} parent=27 // pred_fallthru
          _
      $region28: #{transition_block_forward.3} parent=5 // pred_fallthru
        _
      %p707 = scmp.le.s32.totalorder 1, %s13
      %p708 = scmp.lt.s32.totalorder %s13, 3
      %p709 = pnand %p707, %p708
      %p710 = pneg %p709
      // Predicated region
      $region67: #{transition_block_forward.3} parent=5 // pred_check
        _
      $region68: #{transition_block_forward.3} parent=5 // pred_check_branch
        %712 = sbr.rel (%p709) target = $region70
      $region69: #{transition_block_forward.3} parent=5 // pred_region
        %s713 = ssub.s32 %s13, 1
        %s714 = sand.u32 %s26, 1
        %s715 = sand.u32 %s26, 1
        %s716 = smul.addr %s715, 1024
        %s717 = scalar_lea.vmem [#allocation2], %s716
        // Predicated region
        $region71: #{transition_block_forward.3} parent=69 // pred_check
          %p718 = pneg %p39
        $region72: #{transition_block_forward.3} parent=69 // pred_check_branch
          %720 = sbr.rel (%p718) target = $region74
        $region73: #{transition_block_forward.3} parent=69 // pred_region
          _
        $region74: #{transition_block_forward.3} parent=69 // pred_fallthru
          _
        %s721 = sand.u32 %s26, 1
        %s722 = sand.u32 %s26, 1
        %s723 = smul.addr %s722, 1024
        %s724 = scalar_lea.vmem [#allocation2], %s723
        %p725 = pneg %p39
        %p726 = pneg %p36
        %p727 = pneg %p60
        %p728 = pneg %p57
        %p729 = pneg %p81
        %p730 = pneg %p78
        %p731 = pneg %p102
        %p732 = pneg %p99
        %p733 = pneg %p128
        %p734 = pneg %p125
        %s735 = sand.u32 %s115, 1
        %s736 = scalar_lea.sflag [#allocation4], %s735
        %s737 = sand.u32 %s115, 1
        %s738 = smul.addr %s737, 256
        %s739 = scalar_lea.vmem [#allocation3], %s738
        %s740 = smul.u32 32, %s18
        %s741 = smul.u32 32, %s18
        %v743 = vld [vmem:[%s1] sm:$0x1]
        %v744 = vld [vmem:[%s2] sm:$0x1]
        %v745 = vld [vmem:[%s717] sm:$0xff]
        %v746 = vld [vmem:[%s717 + $0x8] sm:$0xff]
        %v747 = vld [vmem:[%s717 + $0x10] sm:$0xff]
        %v748 = vld [vmem:[%s717 + $0x18] sm:$0xff]
        %v749 = vld [vmem:[%s717 + $0x20] sm:$0xff]
        %v750 = vld [vmem:[%s717 + $0x28] sm:$0xff]
        %v751 = vld [vmem:[%s717 + $0x30] sm:$0xff]
        %v752 = vld [vmem:[%s717 + $0x38] sm:$0xff]
        %v753 = vld [vmem:[%s717 + $0x40] sm:$0xff]
        %v754 = vld [vmem:[%s717 + $0x48] sm:$0xff]
        %v755 = vld [vmem:[%s717 + $0x50] sm:$0xff]
        %v756 = vld [vmem:[%s717 + $0x58] sm:$0xff]
        %v757 = vld [vmem:[%s717 + $0x60] sm:$0xff]
        %v758 = vld [vmem:[%s717 + $0x68] sm:$0xff]
        %v759 = vld [vmem:[%s717 + $0x70] sm:$0xff]
        %v760 = vld [vmem:[%s717 + $0x78] sm:$0xff]
        %v761 = vld [vmem:[%s717 + $0x80] sm:$0xff]
        %v762 = vld [vmem:[%s717 + $0x88] sm:$0xff]
        %v763 = vld [vmem:[%s717 + $0x90] sm:$0xff]
        %v764 = vld [vmem:[%s717 + $0x98] sm:$0xff]
        %v765 = vld [vmem:[%s717 + $0xa0] sm:$0xff]
        %v766 = vld [vmem:[%s717 + $0xa8] sm:$0xff]
        %v767 = vld [vmem:[%s717 + $0xb0] sm:$0xff]
        %v768 = vld [vmem:[%s717 + $0xb8] sm:$0xff]
        %v769 = vld [vmem:[%s717 + $0xc0] sm:$0xff]
        %v770 = vld [vmem:[%s717 + $0xc8] sm:$0xff]
        %v771 = vld [vmem:[%s717 + $0xd0] sm:$0xff]
        %v772 = vld [vmem:[%s717 + $0xd8] sm:$0xff]
        %v773 = vld [vmem:[%s717 + $0xe0] sm:$0xff]
        %v774 = vld [vmem:[%s717 + $0xe8] sm:$0xff]
        %v775 = vld [vmem:[%s717 + $0xf0] sm:$0xff]
        %v776 = vld [vmem:[%s717 + $0xf8] sm:$0xff]
        %v778 = vlaneseq
        %v779 = vshrl.u32 %v778, 7
        %v780 = vsub.s32 0, %v779
        %v781 = vrot.slane %v743, %v780
        %v783 = vmul.f32 %v745, %v781
        %v784 = vmul.f32 %v746, %v781
        %v785 = vmul.f32 %v747, %v781
        %v786 = vmul.f32 %v748, %v781
        %v787 = vmul.f32 %v749, %v781
        %v788 = vmul.f32 %v750, %v781
        %v789 = vmul.f32 %v751, %v781
        %v790 = vmul.f32 %v752, %v781
        %v791 = vmul.f32 %v753, %v781
        %v792 = vmul.f32 %v754, %v781
        %v793 = vmul.f32 %v755, %v781
        %v794 = vmul.f32 %v756, %v781
        %v795 = vmul.f32 %v757, %v781
        %v796 = vmul.f32 %v758, %v781
        %v797 = vmul.f32 %v759, %v781
        %v798 = vmul.f32 %v760, %v781
        %v799 = vmul.f32 %v761, %v781
        %v800 = vmul.f32 %v762, %v781
        %v801 = vmul.f32 %v763, %v781
        %v802 = vmul.f32 %v764, %v781
        %v803 = vmul.f32 %v765, %v781
        %v804 = vmul.f32 %v766, %v781
        %v805 = vmul.f32 %v767, %v781
        %v806 = vmul.f32 %v768, %v781
        %v807 = vmul.f32 %v769, %v781
        %v808 = vmul.f32 %v770, %v781
        %v809 = vmul.f32 %v771, %v781
        %v810 = vmul.f32 %v772, %v781
        %v811 = vmul.f32 %v773, %v781
        %v812 = vmul.f32 %v774, %v781
        %v813 = vmul.f32 %v775, %v781
        %v814 = vmul.f32 %v776, %v781
        %v816 = vlaneseq
        %v817 = vshrl.u32 %v816, 7
        %v818 = vsub.s32 0, %v817
        %v819 = vrot.slane %v744, %v818
        %v821 = vadd.f32 %v783, %v819
        %v822 = vadd.f32 %v784, %v819
        %v823 = vadd.f32 %v785, %v819
        %v824 = vadd.f32 %v786, %v819
        %v825 = vadd.f32 %v787, %v819
        %v826 = vadd.f32 %v788, %v819
        %v827 = vadd.f32 %v789, %v819
        %v828 = vadd.f32 %v790, %v819
        %v829 = vadd.f32 %v791, %v819
        %v830 = vadd.f32 %v792, %v819
        %v831 = vadd.f32 %v793, %v819
        %v832 = vadd.f32 %v794, %v819
        %v833 = vadd.f32 %v795, %v819
        %v834 = vadd.f32 %v796, %v819
        %v835 = vadd.f32 %v797, %v819
        %v836 = vadd.f32 %v798, %v819
        %v837 = vadd.f32 %v799, %v819
        %v838 = vadd.f32 %v800, %v819
        %v839 = vadd.f32 %v801, %v819
        %v840 = vadd.f32 %v802, %v819
        %v841 = vadd.f32 %v803, %v819
        %v842 = vadd.f32 %v804, %v819
        %v843 = vadd.f32 %v805, %v819
        %v844 = vadd.f32 %v806, %v819
        %v845 = vadd.f32 %v807, %v819
        %v846 = vadd.f32 %v808, %v819
        %v847 = vadd.f32 %v809, %v819
        %v848 = vadd.f32 %v810, %v819
        %v849 = vadd.f32 %v811, %v819
        %v850 = vadd.f32 %v812, %v819
        %v851 = vadd.f32 %v813, %v819
        %v852 = vadd.f32 %v814, %v819
        %v853 = vmax.f32 %v821, 0.0
        %v854 = vmax.f32 %v822, 0.0
        %v855 = vmax.f32 %v823, 0.0
        %v856 = vmax.f32 %v824, 0.0
        %v857 = vmax.f32 %v825, 0.0
        %v858 = vmax.f32 %v826, 0.0
        %v859 = vmax.f32 %v827, 0.0
        %v860 = vmax.f32 %v828, 0.0
        %v861 = vmax.f32 %v829, 0.0
        %v862 = vmax.f32 %v830, 0.0
        %v863 = vmax.f32 %v831, 0.0
        %v864 = vmax.f32 %v832, 0.0
        %v865 = vmax.f32 %v833, 0.0
        %v866 = vmax.f32 %v834, 0.0
        %v867 = vmax.f32 %v835, 0.0
        %v868 = vmax.f32 %v836, 0.0
        %v869 = vmax.f32 %v837, 0.0
        %v870 = vmax.f32 %v838, 0.0
        %v871 = vmax.f32 %v839, 0.0
        %v872 = vmax.f32 %v840, 0.0
        %v873 = vmax.f32 %v841, 0.0
        %v874 = vmax.f32 %v842, 0.0
        %v875 = vmax.f32 %v843, 0.0
        %v876 = vmax.f32 %v844, 0.0
        %v877 = vmax.f32 %v845, 0.0
        %v878 = vmax.f32 %v846, 0.0
        %v879 = vmax.f32 %v847, 0.0
        %v880 = vmax.f32 %v848, 0.0
        %v881 = vmax.f32 %v849, 0.0
        %v882 = vmax.f32 %v850, 0.0
        %v883 = vmax.f32 %v851, 0.0
        %v884 = vmax.f32 %v852, 0.0
        %s885 = scalar_lea.vmem %s717, 256 [#allocation2]
        %v886 = vld [vmem:[%s885] sm:$0xff]
        %v887 = vld [vmem:[%s885 + $0x8] sm:$0xff]
        %v888 = vld [vmem:[%s885 + $0x10] sm:$0xff]
        %v889 = vld [vmem:[%s885 + $0x18] sm:$0xff]
        %v890 = vld [vmem:[%s885 + $0x20] sm:$0xff]
        %v891 = vld [vmem:[%s885 + $0x28] sm:$0xff]
        %v892 = vld [vmem:[%s885 + $0x30] sm:$0xff]
        %v893 = vld [vmem:[%s885 + $0x38] sm:$0xff]
        %v894 = vld [vmem:[%s885 + $0x40] sm:$0xff]
        %v895 = vld [vmem:[%s885 + $0x48] sm:$0xff]
        %v896 = vld [vmem:[%s885 + $0x50] sm:$0xff]
        %v897 = vld [vmem:[%s885 + $0x58] sm:$0xff]
        %v898 = vld [vmem:[%s885 + $0x60] sm:$0xff]
        %v899 = vld [vmem:[%s885 + $0x68] sm:$0xff]
        %v900 = vld [vmem:[%s885 + $0x70] sm:$0xff]
        %v901 = vld [vmem:[%s885 + $0x78] sm:$0xff]
        %v902 = vld [vmem:[%s885 + $0x80] sm:$0xff]
        %v903 = vld [vmem:[%s885 + $0x88] sm:$0xff]
        %v904 = vld [vmem:[%s885 + $0x90] sm:$0xff]
        %v905 = vld [vmem:[%s885 + $0x98] sm:$0xff]
        %v906 = vld [vmem:[%s885 + $0xa0] sm:$0xff]
        %v907 = vld [vmem:[%s885 + $0xa8] sm:$0xff]
        %v908 = vld [vmem:[%s885 + $0xb0] sm:$0xff]
        %v909 = vld [vmem:[%s885 + $0xb8] sm:$0xff]
        %v910 = vld [vmem:[%s885 + $0xc0] sm:$0xff]
        %v911 = vld [vmem:[%s885 + $0xc8] sm:$0xff]
        %v912 = vld [vmem:[%s885 + $0xd0] sm:$0xff]
        %v913 = vld [vmem:[%s885 + $0xd8] sm:$0xff]
        %v914 = vld [vmem:[%s885 + $0xe0] sm:$0xff]
        %v915 = vld [vmem:[%s885 + $0xe8] sm:$0xff]
        %v916 = vld [vmem:[%s885 + $0xf0] sm:$0xff]
        %v917 = vld [vmem:[%s885 + $0xf8] sm:$0xff]
        %v918 = vmul.f32 %v886, %v781
        %v919 = vmul.f32 %v887, %v781
        %v920 = vmul.f32 %v888, %v781
        %v921 = vmul.f32 %v889, %v781
        %v922 = vmul.f32 %v890, %v781
        %v923 = vmul.f32 %v891, %v781
        %v924 = vmul.f32 %v892, %v781
        %v925 = vmul.f32 %v893, %v781
        %v926 = vmul.f32 %v894, %v781
        %v927 = vmul.f32 %v895, %v781
        %v928 = vmul.f32 %v896, %v781
        %v929 = vmul.f32 %v897, %v781
        %v930 = vmul.f32 %v898, %v781
        %v931 = vmul.f32 %v899, %v781
        %v932 = vmul.f32 %v900, %v781
        %v933 = vmul.f32 %v901, %v781
        %v934 = vmul.f32 %v902, %v781
        %v935 = vmul.f32 %v903, %v781
        %v936 = vmul.f32 %v904, %v781
        %v937 = vmul.f32 %v905, %v781
        %v938 = vmul.f32 %v906, %v781
        %v939 = vmul.f32 %v907, %v781
        %v940 = vmul.f32 %v908, %v781
        %v941 = vmul.f32 %v909, %v781
        %v942 = vmul.f32 %v910, %v781
        %v943 = vmul.f32 %v911, %v781
        %v944 = vmul.f32 %v912, %v781
        %v945 = vmul.f32 %v913, %v781
        %v946 = vmul.f32 %v914, %v781
        %v947 = vmul.f32 %v915, %v781
        %v948 = vmul.f32 %v916, %v781
        %v949 = vmul.f32 %v917, %v781
        %v950 = vadd.f32 %v918, %v819
        %v951 = vadd.f32 %v919, %v819
        %v952 = vadd.f32 %v920, %v819
        %v953 = vadd.f32 %v921, %v819
        %v954 = vadd.f32 %v922, %v819
        %v955 = vadd.f32 %v923, %v819
        %v956 = vadd.f32 %v924, %v819
        %v957 = vadd.f32 %v925, %v819
        %v958 = vadd.f32 %v926, %v819
        %v959 = vadd.f32 %v927, %v819
        %v960 = vadd.f32 %v928, %v819
        %v961 = vadd.f32 %v929, %v819
        %v962 = vadd.f32 %v930, %v819
        %v963 = vadd.f32 %v931, %v819
        %v964 = vadd.f32 %v932, %v819
        %v965 = vadd.f32 %v933, %v819
        %v966 = vadd.f32 %v934, %v819
        %v967 = vadd.f32 %v935, %v819
        %v968 = vadd.f32 %v936, %v819
        %v969 = vadd.f32 %v937, %v819
        %v970 = vadd.f32 %v938, %v819
        %v971 = vadd.f32 %v939, %v819
        %v972 = vadd.f32 %v940, %v819
        %v973 = vadd.f32 %v941, %v819
        %v974 = vadd.f32 %v942, %v819
        %v975 = vadd.f32 %v943, %v819
        %v976 = vadd.f32 %v944, %v819
        %v977 = vadd.f32 %v945, %v819
        %v978 = vadd.f32 %v946, %v819
        %v979 = vadd.f32 %v947, %v819
        %v980 = vadd.f32 %v948, %v819
        %v981 = vadd.f32 %v949, %v819
        %v982 = vmax.f32 %v950, 0.0
        %v983 = vmax.f32 %v951, 0.0
        %v984 = vmax.f32 %v952, 0.0
        %v985 = vmax.f32 %v953, 0.0
        %v986 = vmax.f32 %v954, 0.0
        %v987 = vmax.f32 %v955, 0.0
        %v988 = vmax.f32 %v956, 0.0
        %v989 = vmax.f32 %v957, 0.0
        %v990 = vmax.f32 %v958, 0.0
        %v991 = vmax.f32 %v959, 0.0
        %v992 = vmax.f32 %v960, 0.0
        %v993 = vmax.f32 %v961, 0.0
        %v994 = vmax.f32 %v962, 0.0
        %v995 = vmax.f32 %v963, 0.0
        %v996 = vmax.f32 %v964, 0.0
        %v997 = vmax.f32 %v965, 0.0
        %v998 = vmax.f32 %v966, 0.0
        %v999 = vmax.f32 %v967, 0.0
        %v1000 = vmax.f32 %v968, 0.0
        %v1001 = vmax.f32 %v969, 0.0
        %v1002 = vmax.f32 %v970, 0.0
        %v1003 = vmax.f32 %v971, 0.0
        %v1004 = vmax.f32 %v972, 0.0
        %v1005 = vmax.f32 %v973, 0.0
        %v1006 = vmax.f32 %v974, 0.0
        %v1007 = vmax.f32 %v975, 0.0
        %v1008 = vmax.f32 %v976, 0.0
        %v1009 = vmax.f32 %v977, 0.0
        %v1010 = vmax.f32 %v978, 0.0
        %v1011 = vmax.f32 %v979, 0.0
        %v1012 = vmax.f32 %v980, 0.0
        %v1013 = vmax.f32 %v981, 0.0
        %v1014 = vadd.f32 %v853, %v982
        %v1015 = vadd.f32 %v854, %v983
        %v1016 = vadd.f32 %v855, %v984
        %v1017 = vadd.f32 %v856, %v985
        %v1018 = vadd.f32 %v857, %v986
        %v1019 = vadd.f32 %v858, %v987
        %v1020 = vadd.f32 %v859, %v988
        %v1021 = vadd.f32 %v860, %v989
        %v1022 = vadd.f32 %v861, %v990
        %v1023 = vadd.f32 %v862, %v991
        %v1024 = vadd.f32 %v863, %v992
        %v1025 = vadd.f32 %v864, %v993
        %v1026 = vadd.f32 %v865, %v994
        %v1027 = vadd.f32 %v866, %v995
        %v1028 = vadd.f32 %v867, %v996
        %v1029 = vadd.f32 %v868, %v997
        %v1030 = vadd.f32 %v869, %v998
        %v1031 = vadd.f32 %v870, %v999
        %v1032 = vadd.f32 %v871, %v1000
        %v1033 = vadd.f32 %v872, %v1001
        %v1034 = vadd.f32 %v873, %v1002
        %v1035 = vadd.f32 %v874, %v1003
        %v1036 = vadd.f32 %v875, %v1004
        %v1037 = vadd.f32 %v876, %v1005
        %v1038 = vadd.f32 %v877, %v1006
        %v1039 = vadd.f32 %v878, %v1007
        %v1040 = vadd.f32 %v879, %v1008
        %v1041 = vadd.f32 %v880, %v1009
        %v1042 = vadd.f32 %v881, %v1010
        %v1043 = vadd.f32 %v882, %v1011
        %v1044 = vadd.f32 %v883, %v1012
        %v1045 = vadd.f32 %v884, %v1013
        %s1046 = scalar_lea.vmem %s717, 512 [#allocation2]
        %v1047 = vld [vmem:[%s1046] sm:$0xff]
        %v1048 = vld [vmem:[%s1046 + $0x8] sm:$0xff]
        %v1049 = vld [vmem:[%s1046 + $0x10] sm:$0xff]
        %v1050 = vld [vmem:[%s1046 + $0x18] sm:$0xff]
        %v1051 = vld [vmem:[%s1046 + $0x20] sm:$0xff]
        %v1052 = vld [vmem:[%s1046 + $0x28] sm:$0xff]
        %v1053 = vld [vmem:[%s1046 + $0x30] sm:$0xff]
        %v1054 = vld [vmem:[%s1046 + $0x38] sm:$0xff]
        %v1055 = vld [vmem:[%s1046 + $0x40] sm:$0xff]
        %v1056 = vld [vmem:[%s1046 + $0x48] sm:$0xff]
        %v1057 = vld [vmem:[%s1046 + $0x50] sm:$0xff]
        %v1058 = vld [vmem:[%s1046 + $0x58] sm:$0xff]
        %v1059 = vld [vmem:[%s1046 + $0x60] sm:$0xff]
        %v1060 = vld [vmem:[%s1046 + $0x68] sm:$0xff]
        %v1061 = vld [vmem:[%s1046 + $0x70] sm:$0xff]
        %v1062 = vld [vmem:[%s1046 + $0x78] sm:$0xff]
        %v1063 = vld [vmem:[%s1046 + $0x80] sm:$0xff]
        %v1064 = vld [vmem:[%s1046 + $0x88] sm:$0xff]
        %v1065 = vld [vmem:[%s1046 + $0x90] sm:$0xff]
        %v1066 = vld [vmem:[%s1046 + $0x98] sm:$0xff]
        %v1067 = vld [vmem:[%s1046 + $0xa0] sm:$0xff]
        %v1068 = vld [vmem:[%s1046 + $0xa8] sm:$0xff]
        %v1069 = vld [vmem:[%s1046 + $0xb0] sm:$0xff]
        %v1070 = vld [vmem:[%s1046 + $0xb8] sm:$0xff]
        %v1071 = vld [vmem:[%s1046 + $0xc0] sm:$0xff]
        %v1072 = vld [vmem:[%s1046 + $0xc8] sm:$0xff]
        %v1073 = vld [vmem:[%s1046 + $0xd0] sm:$0xff]
        %v1074 = vld [vmem:[%s1046 + $0xd8] sm:$0xff]
        %v1075 = vld [vmem:[%s1046 + $0xe0] sm:$0xff]
        %v1076 = vld [vmem:[%s1046 + $0xe8] sm:$0xff]
        %v1077 = vld [vmem:[%s1046 + $0xf0] sm:$0xff]
        %v1078 = vld [vmem:[%s1046 + $0xf8] sm:$0xff]
        %v1079 = vmul.f32 %v1047, %v781
        %v1080 = vmul.f32 %v1048, %v781
        %v1081 = vmul.f32 %v1049, %v781
        %v1082 = vmul.f32 %v1050, %v781
        %v1083 = vmul.f32 %v1051, %v781
        %v1084 = vmul.f32 %v1052, %v781
        %v1085 = vmul.f32 %v1053, %v781
        %v1086 = vmul.f32 %v1054, %v781
        %v1087 = vmul.f32 %v1055, %v781
        %v1088 = vmul.f32 %v1056, %v781
        %v1089 = vmul.f32 %v1057, %v781
        %v1090 = vmul.f32 %v1058, %v781
        %v1091 = vmul.f32 %v1059, %v781
        %v1092 = vmul.f32 %v1060, %v781
        %v1093 = vmul.f32 %v1061, %v781
        %v1094 = vmul.f32 %v1062, %v781
        %v1095 = vmul.f32 %v1063, %v781
        %v1096 = vmul.f32 %v1064, %v781
        %v1097 = vmul.f32 %v1065, %v781
        %v1098 = vmul.f32 %v1066, %v781
        %v1099 = vmul.f32 %v1067, %v781
        %v1100 = vmul.f32 %v1068, %v781
        %v1101 = vmul.f32 %v1069, %v781
        %v1102 = vmul.f32 %v1070, %v781
        %v1103 = vmul.f32 %v1071, %v781
        %v1104 = vmul.f32 %v1072, %v781
        %v1105 = vmul.f32 %v1073, %v781
        %v1106 = vmul.f32 %v1074, %v781
        %v1107 = vmul.f32 %v1075, %v781
        %v1108 = vmul.f32 %v1076, %v781
        %v1109 = vmul.f32 %v1077, %v781
        %v1110 = vmul.f32 %v1078, %v781
        %v1111 = vadd.f32 %v1079, %v819
        %v1112 = vadd.f32 %v1080, %v819
        %v1113 = vadd.f32 %v1081, %v819
        %v1114 = vadd.f32 %v1082, %v819
        %v1115 = vadd.f32 %v1083, %v819
        %v1116 = vadd.f32 %v1084, %v819
        %v1117 = vadd.f32 %v1085, %v819
        %v1118 = vadd.f32 %v1086, %v819
        %v1119 = vadd.f32 %v1087, %v819
        %v1120 = vadd.f32 %v1088, %v819
        %v1121 = vadd.f32 %v1089, %v819
        %v1122 = vadd.f32 %v1090, %v819
        %v1123 = vadd.f32 %v1091, %v819
        %v1124 = vadd.f32 %v1092, %v819
        %v1125 = vadd.f32 %v1093, %v819
        %v1126 = vadd.f32 %v1094, %v819
        %v1127 = vadd.f32 %v1095, %v819
        %v1128 = vadd.f32 %v1096, %v819
        %v1129 = vadd.f32 %v1097, %v819
        %v1130 = vadd.f32 %v1098, %v819
        %v1131 = vadd.f32 %v1099, %v819
        %v1132 = vadd.f32 %v1100, %v819
        %v1133 = vadd.f32 %v1101, %v819
        %v1134 = vadd.f32 %v1102, %v819
        %v1135 = vadd.f32 %v1103, %v819
        %v1136 = vadd.f32 %v1104, %v819
        %v1137 = vadd.f32 %v1105, %v819
        %v1138 = vadd.f32 %v1106, %v819
        %v1139 = vadd.f32 %v1107, %v819
        %v1140 = vadd.f32 %v1108, %v819
        %v1141 = vadd.f32 %v1109, %v819
        %v1142 = vadd.f32 %v1110, %v819
        %v1143 = vmax.f32 %v1111, 0.0
        %v1144 = vmax.f32 %v1112, 0.0
        %v1145 = vmax.f32 %v1113, 0.0
        %v1146 = vmax.f32 %v1114, 0.0
        %v1147 = vmax.f32 %v1115, 0.0
        %v1148 = vmax.f32 %v1116, 0.0
        %v1149 = vmax.f32 %v1117, 0.0
        %v1150 = vmax.f32 %v1118, 0.0
        %v1151 = vmax.f32 %v1119, 0.0
        %v1152 = vmax.f32 %v1120, 0.0
        %v1153 = vmax.f32 %v1121, 0.0
        %v1154 = vmax.f32 %v1122, 0.0
        %v1155 = vmax.f32 %v1123, 0.0
        %v1156 = vmax.f32 %v1124, 0.0
        %v1157 = vmax.f32 %v1125, 0.0
        %v1158 = vmax.f32 %v1126, 0.0
        %v1159 = vmax.f32 %v1127, 0.0
        %v1160 = vmax.f32 %v1128, 0.0
        %v1161 = vmax.f32 %v1129, 0.0
        %v1162 = vmax.f32 %v1130, 0.0
        %v1163 = vmax.f32 %v1131, 0.0
        %v1164 = vmax.f32 %v1132, 0.0
        %v1165 = vmax.f32 %v1133, 0.0
        %v1166 = vmax.f32 %v1134, 0.0
        %v1167 = vmax.f32 %v1135, 0.0
        %v1168 = vmax.f32 %v1136, 0.0
        %v1169 = vmax.f32 %v1137, 0.0
        %v1170 = vmax.f32 %v1138, 0.0
        %v1171 = vmax.f32 %v1139, 0.0
        %v1172 = vmax.f32 %v1140, 0.0
        %v1173 = vmax.f32 %v1141, 0.0
        %v1174 = vmax.f32 %v1142, 0.0
        %v1175 = vadd.f32 %v1014, %v1143
        %v1176 = vadd.f32 %v1015, %v1144
        %v1177 = vadd.f32 %v1016, %v1145
        %v1178 = vadd.f32 %v1017, %v1146
        %v1179 = vadd.f32 %v1018, %v1147
        %v1180 = vadd.f32 %v1019, %v1148
        %v1181 = vadd.f32 %v1020, %v1149
        %v1182 = vadd.f32 %v1021, %v1150
        %v1183 = vadd.f32 %v1022, %v1151
        %v1184 = vadd.f32 %v1023, %v1152
        %v1185 = vadd.f32 %v1024, %v1153
        %v1186 = vadd.f32 %v1025, %v1154
        %v1187 = vadd.f32 %v1026, %v1155
        %v1188 = vadd.f32 %v1027, %v1156
        %v1189 = vadd.f32 %v1028, %v1157
        %v1190 = vadd.f32 %v1029, %v1158
        %v1191 = vadd.f32 %v1030, %v1159
        %v1192 = vadd.f32 %v1031, %v1160
        %v1193 = vadd.f32 %v1032, %v1161
        %v1194 = vadd.f32 %v1033, %v1162
        %v1195 = vadd.f32 %v1034, %v1163
        %v1196 = vadd.f32 %v1035, %v1164
        %v1197 = vadd.f32 %v1036, %v1165
        %v1198 = vadd.f32 %v1037, %v1166
        %v1199 = vadd.f32 %v1038, %v1167
        %v1200 = vadd.f32 %v1039, %v1168
        %v1201 = vadd.f32 %v1040, %v1169
        %v1202 = vadd.f32 %v1041, %v1170
        %v1203 = vadd.f32 %v1042, %v1171
        %v1204 = vadd.f32 %v1043, %v1172
        %v1205 = vadd.f32 %v1044, %v1173
        %v1206 = vadd.f32 %v1045, %v1174
        %s1207 = scalar_lea.vmem %s717, 768 [#allocation2]
        %v1208 = vld [vmem:[%s1207] sm:$0xff]
        %v1209 = vld [vmem:[%s1207 + $0x8] sm:$0xff]
        %v1210 = vld [vmem:[%s1207 + $0x10] sm:$0xff]
        %v1211 = vld [vmem:[%s1207 + $0x18] sm:$0xff]
        %v1212 = vld [vmem:[%s1207 + $0x20] sm:$0xff]
        %v1213 = vld [vmem:[%s1207 + $0x28] sm:$0xff]
        %v1214 = vld [vmem:[%s1207 + $0x30] sm:$0xff]
        %v1215 = vld [vmem:[%s1207 + $0x38] sm:$0xff]
        %v1216 = vld [vmem:[%s1207 + $0x40] sm:$0xff]
        %v1217 = vld [vmem:[%s1207 + $0x48] sm:$0xff]
        %v1218 = vld [vmem:[%s1207 + $0x50] sm:$0xff]
        %v1219 = vld [vmem:[%s1207 + $0x58] sm:$0xff]
        %v1220 = vld [vmem:[%s1207 + $0x60] sm:$0xff]
        %v1221 = vld [vmem:[%s1207 + $0x68] sm:$0xff]
        %v1222 = vld [vmem:[%s1207 + $0x70] sm:$0xff]
        %v1223 = vld [vmem:[%s1207 + $0x78] sm:$0xff]
        %v1224 = vld [vmem:[%s1207 + $0x80] sm:$0xff]
        %v1225 = vld [vmem:[%s1207 + $0x88] sm:$0xff]
        %v1226 = vld [vmem:[%s1207 + $0x90] sm:$0xff]
        %v1227 = vld [vmem:[%s1207 + $0x98] sm:$0xff]
        %v1228 = vld [vmem:[%s1207 + $0xa0] sm:$0xff]
        %v1229 = vld [vmem:[%s1207 + $0xa8] sm:$0xff]
        %v1230 = vld [vmem:[%s1207 + $0xb0] sm:$0xff]
        %v1231 = vld [vmem:[%s1207 + $0xb8] sm:$0xff]
        %v1232 = vld [vmem:[%s1207 + $0xc0] sm:$0xff]
        %v1233 = vld [vmem:[%s1207 + $0xc8] sm:$0xff]
        %v1234 = vld [vmem:[%s1207 + $0xd0] sm:$0xff]
        %v1235 = vld [vmem:[%s1207 + $0xd8] sm:$0xff]
        %v1236 = vld [vmem:[%s1207 + $0xe0] sm:$0xff]
        %v1237 = vld [vmem:[%s1207 + $0xe8] sm:$0xff]
        %v1238 = vld [vmem:[%s1207 + $0xf0] sm:$0xff]
        %v1239 = vld [vmem:[%s1207 + $0xf8] sm:$0xff]
        %v1240 = vmul.f32 %v1208, %v781
        %v1241 = vmul.f32 %v1209, %v781
        %v1242 = vmul.f32 %v1210, %v781
        %v1243 = vmul.f32 %v1211, %v781
        %v1244 = vmul.f32 %v1212, %v781
        %v1245 = vmul.f32 %v1213, %v781
        %v1246 = vmul.f32 %v1214, %v781
        %v1247 = vmul.f32 %v1215, %v781
        %v1248 = vmul.f32 %v1216, %v781
        %v1249 = vmul.f32 %v1217, %v781
        %v1250 = vmul.f32 %v1218, %v781
        %v1251 = vmul.f32 %v1219, %v781
        %v1252 = vmul.f32 %v1220, %v781
        %v1253 = vmul.f32 %v1221, %v781
        %v1254 = vmul.f32 %v1222, %v781
        %v1255 = vmul.f32 %v1223, %v781
        %v1256 = vmul.f32 %v1224, %v781
        %v1257 = vmul.f32 %v1225, %v781
        %v1258 = vmul.f32 %v1226, %v781
        %v1259 = vmul.f32 %v1227, %v781
        %v1260 = vmul.f32 %v1228, %v781
        %v1261 = vmul.f32 %v1229, %v781
        %v1262 = vmul.f32 %v1230, %v781
        %v1263 = vmul.f32 %v1231, %v781
        %v1264 = vmul.f32 %v1232, %v781
        %v1265 = vmul.f32 %v1233, %v781
        %v1266 = vmul.f32 %v1234, %v781
        %v1267 = vmul.f32 %v1235, %v781
        %v1268 = vmul.f32 %v1236, %v781
        %v1269 = vmul.f32 %v1237, %v781
        %v1270 = vmul.f32 %v1238, %v781
        %v1271 = vmul.f32 %v1239, %v781
        %v1272 = vadd.f32 %v1240, %v819
        %v1273 = vadd.f32 %v1241, %v819
        %v1274 = vadd.f32 %v1242, %v819
        %v1275 = vadd.f32 %v1243, %v819
        %v1276 = vadd.f32 %v1244, %v819
        %v1277 = vadd.f32 %v1245, %v819
        %v1278 = vadd.f32 %v1246, %v819
        %v1279 = vadd.f32 %v1247, %v819
        %v1280 = vadd.f32 %v1248, %v819
        %v1281 = vadd.f32 %v1249, %v819
        %v1282 = vadd.f32 %v1250, %v819
        %v1283 = vadd.f32 %v1251, %v819
        %v1284 = vadd.f32 %v1252, %v819
        %v1285 = vadd.f32 %v1253, %v819
        %v1286 = vadd.f32 %v1254, %v819
        %v1287 = vadd.f32 %v1255, %v819
        %v1288 = vadd.f32 %v1256, %v819
        %v1289 = vadd.f32 %v1257, %v819
        %v1290 = vadd.f32 %v1258, %v819
        %v1291 = vadd.f32 %v1259, %v819
        %v1292 = vadd.f32 %v1260, %v819
        %v1293 = vadd.f32 %v1261, %v819
        %v1294 = vadd.f32 %v1262, %v819
        %v1295 = vadd.f32 %v1263, %v819
        %v1296 = vadd.f32 %v1264, %v819
        %v1297 = vadd.f32 %v1265, %v819
        %v1298 = vadd.f32 %v1266, %v819
        %v1299 = vadd.f32 %v1267, %v819
        %v1300 = vadd.f32 %v1268, %v819
        %v1301 = vadd.f32 %v1269, %v819
        %v1302 = vadd.f32 %v1270, %v819
        %v1303 = vadd.f32 %v1271, %v819
        %v1304 = vmax.f32 %v1272, 0.0
        %v1305 = vmax.f32 %v1273, 0.0
        %v1306 = vmax.f32 %v1274, 0.0
        %v1307 = vmax.f32 %v1275, 0.0
        %v1308 = vmax.f32 %v1276, 0.0
        %v1309 = vmax.f32 %v1277, 0.0
        %v1310 = vmax.f32 %v1278, 0.0
        %v1311 = vmax.f32 %v1279, 0.0
        %v1312 = vmax.f32 %v1280, 0.0
        %v1313 = vmax.f32 %v1281, 0.0
        %v1314 = vmax.f32 %v1282, 0.0
        %v1315 = vmax.f32 %v1283, 0.0
        %v1316 = vmax.f32 %v1284, 0.0
        %v1317 = vmax.f32 %v1285, 0.0
        %v1318 = vmax.f32 %v1286, 0.0
        %v1319 = vmax.f32 %v1287, 0.0
        %v1320 = vmax.f32 %v1288, 0.0
        %v1321 = vmax.f32 %v1289, 0.0
        %v1322 = vmax.f32 %v1290, 0.0
        %v1323 = vmax.f32 %v1291, 0.0
        %v1324 = vmax.f32 %v1292, 0.0
        %v1325 = vmax.f32 %v1293, 0.0
        %v1326 = vmax.f32 %v1294, 0.0
        %v1327 = vmax.f32 %v1295, 0.0
        %v1328 = vmax.f32 %v1296, 0.0
        %v1329 = vmax.f32 %v1297, 0.0
        %v1330 = vmax.f32 %v1298, 0.0
        %v1331 = vmax.f32 %v1299, 0.0
        %v1332 = vmax.f32 %v1300, 0.0
        %v1333 = vmax.f32 %v1301, 0.0
        %v1334 = vmax.f32 %v1302, 0.0
        %v1335 = vmax.f32 %v1303, 0.0
        %v1336 = vadd.f32 %v1175, %v1304
        %v1337 = vadd.f32 %v1176, %v1305
        %v1338 = vadd.f32 %v1177, %v1306
        %v1339 = vadd.f32 %v1178, %v1307
        %v1340 = vadd.f32 %v1179, %v1308
        %v1341 = vadd.f32 %v1180, %v1309
        %v1342 = vadd.f32 %v1181, %v1310
        %v1343 = vadd.f32 %v1182, %v1311
        %v1344 = vadd.f32 %v1183, %v1312
        %v1345 = vadd.f32 %v1184, %v1313
        %v1346 = vadd.f32 %v1185, %v1314
        %v1347 = vadd.f32 %v1186, %v1315
        %v1348 = vadd.f32 %v1187, %v1316
        %v1349 = vadd.f32 %v1188, %v1317
        %v1350 = vadd.f32 %v1189, %v1318
        %v1351 = vadd.f32 %v1190, %v1319
        %v1352 = vadd.f32 %v1191, %v1320
        %v1353 = vadd.f32 %v1192, %v1321
        %v1354 = vadd.f32 %v1193, %v1322
        %v1355 = vadd.f32 %v1194, %v1323
        %v1356 = vadd.f32 %v1195, %v1324
        %v1357 = vadd.f32 %v1196, %v1325
        %v1358 = vadd.f32 %v1197, %v1326
        %v1359 = vadd.f32 %v1198, %v1327
        %v1360 = vadd.f32 %v1199, %v1328
        %v1361 = vadd.f32 %v1200, %v1329
        %v1362 = vadd.f32 %v1201, %v1330
        %v1363 = vadd.f32 %v1202, %v1331
        %v1364 = vadd.f32 %v1203, %v1332
        %v1365 = vadd.f32 %v1204, %v1333
        %v1366 = vadd.f32 %v1205, %v1334
        %v1367 = vadd.f32 %v1206, %v1335
        %v1368 = vmul.f32 %v1336, 0.25
        %v1369 = vmul.f32 %v1337, 0.25
        %v1370 = vmul.f32 %v1338, 0.25
        %v1371 = vmul.f32 %v1339, 0.25
        %v1372 = vmul.f32 %v1340, 0.25
        %v1373 = vmul.f32 %v1341, 0.25
        %v1374 = vmul.f32 %v1342, 0.25
        %v1375 = vmul.f32 %v1343, 0.25
        %v1376 = vmul.f32 %v1344, 0.25
        %v1377 = vmul.f32 %v1345, 0.25
        %v1378 = vmul.f32 %v1346, 0.25
        %v1379 = vmul.f32 %v1347, 0.25
        %v1380 = vmul.f32 %v1348, 0.25
        %v1381 = vmul.f32 %v1349, 0.25
        %v1382 = vmul.f32 %v1350, 0.25
        %v1383 = vmul.f32 %v1351, 0.25
        %v1384 = vmul.f32 %v1352, 0.25
        %v1385 = vmul.f32 %v1353, 0.25
        %v1386 = vmul.f32 %v1354, 0.25
        %v1387 = vmul.f32 %v1355, 0.25
        %v1388 = vmul.f32 %v1356, 0.25
        %v1389 = vmul.f32 %v1357, 0.25
        %v1390 = vmul.f32 %v1358, 0.25
        %v1391 = vmul.f32 %v1359, 0.25
        %v1392 = vmul.f32 %v1360, 0.25
        %v1393 = vmul.f32 %v1361, 0.25
        %v1394 = vmul.f32 %v1362, 0.25
        %v1395 = vmul.f32 %v1363, 0.25
        %v1396 = vmul.f32 %v1364, 0.25
        %v1397 = vmul.f32 %v1365, 0.25
        %v1398 = vmul.f32 %v1366, 0.25
        %v1399 = vmul.f32 %v1367, 0.25
        %v1400 = vpack.c.bf16 %v1369, %v1368
        %v1401 = vpack.c.bf16 %v1371, %v1370
        %v1402 = vpack.c.bf16 %v1373, %v1372
        %v1403 = vpack.c.bf16 %v1375, %v1374
        %v1404 = vpack.c.bf16 %v1377, %v1376
        %v1405 = vpack.c.bf16 %v1379, %v1378
        %v1406 = vpack.c.bf16 %v1381, %v1380
        %v1407 = vpack.c.bf16 %v1383, %v1382
        %v1408 = vpack.c.bf16 %v1385, %v1384
        %v1409 = vpack.c.bf16 %v1387, %v1386
        %v1410 = vpack.c.bf16 %v1389, %v1388
        %v1411 = vpack.c.bf16 %v1391, %v1390
        %v1412 = vpack.c.bf16 %v1393, %v1392
        %v1413 = vpack.c.bf16 %v1395, %v1394
        %v1414 = vpack.c.bf16 %v1397, %v1396
        %v1415 = vpack.c.bf16 %v1399, %v1398
        %v1416 = vld [vmem:[%s3] sm:$0xf]
        %v1417 = vld [vmem:[%s3 + $0x4] sm:$0xf]
        %v1418 = vld [vmem:[%s3 + $0x8] sm:$0xf]
        %v1419 = vld [vmem:[%s3 + $0xc] sm:$0xf]
        %v1420 = vld [vmem:[%s3 + $0x10] sm:$0xf]
        %v1421 = vld [vmem:[%s3 + $0x14] sm:$0xf]
        %v1422 = vld [vmem:[%s3 + $0x18] sm:$0xf]
        %v1423 = vld [vmem:[%s3 + $0x1c] sm:$0xf]
        %v1424 = vld [vmem:[%s3 + $0x20] sm:$0xf]
        %v1425 = vld [vmem:[%s3 + $0x24] sm:$0xf]
        %v1426 = vld [vmem:[%s3 + $0x28] sm:$0xf]
        %v1427 = vld [vmem:[%s3 + $0x2c] sm:$0xf]
        %v1428 = vld [vmem:[%s3 + $0x30] sm:$0xf]
        %v1429 = vld [vmem:[%s3 + $0x34] sm:$0xf]
        %v1430 = vld [vmem:[%s3 + $0x38] sm:$0xf]
        %v1431 = vld [vmem:[%s3 + $0x3c] sm:$0xf]
        %v1448 = vunpack.c.l.b16 %v1416
        %v1449 = vunpack.c.l.b16 %v1417
        %v1450 = vunpack.c.l.b16 %v1418
        %v1451 = vunpack.c.l.b16 %v1419
        %v1452 = vunpack.c.l.b16 %v1420
        %v1453 = vunpack.c.l.b16 %v1421
        %v1454 = vunpack.c.l.b16 %v1422
        %v1455 = vunpack.c.l.b16 %v1423
        %v1456 = vunpack.c.l.b16 %v1424
        %v1457 = vunpack.c.l.b16 %v1425
        %v1458 = vunpack.c.l.b16 %v1426
        %v1459 = vunpack.c.l.b16 %v1427
        %v1460 = vunpack.c.l.b16 %v1428
        %v1461 = vunpack.c.l.b16 %v1429
        %v1462 = vunpack.c.l.b16 %v1430
        %v1463 = vunpack.c.l.b16 %v1431
        %v1464 = vpack.c.b16 %v1449, %v1448
        %v1465 = vpack.c.b16 %v1451, %v1450
        %v1466 = vpack.c.b16 %v1453, %v1452
        %v1467 = vpack.c.b16 %v1455, %v1454
        %v1468 = vpack.c.b16 %v1457, %v1456
        %v1469 = vpack.c.b16 %v1459, %v1458
        %v1470 = vpack.c.b16 %v1461, %v1460
        %v1471 = vpack.c.b16 %v1463, %v1462
        %1480 = vmatprep.subr.bf16.mxu0 0
        %1481 = vmatpush1.bf16.msra.mxu0 %v1471
        %1482 = vmatprep.subr.bf16.mxu0 0
        %1483 = vmatpush1.bf16.msra.mxu0 %v1470
        %1484 = vmatprep.subr.bf16.mxu0 0
        %1485 = vmatpush1.bf16.msra.mxu0 %v1469
        %1486 = vmatprep.subr.bf16.mxu0 0
        %1487 = vmatpush1.bf16.msra.mxu0 %v1468
        %1488 = vmatprep.subr.bf16.mxu0 0
        %1489 = vmatpush1.bf16.msra.mxu0 %v1467
        %1490 = vmatprep.subr.bf16.mxu0 0
        %1491 = vmatpush1.bf16.msra.mxu0 %v1466
        %1492 = vmatprep.subr.bf16.mxu0 0
        %1493 = vmatpush1.bf16.msra.mxu0 %v1465
        %1494 = vmatprep.subr.bf16.mxu0 0
        %1495 = vmatpush1.bf16.msra.mxu0 %v1464
        %1496 = vmatprep.subr.bf16.mxu0 0
        %1497 = vmatpush2.bf16.msra.mxu0 0
        %1498 = vmatprep.subr.bf16.mxu0 0
        %1499 = vmatpush2.bf16.msra.mxu0 0
        %1500 = vmatprep.subr.bf16.mxu0 0
        %1501 = vmatpush2.bf16.msra.mxu0 0
        %1502 = vmatprep.subr.bf16.mxu0 0
        %1503 = vmatpush2.bf16.msra.mxu0 0
        %1504 = vmatprep.subr.bf16.mxu0 0
        %1505 = vmatpush2.bf16.msra.mxu0 0
        %1506 = vmatprep.subr.bf16.mxu0 0
        %1507 = vmatpush2.bf16.msra.mxu0 0
        %1508 = vmatprep.subr.bf16.mxu0 0
        %1509 = vmatpush2.bf16.msra.mxu0 0
        %1510 = vmatprep.subr.bf16.mxu0 0
        %1511 = vmatpush2.bf16.msra.mxu0 0
        %1512 = vmatprep.mubr.bf16.mxu0 0
        %1513 = vmatmul.mubr.bf16.gmra.mxu0 %v1400
        %v1514 = vpop.f32.mrf.mxu0
        %v1515 = vadd.f32 0.0, %v1514
        %v1516 = vpop.f32.mrf.mxu0
        %v1517 = vpop.f32.mrf.mxu0
        %v1518 = vadd.f32 0.0, %v1517
        %v1519 = vpop.f32.mrf.mxu0
        %1520 = vmatprep.mubr.bf16.mxu0 0
        %1521 = vmatmul.mubr.bf16.gmra.mxu0 %v1401
        %v1522 = vpop.f32.mrf.mxu0
        %v1523 = vadd.f32 0.0, %v1522
        %v1524 = vpop.f32.mrf.mxu0
        %v1525 = vpop.f32.mrf.mxu0
        %v1526 = vadd.f32 0.0, %v1525
        %v1527 = vpop.f32.mrf.mxu0
        %1528 = vmatprep.mubr.bf16.mxu0 0
        %1529 = vmatmul.mubr.bf16.gmra.mxu0 %v1402
        %v1530 = vpop.f32.mrf.mxu0
        %v1531 = vadd.f32 0.0, %v1530
        %v1532 = vpop.f32.mrf.mxu0
        %v1533 = vpop.f32.mrf.mxu0
        %v1534 = vadd.f32 0.0, %v1533
        %v1535 = vpop.f32.mrf.mxu0
        %1536 = vmatprep.mubr.bf16.mxu0 0
        %1537 = vmatmul.mubr.bf16.gmra.mxu0 %v1403
        %v1538 = vpop.f32.mrf.mxu0
        %v1539 = vadd.f32 0.0, %v1538
        %v1540 = vpop.f32.mrf.mxu0
        %v1541 = vpop.f32.mrf.mxu0
        %v1542 = vadd.f32 0.0, %v1541
        %v1543 = vpop.f32.mrf.mxu0
        %1544 = vmatprep.mubr.bf16.mxu0 0
        %1545 = vmatmul.mubr.bf16.gmra.mxu0 %v1404
        %v1546 = vpop.f32.mrf.mxu0
        %v1547 = vadd.f32 0.0, %v1546
        %v1548 = vpop.f32.mrf.mxu0
        %v1549 = vpop.f32.mrf.mxu0
        %v1550 = vadd.f32 0.0, %v1549
        %v1551 = vpop.f32.mrf.mxu0
        %1552 = vmatprep.mubr.bf16.mxu0 0
        %1553 = vmatmul.mubr.bf16.gmra.mxu0 %v1405
        %v1554 = vpop.f32.mrf.mxu0
        %v1555 = vadd.f32 0.0, %v1554
        %v1556 = vpop.f32.mrf.mxu0
        %v1557 = vpop.f32.mrf.mxu0
        %v1558 = vadd.f32 0.0, %v1557
        %v1559 = vpop.f32.mrf.mxu0
        %1560 = vmatprep.mubr.bf16.mxu0 0
        %1561 = vmatmul.mubr.bf16.gmra.mxu0 %v1406
        %v1562 = vpop.f32.mrf.mxu0
        %v1563 = vadd.f32 0.0, %v1562
        %v1564 = vpop.f32.mrf.mxu0
        %v1565 = vpop.f32.mrf.mxu0
        %v1566 = vadd.f32 0.0, %v1565
        %v1567 = vpop.f32.mrf.mxu0
        %1568 = vmatprep.mubr.bf16.mxu0 0
        %1569 = vmatmul.mubr.bf16.gmra.mxu0 %v1407
        %v1570 = vpop.f32.mrf.mxu0
        %v1571 = vadd.f32 0.0, %v1570
        %v1572 = vpop.f32.mrf.mxu0
        %v1573 = vpop.f32.mrf.mxu0
        %v1574 = vadd.f32 0.0, %v1573
        %v1575 = vpop.f32.mrf.mxu0
        %1576 = vmatprep.mubr.bf16.mxu0 0
        %1577 = vmatmul.mubr.bf16.gmra.mxu0 %v1408
        %v1578 = vpop.f32.mrf.mxu0
        %v1579 = vadd.f32 0.0, %v1578
        %v1580 = vpop.f32.mrf.mxu0
        %v1581 = vpop.f32.mrf.mxu0
        %v1582 = vadd.f32 0.0, %v1581
        %v1583 = vpop.f32.mrf.mxu0
        %1584 = vmatprep.mubr.bf16.mxu0 0
        %1585 = vmatmul.mubr.bf16.gmra.mxu0 %v1409
        %v1586 = vpop.f32.mrf.mxu0
        %v1587 = vadd.f32 0.0, %v1586
        %v1588 = vpop.f32.mrf.mxu0
        %v1589 = vpop.f32.mrf.mxu0
        %v1590 = vadd.f32 0.0, %v1589
        %v1591 = vpop.f32.mrf.mxu0
        %1592 = vmatprep.mubr.bf16.mxu0 0
        %1593 = vmatmul.mubr.bf16.gmra.mxu0 %v1410
        %v1594 = vpop.f32.mrf.mxu0
        %v1595 = vadd.f32 0.0, %v1594
        %v1596 = vpop.f32.mrf.mxu0
        %v1597 = vpop.f32.mrf.mxu0
        %v1598 = vadd.f32 0.0, %v1597
        %v1599 = vpop.f32.mrf.mxu0
        %1600 = vmatprep.mubr.bf16.mxu0 0
        %1601 = vmatmul.mubr.bf16.gmra.mxu0 %v1411
        %v1602 = vpop.f32.mrf.mxu0
        %v1603 = vadd.f32 0.0, %v1602
        %v1604 = vpop.f32.mrf.mxu0
        %v1605 = vpop.f32.mrf.mxu0
        %v1606 = vadd.f32 0.0, %v1605
        %v1607 = vpop.f32.mrf.mxu0
        %1608 = vmatprep.mubr.bf16.mxu0 0
        %1609 = vmatmul.mubr.bf16.gmra.mxu0 %v1412
        %v1610 = vpop.f32.mrf.mxu0
        %v1611 = vadd.f32 0.0, %v1610
        %v1612 = vpop.f32.mrf.mxu0
        %v1613 = vpop.f32.mrf.mxu0
        %v1614 = vadd.f32 0.0, %v1613
        %v1615 = vpop.f32.mrf.mxu0
        %1616 = vmatprep.mubr.bf16.mxu0 0
        %1617 = vmatmul.mubr.bf16.gmra.mxu0 %v1413
        %v1618 = vpop.f32.mrf.mxu0
        %v1619 = vadd.f32 0.0, %v1618
        %v1620 = vpop.f32.mrf.mxu0
        %v1621 = vpop.f32.mrf.mxu0
        %v1622 = vadd.f32 0.0, %v1621
        %v1623 = vpop.f32.mrf.mxu0
        %1624 = vmatprep.mubr.bf16.mxu0 0
        %1625 = vmatmul.mubr.bf16.gmra.mxu0 %v1414
        %v1626 = vpop.f32.mrf.mxu0
        %v1627 = vadd.f32 0.0, %v1626
        %v1628 = vpop.f32.mrf.mxu0
        %v1629 = vpop.f32.mrf.mxu0
        %v1630 = vadd.f32 0.0, %v1629
        %v1631 = vpop.f32.mrf.mxu0
        %1632 = vmatprep.mubr.bf16.mxu0 0
        %1633 = vmatmul.mubr.bf16.gmra.mxu0 %v1415
        %v1634 = vpop.f32.mrf.mxu0
        %v1635 = vadd.f32 0.0, %v1634
        %v1636 = vpop.f32.mrf.mxu0
        %v1637 = vpop.f32.mrf.mxu0
        %v1638 = vadd.f32 0.0, %v1637
        %v1639 = vpop.f32.mrf.mxu0
        %1640 = vdwg.mxu0
        %vm1641 = vcmask 523264
        %1642 = vst.msk [vmem:[%s739] sm:$0xff] %vm1641, %v1515
        %1643 = vst.msk [vmem:[%s739 + $0x8] sm:$0xff] %vm1641, %v1518
        %1644 = vst.msk [vmem:[%s739 + $0x10] sm:$0xff] %vm1641, %v1523
        %1645 = vst.msk [vmem:[%s739 + $0x18] sm:$0xff] %vm1641, %v1526
        %1646 = vst.msk [vmem:[%s739 + $0x20] sm:$0xff] %vm1641, %v1531
        %1647 = vst.msk [vmem:[%s739 + $0x28] sm:$0xff] %vm1641, %v1534
        %1648 = vst.msk [vmem:[%s739 + $0x30] sm:$0xff] %vm1641, %v1539
        %1649 = vst.msk [vmem:[%s739 + $0x38] sm:$0xff] %vm1641, %v1542
        %1650 = vst.msk [vmem:[%s739 + $0x40] sm:$0xff] %vm1641, %v1547
        %1651 = vst.msk [vmem:[%s739 + $0x48] sm:$0xff] %vm1641, %v1550
        %1652 = vst.msk [vmem:[%s739 + $0x50] sm:$0xff] %vm1641, %v1555
        %1653 = vst.msk [vmem:[%s739 + $0x58] sm:$0xff] %vm1641, %v1558
        %1654 = vst.msk [vmem:[%s739 + $0x60] sm:$0xff] %vm1641, %v1563
        %1655 = vst.msk [vmem:[%s739 + $0x68] sm:$0xff] %vm1641, %v1566
        %1656 = vst.msk [vmem:[%s739 + $0x70] sm:$0xff] %vm1641, %v1571
        %1657 = vst.msk [vmem:[%s739 + $0x78] sm:$0xff] %vm1641, %v1574
        %1658 = vst.msk [vmem:[%s739 + $0x80] sm:$0xff] %vm1641, %v1579
        %1659 = vst.msk [vmem:[%s739 + $0x88] sm:$0xff] %vm1641, %v1582
        %1660 = vst.msk [vmem:[%s739 + $0x90] sm:$0xff] %vm1641, %v1587
        %1661 = vst.msk [vmem:[%s739 + $0x98] sm:$0xff] %vm1641, %v1590
        %1662 = vst.msk [vmem:[%s739 + $0xa0] sm:$0xff] %vm1641, %v1595
        %1663 = vst.msk [vmem:[%s739 + $0xa8] sm:$0xff] %vm1641, %v1598
        %1664 = vst.msk [vmem:[%s739 + $0xb0] sm:$0xff] %vm1641, %v1603
        %1665 = vst.msk [vmem:[%s739 + $0xb8] sm:$0xff] %vm1641, %v1606
        %1666 = vst.msk [vmem:[%s739 + $0xc0] sm:$0xff] %vm1641, %v1611
        %1667 = vst.msk [vmem:[%s739 + $0xc8] sm:$0xff] %vm1641, %v1614
        %1668 = vst.msk [vmem:[%s739 + $0xd0] sm:$0xff] %vm1641, %v1619
        %1669 = vst.msk [vmem:[%s739 + $0xd8] sm:$0xff] %vm1641, %v1622
        %1670 = vst.msk [vmem:[%s739 + $0xe0] sm:$0xff] %vm1641, %v1627
        %1671 = vst.msk [vmem:[%s739 + $0xe8] sm:$0xff] %vm1641, %v1630
        %1672 = vst.msk [vmem:[%s739 + $0xf0] sm:$0xff] %vm1641, %v1635
        %1673 = vst.msk [vmem:[%s739 + $0xf8] sm:$0xff] %vm1641, %v1638
        %s1674 = sand.u32 %s115, 1
        %s1675 = scalar_lea.sflag [#allocation4], %s1674
        %s1676 = sand.u32 %s115, 1
        %s1677 = smul.addr %s1676, 256
        %s1678 = scalar_lea.vmem [#allocation3], %s1677
        // Predicated region
        $region75: #{transition_block_forward.3} parent=69 // pred_check
          %p1679 = pneg %p125
        $region76: #{transition_block_forward.3} parent=69 // pred_check_branch
          %1681 = sbr.rel (%p1679) target = $region78
        $region77: #{transition_block_forward.3} parent=69 // pred_region
          %s1682 = smul.u32 32, %s18
          %s1684 = ssub.s32 4096, 4096
          %1685 = vsyncadd %s1675, %s1684
          %s1686 = smul.addr %s1682, 128
          %s1687 = scalar_lea.hbm %s4, %s1686
          %s1688 = sshll.u32 %s1678, 4
          %s1689 = int_to_ptr.vmem [resolvable:$true] %s1688
          %1694 = dma.vmem_to_hbm [thread:$0]  %s1689, 4096, %s1687, %s1675, 128, 128, 8
        $region78: #{transition_block_forward.3} parent=69 // pred_fallthru
          _
      $region70: #{transition_block_forward.3} parent=5 // pred_fallthru
        _
      %p1695 = scmp.le.s32.totalorder 2, %s13
      // Predicated region
      $region79: #{transition_block_forward.3} parent=5 // pred_check
        %p1696 = pneg %p1695
      $region80: #{transition_block_forward.3} parent=5 // pred_check_branch
        %1698 = sbr.rel (%p1696) target = $region82
      $region81: #{transition_block_forward.3} parent=5 // pred_region
        %s1699 = ssub.s32 %s13, 2
        // Predicated region
        $region83: #{transition_block_forward.3} parent=81 // pred_check
          %p1700 = pneg %p131
        $region84: #{transition_block_forward.3} parent=81 // pred_check_branch
          %1702 = sbr.rel (%p1700) target = $region86
        $region85: #{transition_block_forward.3} parent=81 // pred_region
          %s1703 = sand.u32 %s116, 1
          %s1704 = scalar_lea.sflag [#allocation4], %s1703
          %s1705 = sand.u32 %s116, 1
          %s1706 = smul.addr %s1705, 256
          %s1707 = scalar_lea.vmem [#allocation3], %s1706
          %1708 = dma.done %s1704, 4096
        $region86: #{transition_block_forward.3} parent=81 // pred_fallthru
          _
      $region82: #{transition_block_forward.3} parent=5 // pred_fallthru
        _
    $region6: #{transition_block_forward.3} parent=1 // loop_footer
      %s17 = sadd.s32 1, %s13
    $region7: #{transition_block_forward.3} parent=1 // loop_footer_branch
      %12 = sbr.rel target = $region3
    $region8: #{transition_block_forward.3} parent=1 // loop_exit
      _
    %1709 = vsyncpa [#allocation4], 1
    %s1710 = scalar_lea.sflag [#allocation4], 1
    %1711 = vsyncpa %s1710, 1

</llo_original>
